<compile_context>
chip_gen: v7x
topology: tpu7x:2x2x1
jax: 0.10.0
libtpu: 0.0.40
codegen_flags: <defaults>
</compile_context>

<pallas_src>
import functools

import jax
import jax.numpy as jnp
from jax.experimental import pallas as pl
from jax.experimental.pallas import tpu as pltpu


_VMEM_LIMIT = 64 * 1024 * 1024  # explicit budget; fits v7x's 64 MiB VMEM


def _pick_tile(dim, preferred):
    """Largest preferred tile that divides `dim`, else the full dim."""
    for t in preferred:
        if dim % t == 0:
            return t
    return dim


# --------------------- fused matmul (+bias [+GELU]) -------------------------

def _matmul_bias_kernel(x_ref, w_ref, b_ref, o_ref, acc_ref, *, activation):
    @pl.when(pl.program_id(2) == 0)
    def _():
        acc_ref[...] = jnp.zeros_like(acc_ref)

    acc_ref[...] += jnp.dot(x_ref[...], w_ref[...],
                            preferred_element_type=jnp.float32)

    @pl.when(pl.program_id(2) == pl.num_programs(2) - 1)
    def _():
        y = acc_ref[...] + b_ref[...]
        if activation == "gelu":
            # TODO(synk): HF RoBERTa uses exact erf-GELU; tanh approximation
            # is used to stay on guaranteed-lowerable EUP transcendentals.
            y = jax.nn.gelu(y, approximate=True)
        o_ref[...] = y.astype(o_ref.dtype)


def dense_bias(x, w, b, activation=None, out_dtype=jnp.bfloat16):
    """x:(M,K) @ w:(K,N) + b:(1,N) [-> GELU], tiled with f32 accumulation."""
    M, K = x.shape
    N = w.shape[1]
    tm = _pick_tile(M, (256, 128))
    tn = _pick_tile(N, (256, 128))          # 256 for v6e/v7x MXU, 128 on v5e
    tk = _pick_tile(K, (512, 256, 128))
    kern = functools.partial(_matmul_bias_kernel, activation=activation)
    return pl.pallas_call(
        kern,
        out_shape=jax.ShapeDtypeStruct((M, N), out_dtype),
        grid=(M // tm, N // tn, K // tk),
        in_specs=[
            pl.BlockSpec((tm, tk), lambda i, j, k: (i, k)),
            pl.BlockSpec((tk, tn), lambda i, j, k: (k, j)),
            pl.BlockSpec((1, tn), lambda i, j, k: (0, j)),
        ],
        out_specs=pl.BlockSpec((tm, tn), lambda i, j, k: (i, j)),
        scratch_shapes=[pltpu.VMEM((tm, tn), jnp.float32)],
        compiler_params=pltpu.CompilerParams(
            dimension_semantics=("parallel", "parallel", "arbitrary"),
            vmem_limit_bytes=_VMEM_LIMIT),
    )(x, w, b)


# ------------- fused matmul + bias + residual-add + LayerNorm ---------------

def _matmul_bias_add_ln_kernel(x_ref, w_ref, b_ref, r_ref, g_ref, bt_ref,
                               o_ref, acc_ref, *, eps):
    @pl.when(pl.program_id(1) == 0)
    def _():
        acc_ref[...] = jnp.zeros_like(acc_ref)

    acc_ref[...] += jnp.dot(x_ref[...], w_ref[...],
                            preferred_element_type=jnp.float32)

    @pl.when(pl.program_id(1) == pl.num_programs(1) - 1)
    def _():
        h = acc_ref[...] + b_ref[...] + r_ref[...].astype(jnp.float32)
        mu = jnp.mean(h, axis=-1, keepdims=True)
        var = jnp.mean((h - mu) * (h - mu), axis=-1, keepdims=True)
        o_ref[...] = ((h - mu) * jax.lax.rsqrt(var + eps) * g_ref[...]
                      + bt_ref[...]).astype(o_ref.dtype)


def dense_bias_add_ln(x, w, b, res, gamma, beta, eps=1e-5,
                      out_dtype=jnp.bfloat16):
    """LayerNorm(x @ w + b + res); the full output row (N) stays in one tile
    so LN statistics are computed directly in the matmul epilogue."""
    M, K = x.shape
    N = w.shape[1]
    tm = _pick_tile(M, (256, 128))
    tk = _pick_tile(K, (512, 256, 128))
    kern = functools.partial(_matmul_bias_add_ln_kernel, eps=eps)
    return pl.pallas_call(
        kern,
        out_shape=jax.ShapeDtypeStruct((M, N), out_dtype),
        grid=(M // tm, K // tk),
        in_specs=[
            pl.BlockSpec((tm, tk), lambda i, k: (i, k)),
            pl.BlockSpec((tk, N), lambda i, k: (k, 0)),
            pl.BlockSpec((1, N), lambda i, k: (0, 0)),
            pl.BlockSpec((tm, N), lambda i, k: (i, 0)),
            pl.BlockSpec((1, N), lambda i, k: (0, 0)),
            pl.BlockSpec((1, N), lambda i, k: (0, 0)),
        ],
        out_specs=pl.BlockSpec((tm, N), lambda i, k: (i, 0)),
        scratch_shapes=[pltpu.VMEM((tm, N), jnp.float32)],
        compiler_params=pltpu.CompilerParams(
            dimension_semantics=("parallel", "arbitrary"),
            vmem_limit_bytes=_VMEM_LIMIT),
    )(x, w, b, res, gamma, beta)


# -------------------------- row-tiled LayerNorm ------------------------------

def _ln_kernel(x_ref, g_ref, b_ref, o_ref, *, eps):
    x = x_ref[...].astype(jnp.float32)
    mu = jnp.mean(x, axis=-1, keepdims=True)
    var = jnp.mean((x - mu) * (x - mu), axis=-1, keepdims=True)
    o_ref[...] = ((x - mu) * jax.lax.rsqrt(var + eps) * g_ref[...]
                  + b_ref[...]).astype(o_ref.dtype)


def layernorm(x, gamma, beta, eps=1e-5, out_dtype=jnp.bfloat16):
    M, D = x.shape
    tm = _pick_tile(M, (1024, 512, 256, 128))   # bandwidth-bound: big tiles
    kern = functools.partial(_ln_kernel, eps=eps)
    return pl.pallas_call(
        kern,
        out_shape=jax.ShapeDtypeStruct((M, D), out_dtype),
        grid=(M // tm,),
        in_specs=[
            pl.BlockSpec((tm, D), lambda i: (i, 0)),
            pl.BlockSpec((1, D), lambda i: (0, 0)),
            pl.BlockSpec((1, D), lambda i: (0, 0)),
        ],
        out_specs=pl.BlockSpec((tm, D), lambda i: (i, 0)),
        compiler_params=pltpu.CompilerParams(
            dimension_semantics=("parallel",),
            vmem_limit_bytes=_VMEM_LIMIT),
    )(x, gamma, beta)


# ----------------- flash attention (heads split in-kernel) ------------------

def _flash_attn_kernel(q_ref, k_ref, v_ref, mask_ref, o_ref,
                       m_sc, l_sc, acc_sc, *, num_heads, scale):
    ki = pl.program_id(2)

    @pl.when(ki == 0)
    def _():
        m_sc[...] = jnp.full_like(m_sc, -jnp.inf)
        l_sc[...] = jnp.zeros_like(l_sc)
        acc_sc[...] = jnp.zeros_like(acc_sc)

    q = q_ref[0]                                   # (tq, D)  bf16
    k = k_ref[0]                                   # (tk, D)  bf16
    v = v_ref[0]                                   # (tk, D)  bf16
    neg_bias = (1.0 - mask_ref[0].astype(jnp.float32)) * (-1e9)   # (1, tk)

    d_model = q.shape[-1]
    dh = d_model // num_heads
    for h in range(num_heads):                     # static unrolled head loop
        sl = slice(h * dh, (h + 1) * dh)
        qh = q[:, sl]                              # (tq, dh)
        kh = k[:, sl]                              # (tk, dh)
        vh = v[:, sl]                              # (tk, dh)
        s = jax.lax.dot_general(qh, kh, (((1,), (1,)), ((), ())),
                                preferred_element_type=jnp.float32) * scale
        s = s + neg_bias                           # (tq, tk)
        m_prev = m_sc[h]                           # (tq, 1)
        m_new = jnp.maximum(m_prev, jnp.max(s, axis=-1, keepdims=True))
        alpha = jnp.exp(m_prev - m_new)
        p = jnp.exp(s - m_new)
        l_sc[h] = alpha * l_sc[h] + jnp.sum(p, axis=-1, keepdims=True)
        pv = jax.lax.dot_general(p.astype(v.dtype), vh,
                                 (((1,), (0,)), ((), ())),
                                 preferred_element_type=jnp.float32)
        acc_sc[h] = alpha * acc_sc[h] + pv
        m_sc[h] = m_new

    @pl.when(ki == pl.num_programs(2) - 1)
    def _():
        parts = []
        for h in range(num_heads):
            inv_l = pl.reciprocal(l_sc[h], approx=True)   # (tq, 1)
            parts.append(acc_sc[h] * inv_l)
        o_ref[0] = jnp.concatenate(parts, axis=-1).astype(o_ref.dtype)


def flash_attention(qkv, mask3, num_heads):
    """qkv: (N, S, 3*D) fused projections; mask3: (N, 1, S) float.
    Returns context in (N, S, D) layout (no wrapper transposes)."""
    N, S, three_d = qkv.shape
    D = three_d // 3
    dh = D // num_heads
    scale = 1.0 / (dh ** 0.5)
    tq = 128 if S % 128 == 0 else S
    tk = 128 if S % 128 == 0 else S
    kern = functools.partial(_flash_attn_kernel,
                             num_heads=num_heads, scale=scale)
    return pl.pallas_call(
        kern,
        out_shape=jax.ShapeDtypeStruct((N, S, D), jnp.bfloat16),
        grid=(N, S // tq, S // tk),
        in_specs=[
            # q / k / v are the three D-wide column blocks of the same slab
            pl.BlockSpec((1, tq, D), lambda b, qi, ki: (b, qi, 0)),
            pl.BlockSpec((1, tk, D), lambda b, qi, ki: (b, ki, 1)),
            pl.BlockSpec((1, tk, D), lambda b, qi, ki: (b, ki, 2)),
            pl.BlockSpec((1, 1, tk), lambda b, qi, ki: (b, 0, ki)),
        ],
        out_specs=pl.BlockSpec((1, tq, D), lambda b, qi, ki: (b, qi, 0)),
        scratch_shapes=[
            pltpu.VMEM((num_heads, tq, 1), jnp.float32),    # running max
            pltpu.VMEM((num_heads, tq, 1), jnp.float32),    # running sum
            pltpu.VMEM((num_heads, tq, dh), jnp.float32),   # output accum
        ],
        compiler_params=pltpu.CompilerParams(
            dimension_semantics=("parallel", "parallel", "arbitrary"),
            vmem_limit_bytes=_VMEM_LIMIT),
    )(qkv, qkv, qkv, mask3)


# ------------------- fused pool + concat + L2 normalize ---------------------

def _pool_norm_kernel(hl_ref, hr_ref, ml_ref, mr_ref, o_ref):
    def pooled(h_ref, m_ref):
        h = h_ref[0].astype(jnp.float32)                 # (S, D)
        m = m_ref[0].astype(jnp.float32)                 # (S, 1)
        summed = jnp.sum(h * m, axis=0, keepdims=True)   # (1, D)
        denom = jnp.maximum(jnp.sum(m), 1e-9)            # clamp(min=1e-9)
        vec = summed / denom
        nrm = jnp.sqrt(jnp.sum(vec * vec, axis=-1, keepdims=True))
        return vec / jnp.maximum(nrm, 1e-12)             # F.normalize
    left = pooled(hl_ref, ml_ref)
    right = pooled(hr_ref, mr_ref)
    o_ref[0] = jnp.concatenate([left, right], axis=0)    # (2, D)


def pool_concat_normalize(h_stacked, mask_stacked, batch):
    """h_stacked: (2B, S, D) with left rows [0:B), right rows [B:2B);
    mask_stacked: (2B, S, 1) float. Returns (B, 2, D) f32.
    The left/right halves are read via two index_maps on the same array,
    so no HBM split copies are made."""
    _, S, D = h_stacked.shape
    return pl.pallas_call(
        _pool_norm_kernel,
        out_shape=jax.ShapeDtypeStruct((batch, 2, D), jnp.float32),
        grid=(batch,),
        in_specs=[
            pl.BlockSpec((1, S, D), lambda b: (b, 0, 0)),
            pl.BlockSpec((1, S, D), lambda b: (b + batch, 0, 0)),
            pl.BlockSpec((1, S, 1), lambda b: (b, 0, 0)),
            pl.BlockSpec((1, S, 1), lambda b: (b + batch, 0, 0)),
        ],
        out_specs=pl.BlockSpec((1, 2, D), lambda b: (b, 0, 0)),
        compiler_params=pltpu.CompilerParams(
            dimension_semantics=("parallel",),
            vmem_limit_bytes=_VMEM_LIMIT),
    )(h_stacked, h_stacked, mask_stacked, mask_stacked)


# ------------------------- synthetic transformer ----------------------------

def init_params(key, vocab, max_pos, hidden, ffn, layers):
    # TODO(synk): HF pretrained RoBERTa weights / resize_token_embeddings are
    # replaced by deterministic synthetic weights (no file / network access).
    ks = jax.random.split(key, 4 + layers)
    std = 0.02

    def nrm(k, shape, dtype=jnp.float32):
        return (std * jax.random.normal(k, shape, jnp.float32)).astype(dtype)

    params = {
        "word_emb": nrm(ks[0], (vocab, hidden)),
        "pos_emb": nrm(ks[1], (max_pos, hidden)),
        "type_emb": nrm(ks[2], (1, hidden)),
        "emb_ln_g": jnp.ones((1, hidden), jnp.float32),
        "emb_ln_b": jnp.zeros((1, hidden), jnp.float32),
        "layers": [],
    }
    for l in range(layers):
        lk = jax.random.split(ks[4 + l], 4)
        params["layers"].append({
            # fused QKV weight (D, 3D) in bf16 for MXU throughput
            "w_qkv": nrm(lk[0], (hidden, 3 * hidden), jnp.bfloat16),
            "b_qkv": jnp.zeros((1, 3 * hidden), jnp.float32),
            "wo": nrm(lk[1], (hidden, hidden), jnp.bfloat16),
            "bo": jnp.zeros((1, hidden), jnp.float32),
            "ln1_g": jnp.ones((1, hidden), jnp.float32),
            "ln1_b": jnp.zeros((1, hidden), jnp.float32),
            "w1": nrm(lk[2], (hidden, ffn), jnp.bfloat16),
            "b1": jnp.zeros((1, ffn), jnp.float32),
            "w2": nrm(lk[3], (ffn, hidden), jnp.bfloat16),
            "b2": jnp.zeros((1, hidden), jnp.float32),
            "ln2_g": jnp.ones((1, hidden), jnp.float32),
            "ln2_b": jnp.zeros((1, hidden), jnp.float32),
        })
    return params


def encoder_layer(h2d, lp, mask3, N, S, D, num_heads):
    """h2d: (N*S, D) bf16 -> (N*S, D) bf16 (post-LN RoBERTa layer)."""
    qkv = dense_bias(h2d, lp["w_qkv"], lp["b_qkv"])            # (N*S, 3D)
    ctx = flash_attention(qkv.reshape(N, S, 3 * D), mask3, num_heads)
    h1 = dense_bias_add_ln(ctx.reshape(N * S, D), lp["wo"], lp["bo"],
                           h2d, lp["ln1_g"], lp["ln1_b"])      # attn out + LN
    ff = dense_bias(h1, lp["w1"], lp["b1"], activation="gelu")
    h2 = dense_bias_add_ln(ff, lp["w2"], lp["b2"],
                           h1, lp["ln2_g"], lp["ln2_b"])       # FFN out + LN
    return h2


def encode(params, input_ids, attention_mask, num_heads):
    """input_ids / attention_mask: (N, S) where N = 2B (stacked left|right)."""
    N, S = input_ids.shape
    D = params["word_emb"].shape[1]

    # RoBERTa-style position ids: cumsum over non-pad tokens, padding_idx = 1.
    pos_ids = (jnp.cumsum(attention_mask, axis=1) * attention_mask
               + 1).astype(jnp.int32)
    # Embedding gathers are plain-JAX glue; LayerNorm runs in a tiled kernel.
    emb = (params["word_emb"][input_ids]
           + params["pos_emb"][pos_ids]
           + params["type_emb"][0][None, None, :])
    h = layernorm(emb.reshape(N * S, D), params["emb_ln_g"],
                  params["emb_ln_b"])                          # bf16 stream

    mask3 = attention_mask.astype(jnp.float32).reshape(N, 1, S)
    for lp in params["layers"]:
        h = encoder_layer(h, lp, mask3, N, S, D, num_heads)
    return h.reshape(N, S, D)


def barlow_twins_forward(params, input_ids_left, input_ids_right,
                         attention_mask_left, attention_mask_right,
                         num_heads):
    B, S = input_ids_left.shape
    # Shared encoder: run left & right together as one (2B, S) batch.
    ids = jnp.concatenate([input_ids_left, input_ids_right], axis=0)
    mask = jnp.concatenate([attention_mask_left, attention_mask_right], axis=0)
    h = encode(params, ids, mask, num_heads)                   # (2B, S, D)
    mask_f = mask.astype(jnp.float32).reshape(2 * B, S, 1)
    return pool_concat_normalize(h, mask_f, B)                 # (B, 2, D) f32


# --------------------------------- main --------------------------------------

if __name__ == "__main__":
    VOCAB = 100               # len_tokenizer (synthetic)
    B, S = 2, 8               # batch, sequence length
    D, H, F, L = 128, 4, 256, 2   # hidden (lane-aligned), heads, ffn, layers

    key = jax.random.PRNGKey(0)
    kp, kl, kr = jax.random.split(key, 3)
    params = init_params(kp, VOCAB, S + 2, D, F, L)

    input_ids_left = jax.random.randint(kl, (B, S), 0, VOCAB, dtype=jnp.int32)
    input_ids_right = jax.random.randint(kr, (B, S), 0, VOCAB, dtype=jnp.int32)
    attention_mask_left = jnp.array(
        [[1, 1, 1, 1, 1, 1, 1, 1],
         [1, 1, 1, 1, 1, 0, 0, 0]], dtype=jnp.int32)
    attention_mask_right = jnp.array(
        [[1, 1, 1, 1, 1, 1, 1, 1],
         [1, 1, 1, 1, 1, 1, 0, 0]], dtype=jnp.int32)

    fwd = jax.jit(functools.partial(barlow_twins_forward, num_heads=H))
    out = fwd(params, input_ids_left, input_ids_right,
              attention_mask_left, attention_mask_right)
    out = jax.block_until_ready(out)

    assert out.shape == (B, 2, D)
    assert bool(jnp.all(jnp.isfinite(out)))
    # rows should be (approximately) unit L2 norm after F.normalize(dim=-1)
    norms = jnp.sqrt(jnp.sum(out.astype(jnp.float32) ** 2, axis=-1))
    assert bool(jnp.all(jnp.abs(norms - 1.0) < 1e-3))

    print("KERNEL_OK")
</pallas_src>

<mosaic_0001>
module attributes {stable_mosaic.version = 11 : i64} {
  func.func @_ln_kernel(%arg0: i32, %arg1: memref<32x128xf32, #tpu.memory_space<vmem>>, %arg2: memref<1x128xf32, #tpu.memory_space<vmem>>, %arg3: memref<1x128xf32, #tpu.memory_space<vmem>>, %arg4: memref<32x128xbf16, #tpu.memory_space<vmem>>) attributes {dimension_semantics = [#tpu.dimension_semantics<parallel>], iteration_bounds = array<i64: 1>, scalar_prefetch = 0 : i64, scratch_operands = 0 : i64, tpu.core_type = #tpu.core_type<tc>, window_params = [{transform_indices = @transform_0, window_bounds = array<i64: 32, 128>}, {pipeline_mode = #tpu.pipeline_mode<synchronous>, transform_indices = @transform_1, window_bounds = array<i64: 1, 128>}, {pipeline_mode = #tpu.pipeline_mode<synchronous>, transform_indices = @transform_2, window_bounds = array<i64: 1, 128>}, {transform_indices = @transform_3, window_bounds = array<i64: 32, 128>}]} {
    %c0 = arith.constant 0 : index
    %c0_0 = arith.constant 0 : index
    %0 = vector.load %arg1[%c0, %c0_0] : memref<32x128xf32, #tpu.memory_space<vmem>>, vector<32x128xf32>
    %cst = arith.constant dense<0.000000e+00> : vector<32xf32>
    %1 = vector.multi_reduction <add>, %0, %cst [1] : vector<32x128xf32> to vector<32xf32>
    %2 = vector.shape_cast %1 : vector<32xf32> to vector<32x1xf32>
    %cst_1 = arith.constant 1.280000e+02 : f32
    %3 = vector.broadcast %cst_1 : f32 to vector<32x1xf32>
    %4 = arith.divf %2, %3 : vector<32x1xf32>
    %5 = vector.broadcast %4 : vector<32x1xf32> to vector<32x128xf32>
    %6 = arith.subf %0, %5 : vector<32x128xf32>
    %7 = vector.broadcast %4 : vector<32x1xf32> to vector<32x128xf32>
    %8 = arith.subf %0, %7 : vector<32x128xf32>
    %9 = arith.mulf %6, %8 : vector<32x128xf32>
    %cst_2 = arith.constant dense<0.000000e+00> : vector<32xf32>
    %10 = vector.multi_reduction <add>, %9, %cst_2 [1] : vector<32x128xf32> to vector<32xf32>
    %11 = vector.shape_cast %10 : vector<32xf32> to vector<32x1xf32>
    %cst_3 = arith.constant 1.280000e+02 : f32
    %12 = vector.broadcast %cst_3 : f32 to vector<32x1xf32>
    %13 = arith.divf %11, %12 : vector<32x1xf32>
    %14 = vector.broadcast %4 : vector<32x1xf32> to vector<32x128xf32>
    %15 = arith.subf %0, %14 : vector<32x128xf32>
    %cst_4 = arith.constant 9.99999974E-6 : f32
    %16 = vector.broadcast %cst_4 : f32 to vector<32x1xf32>
    %17 = arith.addf %13, %16 : vector<32x1xf32>
    %18 = math.rsqrt %17 : vector<32x1xf32>
    %19 = vector.broadcast %18 : vector<32x1xf32> to vector<32x128xf32>
    %20 = arith.mulf %15, %19 : vector<32x128xf32>
    %c0_5 = arith.constant 0 : index
    %c0_6 = arith.constant 0 : index
    %21 = vector.load %arg2[%c0_5, %c0_6] : memref<1x128xf32, #tpu.memory_space<vmem>>, vector<1x128xf32>
    %22 = vector.broadcast %21 : vector<1x128xf32> to vector<32x128xf32>
    %23 = arith.mulf %20, %22 : vector<32x128xf32>
    %c0_7 = arith.constant 0 : index
    %c0_8 = arith.constant 0 : index
    %24 = vector.load %arg3[%c0_7, %c0_8] : memref<1x128xf32, #tpu.memory_space<vmem>>, vector<1x128xf32>
    %25 = vector.broadcast %24 : vector<1x128xf32> to vector<32x128xf32>
    %26 = arith.addf %23, %25 : vector<32x128xf32>
    %27 = arith.truncf %26 : vector<32x128xf32> to vector<32x128xbf16>
    %c0_9 = arith.constant 0 : index
    %c0_10 = arith.constant 0 : index
    %28 = vector.load %arg4[%c0_9, %c0_10] : memref<32x128xbf16, #tpu.memory_space<vmem>>, vector<32x128xbf16>
    tpu.vector_store %arg4[%c0_9, %c0_10], %27 {strides = array<i32>} : memref<32x128xbf16, #tpu.memory_space<vmem>>, vector<32x128xbf16>,
    return
  }
  func.func @transform_0(%arg0: i32) -> (i32, i32) {
    %c0_i32 = arith.constant 0 : i32
    %c0_i32_0 = arith.constant 0 : i32
    return %arg0, %c0_i32 : i32, i32
  }
  func.func @transform_1(%arg0: i32) -> (i32, i32) {
    %c0_i32 = arith.constant 0 : i32
    %c0_i32_0 = arith.constant 0 : i32
    %c0_i32_1 = arith.constant 0 : i32
    return %c0_i32, %c0_i32_0 : i32, i32
  }
  func.func @transform_2(%arg0: i32) -> (i32, i32) {
    %c0_i32 = arith.constant 0 : i32
    %c0_i32_0 = arith.constant 0 : i32
    %c0_i32_1 = arith.constant 0 : i32
    return %c0_i32, %c0_i32_0 : i32, i32
  }
  func.func @transform_3(%arg0: i32) -> (i32, i32) {
    %c0_i32 = arith.constant 0 : i32
    %c0_i32_0 = arith.constant 0 : i32
    return %arg0, %c0_i32 : i32, i32
  }
}

module attributes {stable_mosaic.version = 11 : i64} {
  func.func @_matmul_bias_kernel(%arg0: i32, %arg1: i32, %arg2: i32, %arg3: memref<32x128xbf16, #tpu.memory_space<vmem>>, %arg4: memref<128x128xbf16, #tpu.memory_space<vmem>>, %arg5: memref<1x128xf32, #tpu.memory_space<vmem>>, %arg6: memref<32x128xbf16, #tpu.memory_space<vmem>>, %arg7: memref<32x128xf32, #tpu.memory_space<vmem>>) attributes {dimension_semantics = [#tpu.dimension_semantics<parallel>, #tpu.dimension_semantics<parallel>, #tpu.dimension_semantics<arbitrary>], iteration_bounds = array<i64: 1, 3, 1>, scalar_prefetch = 0 : i64, scratch_operands = 1 : i64, tpu.core_type = #tpu.core_type<tc>, window_params = [{transform_indices = @transform_0, window_bounds = array<i64: 32, 128>}, {transform_indices = @transform_1, window_bounds = array<i64: 128, 128>}, {transform_indices = @transform_2, window_bounds = array<i64: 1, 128>}, {transform_indices = @transform_3, window_bounds = array<i64: 32, 128>}]} {
    %c0_i32 = arith.constant 0 : i32
    %0 = arith.cmpi eq, %arg2, %c0_i32 : i32
    %1 = arith.extui %0 : i1 to i32
    %c0_i32_0 = arith.constant 0 : i32
    %2 = arith.cmpi ne, %1, %c0_i32_0 : i32
    scf.if %2 {
      %cst_10 = arith.constant 0.000000e+00 : f32
      %12 = vector.broadcast %cst_10 : f32 to vector<32x128xf32>
      %c0_11 = arith.constant 0 : index
      %c0_12 = arith.constant 0 : index
      %13 = vector.load %arg7[%c0_11, %c0_12] : memref<32x128xf32, #tpu.memory_space<vmem>>, vector<32x128xf32>
      tpu.vector_store %arg7[%c0_11, %c0_12], %12 {strides = array<i32>} : memref<32x128xf32, #tpu.memory_space<vmem>>, vector<32x128xf32>,
    } else {
    }
    %c0 = arith.constant 0 : index
    %c0_1 = arith.constant 0 : index
    %3 = vector.load %arg7[%c0, %c0_1] : memref<32x128xf32, #tpu.memory_space<vmem>>, vector<32x128xf32>
    %c0_2 = arith.constant 0 : index
    %c0_3 = arith.constant 0 : index
    %4 = vector.load %arg3[%c0_2, %c0_3] : memref<32x128xbf16, #tpu.memory_space<vmem>>, vector<32x128xbf16>
    %c0_4 = arith.constant 0 : index
    %c0_5 = arith.constant 0 : index
    %5 = vector.load %arg4[%c0_4, %c0_5] : memref<128x128xbf16, #tpu.memory_space<vmem>>, vector<128x128xbf16>
    %cst = arith.constant dense<0.000000e+00> : vector<32x128xf32>
    %6 = tpu.matmul %4, %5, %cst {dimension_numbers = #tpu.dot_dimension_numbers<[1], [0], [0], [1], [0, 0, 1, 1], [], []>} : vector<32x128xbf16>, vector<128x128xbf16>, vector<32x128xf32> -> vector<32x128xf32>
    %7 = arith.addf %3, %6 : vector<32x128xf32>
    %c0_6 = arith.constant 0 : index
    %c0_7 = arith.constant 0 : index
    %8 = vector.load %arg7[%c0_6, %c0_7] : memref<32x128xf32, #tpu.memory_space<vmem>>, vector<32x128xf32>
    tpu.vector_store %arg7[%c0_6, %c0_7], %7 {strides = array<i32>} : memref<32x128xf32, #tpu.memory_space<vmem>>, vector<32x128xf32>,
    %c0_i32_8 = arith.constant 0 : i32
    %9 = arith.cmpi eq, %arg2, %c0_i32_8 : i32
    %10 = arith.extui %9 : i1 to i32
    %c0_i32_9 = arith.constant 0 : i32
    %11 = arith.cmpi ne, %10, %c0_i32_9 : i32
    scf.if %11 {
      %c0_10 = arith.constant 0 : index
      %c0_11 = arith.constant 0 : index
      %12 = vector.load %arg7[%c0_10, %c0_11] : memref<32x128xf32, #tpu.memory_space<vmem>>, vector<32x128xf32>
      %c0_12 = arith.constant 0 : index
      %c0_13 = arith.constant 0 : index
      %13 = vector.load %arg5[%c0_12, %c0_13] : memref<1x128xf32, #tpu.memory_space<vmem>>, vector<1x128xf32>
      %14 = vector.broadcast %13 : vector<1x128xf32> to vector<32x128xf32>
      %15 = arith.addf %12, %14 : vector<32x128xf32>
      %16 = arith.truncf %15 : vector<32x128xf32> to vector<32x128xbf16>
      %c0_14 = arith.constant 0 : index
      %c0_15 = arith.constant 0 : index
      %17 = vector.load %arg6[%c0_14, %c0_15] : memref<32x128xbf16, #tpu.memory_space<vmem>>, vector<32x128xbf16>
      tpu.vector_store %arg6[%c0_14, %c0_15], %16 {strides = array<i32>} : memref<32x128xbf16, #tpu.memory_space<vmem>>, vector<32x128xbf16>,
    } else {
    }
    return
  }
  func.func @transform_0(%arg0: i32, %arg1: i32, %arg2: i32) -> (i32, i32) {
    %c0_i32 = arith.constant 0 : i32
    return %arg0, %arg2 : i32, i32
  }
  func.func @transform_1(%arg0: i32, %arg1: i32, %arg2: i32) -> (i32, i32) {
    %c0_i32 = arith.constant 0 : i32
    return %arg2, %arg1 : i32, i32
  }
  func.func @transform_2(%arg0: i32, %arg1: i32, %arg2: i32) -> (i32, i32) {
    %c0_i32 = arith.constant 0 : i32
    %c0_i32_0 = arith.constant 0 : i32
    return %c0_i32, %arg1 : i32, i32
  }
  func.func @transform_3(%arg0: i32, %arg1: i32, %arg2: i32) -> (i32, i32) {
    %c0_i32 = arith.constant 0 : i32
    return %arg0, %arg1 : i32, i32
  }
}

module attributes {stable_mosaic.version = 11 : i64} {
  func.func @_matmul_bias_add_ln_kernel(%arg0: i32, %arg1: i32, %arg2: memref<32x128xbf16, #tpu.memory_space<vmem>>, %arg3: memref<128x128xbf16, #tpu.memory_space<vmem>>, %arg4: memref<1x128xf32, #tpu.memory_space<vmem>>, %arg5: memref<32x128xbf16, #tpu.memory_space<vmem>>, %arg6: memref<1x128xf32, #tpu.memory_space<vmem>>, %arg7: memref<1x128xf32, #tpu.memory_space<vmem>>, %arg8: memref<32x128xbf16, #tpu.memory_space<vmem>>, %arg9: memref<32x128xf32, #tpu.memory_space<vmem>>) attributes {dimension_semantics = [#tpu.dimension_semantics<parallel>, #tpu.dimension_semantics<arbitrary>], iteration_bounds = array<i64: 1, 1>, scalar_prefetch = 0 : i64, scratch_operands = 1 : i64, tpu.core_type = #tpu.core_type<tc>, window_params = [{transform_indices = @transform_0, window_bounds = array<i64: 32, 128>}, {transform_indices = @transform_1, window_bounds = array<i64: 128, 128>}, {pipeline_mode = #tpu.pipeline_mode<synchronous>, transform_indices = @transform_2, window_bounds = array<i64: 1, 128>}, {transform_indices = @transform_3, window_bounds = array<i64: 32, 128>}, {pipeline_mode = #tpu.pipeline_mode<synchronous>, transform_indices = @transform_4, window_bounds = array<i64: 1, 128>}, {pipeline_mode = #tpu.pipeline_mode<synchronous>, transform_indices = @transform_5, window_bounds = array<i64: 1, 128>}, {transform_indices = @transform_6, window_bounds = array<i64: 32, 128>}]} {
    %c0_i32 = arith.constant 0 : i32
    %0 = arith.cmpi eq, %arg1, %c0_i32 : i32
    %1 = arith.extui %0 : i1 to i32
    %c0_i32_0 = arith.constant 0 : i32
    %2 = arith.cmpi ne, %1, %c0_i32_0 : i32
    scf.if %2 {
      %cst_10 = arith.constant 0.000000e+00 : f32
      %12 = vector.broadcast %cst_10 : f32 to vector<32x128xf32>
      %c0_11 = arith.constant 0 : index
      %c0_12 = arith.constant 0 : index
      %13 = vector.load %arg9[%c0_11, %c0_12] : memref<32x128xf32, #tpu.memory_space<vmem>>, vector<32x128xf32>
      tpu.vector_store %arg9[%c0_11, %c0_12], %12 {strides = array<i32>} : memref<32x128xf32, #tpu.memory_space<vmem>>, vector<32x128xf32>,
    } else {
    }
    %c0 = arith.constant 0 : index
    %c0_1 = arith.constant 0 : index
    %3 = vector.load %arg9[%c0, %c0_1] : memref<32x128xf32, #tpu.memory_space<vmem>>, vector<32x128xf32>
    %c0_2 = arith.constant 0 : index
    %c0_3 = arith.constant 0 : index
    %4 = vector.load %arg2[%c0_2, %c0_3] : memref<32x128xbf16, #tpu.memory_space<vmem>>, vector<32x128xbf16>
    %c0_4 = arith.constant 0 : index
    %c0_5 = arith.constant 0 : index
    %5 = vector.load %arg3[%c0_4, %c0_5] : memref<128x128xbf16, #tpu.memory_space<vmem>>, vector<128x128xbf16>
    %cst = arith.constant dense<0.000000e+00> : vector<32x128xf32>
    %6 = tpu.matmul %4, %5, %cst {dimension_numbers = #tpu.dot_dimension_numbers<[1], [0], [0], [1], [0, 0, 1, 1], [], []>} : vector<32x128xbf16>, vector<128x128xbf16>, vector<32x128xf32> -> vector<32x128xf32>
    %7 = arith.addf %3, %6 : vector<32x128xf32>
    %c0_6 = arith.constant 0 : index
    %c0_7 = arith.constant 0 : index
    %8 = vector.load %arg9[%c0_6, %c0_7] : memref<32x128xf32, #tpu.memory_space<vmem>>, vector<32x128xf32>
    tpu.vector_store %arg9[%c0_6, %c0_7], %7 {strides = array<i32>} : memref<32x128xf32, #tpu.memory_space<vmem>>, vector<32x128xf32>,
    %c0_i32_8 = arith.constant 0 : i32
    %9 = arith.cmpi eq, %arg1, %c0_i32_8 : i32
    %10 = arith.extui %9 : i1 to i32
    %c0_i32_9 = arith.constant 0 : i32
    %11 = arith.cmpi ne, %10, %c0_i32_9 : i32
    scf.if %11 {
      %c0_10 = arith.constant 0 : index
      %c0_11 = arith.constant 0 : index
      %12 = vector.load %arg9[%c0_10, %c0_11] : memref<32x128xf32, #tpu.memory_space<vmem>>, vector<32x128xf32>
      %c0_12 = arith.constant 0 : index
      %c0_13 = arith.constant 0 : index
      %13 = vector.load %arg4[%c0_12, %c0_13] : memref<1x128xf32, #tpu.memory_space<vmem>>, vector<1x128xf32>
      %14 = vector.broadcast %13 : vector<1x128xf32> to vector<32x128xf32>
      %15 = arith.addf %12, %14 : vector<32x128xf32>
      %c0_14 = arith.constant 0 : index
      %c0_15 = arith.constant 0 : index
      %16 = vector.load %arg5[%c0_14, %c0_15] : memref<32x128xbf16, #tpu.memory_space<vmem>>, vector<32x128xbf16>
      %17 = arith.extf %16 : vector<32x128xbf16> to vector<32x128xf32>
      %18 = arith.addf %15, %17 : vector<32x128xf32>
      %cst_16 = arith.constant dense<0.000000e+00> : vector<32xf32>
      %19 = vector.multi_reduction <add>, %18, %cst_16 [1] : vector<32x128xf32> to vector<32xf32>
      %20 = vector.shape_cast %19 : vector<32xf32> to vector<32x1xf32>
      %cst_17 = arith.constant 1.280000e+02 : f32
      %21 = vector.broadcast %cst_17 : f32 to vector<32x1xf32>
      %22 = arith.divf %20, %21 : vector<32x1xf32>
      %23 = vector.broadcast %22 : vector<32x1xf32> to vector<32x128xf32>
      %24 = arith.subf %18, %23 : vector<32x128xf32>
      %25 = vector.broadcast %22 : vector<32x1xf32> to vector<32x128xf32>
      %26 = arith.subf %18, %25 : vector<32x128xf32>
      %27 = arith.mulf %24, %26 : vector<32x128xf32>
      %cst_18 = arith.constant dense<0.000000e+00> : vector<32xf32>
      %28 = vector.multi_reduction <add>, %27, %cst_18 [1] : vector<32x128xf32> to vector<32xf32>
      %29 = vector.shape_cast %28 : vector<32xf32> to vector<32x1xf32>
      %cst_19 = arith.constant 1.280000e+02 : f32
      %30 = vector.broadcast %cst_19 : f32 to vector<32x1xf32>
      %31 = arith.divf %29, %30 : vector<32x1xf32>
      %32 = vector.broadcast %22 : vector<32x1xf32> to vector<32x128xf32>
      %33 = arith.subf %18, %32 : vector<32x128xf32>
      %cst_20 = arith.constant 9.99999974E-6 : f32
      %34 = vector.broadcast %cst_20 : f32 to vector<32x1xf32>
      %35 = arith.addf %31, %34 : vector<32x1xf32>
      %36 = math.rsqrt %35 : vector<32x1xf32>
      %37 = vector.broadcast %36 : vector<32x1xf32> to vector<32x128xf32>
      %38 = arith.mulf %33, %37 : vector<32x128xf32>
      %c0_21 = arith.constant 0 : index
      %c0_22 = arith.constant 0 : index
      %39 = vector.load %arg6[%c0_21, %c0_22] : memref<1x128xf32, #tpu.memory_space<vmem>>, vector<1x128xf32>
      %40 = vector.broadcast %39 : vector<1x128xf32> to vector<32x128xf32>
      %41 = arith.mulf %38, %40 : vector<32x128xf32>
      %c0_23 = arith.constant 0 : index
      %c0_24 = arith.constant 0 : index
      %42 = vector.load %arg7[%c0_23, %c0_24] : memref<1x128xf32, #tpu.memory_space<vmem>>, vector<1x128xf32>
      %43 = vector.broadcast %42 : vector<1x128xf32> to vector<32x128xf32>
      %44 = arith.addf %41, %43 : vector<32x128xf32>
      %45 = arith.truncf %44 : vector<32x128xf32> to vector<32x128xbf16>
      %c0_25 = arith.constant 0 : index
      %c0_26 = arith.constant 0 : index
      %46 = vector.load %arg8[%c0_25, %c0_26] : memref<32x128xbf16, #tpu.memory_space<vmem>>, vector<32x128xbf16>
      tpu.vector_store %arg8[%c0_25, %c0_26], %45 {strides = array<i32>} : memref<32x128xbf16, #tpu.memory_space<vmem>>, vector<32x128xbf16>,
    } else {
    }
    return
  }
  func.func @transform_0(%arg0: i32, %arg1: i32) -> (i32, i32) {
    %c0_i32 = arith.constant 0 : i32
    return %arg0, %arg1 : i32, i32
  }
  func.func @transform_1(%arg0: i32, %arg1: i32) -> (i32, i32) {
    %c0_i32 = arith.constant 0 : i32
    %c0_i32_0 = arith.constant 0 : i32
    return %arg1, %c0_i32 : i32, i32
  }
  func.func @transform_2(%arg0: i32, %arg1: i32) -> (i32, i32) {
    %c0_i32 = arith.constant 0 : i32
    %c0_i32_0 = arith.constant 0 : i32
    %c0_i32_1 = arith.constant 0 : i32
    return %c0_i32, %c0_i32_0 : i32, i32
  }
  func.func @transform_3(%arg0: i32, %arg1: i32) -> (i32, i32) {
    %c0_i32 = arith.constant 0 : i32
    %c0_i32_0 = arith.constant 0 : i32
    return %arg0, %c0_i32 : i32, i32
  }
  func.func @transform_4(%arg0: i32, %arg1: i32) -> (i32, i32) {
    %c0_i32 = arith.constant 0 : i32
    %c0_i32_0 = arith.constant 0 : i32
    %c0_i32_1 = arith.constant 0 : i32
    return %c0_i32, %c0_i32_0 : i32, i32
  }
  func.func @transform_5(%arg0: i32, %arg1: i32) -> (i32, i32) {
    %c0_i32 = arith.constant 0 : i32
    %c0_i32_0 = arith.constant 0 : i32
    %c0_i32_1 = arith.constant 0 : i32
    return %c0_i32, %c0_i32_0 : i32, i32
  }
  func.func @transform_6(%arg0: i32, %arg1: i32) -> (i32, i32) {
    %c0_i32 = arith.constant 0 : i32
    %c0_i32_0 = arith.constant 0 : i32
    return %arg0, %c0_i32 : i32, i32
  }
}

module attributes {stable_mosaic.version = 11 : i64} {
  func.func @_flash_attn_kernel(%arg0: i32, %arg1: i32, %arg2: i32, %arg3: memref<1x8x128xbf16, #tpu.memory_space<vmem>>, %arg4: memref<1x8x128xbf16, #tpu.memory_space<vmem>>, %arg5: memref<1x8x128xbf16, #tpu.memory_space<vmem>>, %arg6: memref<1x1x8xf32, #tpu.memory_space<vmem>>, %arg7: memref<1x8x128xbf16, #tpu.memory_space<vmem>>, %arg8: memref<4x8x1xf32, #tpu.memory_space<vmem>>, %arg9: memref<4x8x1xf32, #tpu.memory_space<vmem>>, %arg10: memref<4x8x32xf32, #tpu.memory_space<vmem>>) attributes {dimension_semantics = [#tpu.dimension_semantics<parallel>, #tpu.dimension_semantics<parallel>, #tpu.dimension_semantics<arbitrary>], iteration_bounds = array<i64: 4, 1, 1>, scalar_prefetch = 0 : i64, scratch_operands = 3 : i64, tpu.core_type = #tpu.core_type<tc>, window_params = [{transform_indices = @transform_0, window_bounds = array<i64: 1, 8, 128>}, {transform_indices = @transform_1, window_bounds = array<i64: 1, 8, 128>}, {transform_indices = @transform_2, window_bounds = array<i64: 1, 8, 128>}, {transform_indices = @transform_3, window_bounds = array<i64: 1, 1, 8>}, {transform_indices = @transform_4, window_bounds = array<i64: 1, 8, 128>}]} {
    %c0_i32 = arith.constant 0 : i32
    %0 = arith.cmpi eq, %arg2, %c0_i32 : i32
    %1 = arith.extui %0 : i1 to i32
    %c0_i32_0 = arith.constant 0 : i32
    %2 = arith.cmpi ne, %1, %c0_i32_0 : i32
    scf.if %2 {
      %cst_104 = arith.constant 0xFF800000 : f32
      %178 = vector.broadcast %cst_104 : f32 to vector<4x8x1xf32>
      %c0_105 = arith.constant 0 : index
      %c0_106 = arith.constant 0 : index
      %c0_107 = arith.constant 0 : index
      %179 = vector.load %arg8[%c0_105, %c0_106, %c0_107] : memref<4x8x1xf32, #tpu.memory_space<vmem>>, vector<4x8x1xf32>
      tpu.vector_store %arg8[%c0_105, %c0_106, %c0_107], %178 {strides = array<i32>} : memref<4x8x1xf32, #tpu.memory_space<vmem>>, vector<4x8x1xf32>,
      %cst_108 = arith.constant 0.000000e+00 : f32
      %180 = vector.broadcast %cst_108 : f32 to vector<4x8x1xf32>
      %c0_109 = arith.constant 0 : index
      %c0_110 = arith.constant 0 : index
      %c0_111 = arith.constant 0 : index
      %181 = vector.load %arg9[%c0_109, %c0_110, %c0_111] : memref<4x8x1xf32, #tpu.memory_space<vmem>>, vector<4x8x1xf32>
      tpu.vector_store %arg9[%c0_109, %c0_110, %c0_111], %180 {strides = array<i32>} : memref<4x8x1xf32, #tpu.memory_space<vmem>>, vector<4x8x1xf32>,
      %cst_112 = arith.constant 0.000000e+00 : f32
      %182 = vector.broadcast %cst_112 : f32 to vector<4x8x32xf32>
      %c0_113 = arith.constant 0 : index
      %c0_114 = arith.constant 0 : index
      %c0_115 = arith.constant 0 : index
      %183 = vector.load %arg10[%c0_113, %c0_114, %c0_115] : memref<4x8x32xf32, #tpu.memory_space<vmem>>, vector<4x8x32xf32>
      tpu.vector_store %arg10[%c0_113, %c0_114, %c0_115], %182 {strides = array<i32>} : memref<4x8x32xf32, #tpu.memory_space<vmem>>, vector<4x8x32xf32>,
    } else {
    }
    %c0 = arith.constant 0 : index
    %c0_1 = arith.constant 0 : index
    %c0_2 = arith.constant 0 : index
    %3 = vector.load %arg3[%c0, %c0_1, %c0_2] : memref<1x8x128xbf16, #tpu.memory_space<vmem>>, vector<1x8x128xbf16>
    %4 = vector.shape_cast %3 : vector<1x8x128xbf16> to vector<8x128xbf16>
    %c0_3 = arith.constant 0 : index
    %c0_4 = arith.constant 0 : index
    %c0_5 = arith.constant 0 : index
    %5 = vector.load %arg4[%c0_3, %c0_4, %c0_5] : memref<1x8x128xbf16, #tpu.memory_space<vmem>>, vector<1x8x128xbf16>
    %6 = vector.shape_cast %5 : vector<1x8x128xbf16> to vector<8x128xbf16>
    %c0_6 = arith.constant 0 : index
    %c0_7 = arith.constant 0 : index
    %c0_8 = arith.constant 0 : index
    %7 = vector.load %arg5[%c0_6, %c0_7, %c0_8] : memref<1x8x128xbf16, #tpu.memory_space<vmem>>, vector<1x8x128xbf16>
    %8 = vector.shape_cast %7 : vector<1x8x128xbf16> to vector<8x128xbf16>
    %c0_9 = arith.constant 0 : index
    %c0_10 = arith.constant 0 : index
    %c0_11 = arith.constant 0 : index
    %9 = vector.load %arg6[%c0_9, %c0_10, %c0_11] : memref<1x1x8xf32, #tpu.memory_space<vmem>>, vector<1x1x8xf32>
    %10 = vector.shape_cast %9 : vector<1x1x8xf32> to vector<1x8xf32>
    %cst = arith.constant 1.000000e+00 : f32
    %11 = vector.broadcast %cst : f32 to vector<1x8xf32>
    %12 = arith.subf %11, %10 : vector<1x8xf32>
    %cst_12 = arith.constant -1.000000e+09 : f32
    %13 = vector.broadcast %cst_12 : f32 to vector<1x8xf32>
    %14 = arith.mulf %12, %13 : vector<1x8xf32>
    %15 = vector.extract_strided_slice %4 {offsets = [0, 0], sizes = [8, 32], strides = [1, 1]} : vector<8x128xbf16> to vector<8x32xbf16>
    %16 = vector.extract_strided_slice %6 {offsets = [0, 0], sizes = [8, 32], strides = [1, 1]} : vector<8x128xbf16> to vector<8x32xbf16>
    %17 = vector.extract_strided_slice %8 {offsets = [0, 0], sizes = [8, 32], strides = [1, 1]} : vector<8x128xbf16> to vector<8x32xbf16>
    %cst_13 = arith.constant dense<0.000000e+00> : vector<8x8xf32>
    %18 = tpu.matmul %15, %16, %cst_13 {dimension_numbers = #tpu.dot_dimension_numbers<[1], [1], [0], [0], [0, 0, 1, 0], [], []>} : vector<8x32xbf16>, vector<8x32xbf16>, vector<8x8xf32> -> vector<8x8xf32>
    %cst_14 = arith.constant 0.176776692 : f32
    %19 = vector.broadcast %cst_14 : f32 to vector<8x8xf32>
    %20 = arith.mulf %18, %19 : vector<8x8xf32>
    %21 = vector.broadcast %14 : vector<1x8xf32> to vector<8x8xf32>
    %22 = arith.addf %20, %21 : vector<8x8xf32>
    %c0_15 = arith.constant 0 : index
    %c0_16 = arith.constant 0 : index
    %c0_17 = arith.constant 0 : index
    %23 = vector.load %arg8[%c0_15, %c0_16, %c0_17] : memref<4x8x1xf32, #tpu.memory_space<vmem>>, vector<1x8x1xf32>
    %24 = vector.shape_cast %23 : vector<1x8x1xf32> to vector<8x1xf32>
    %cst_18 = arith.constant dense<0xFF800000> : vector<8xf32>
    %25 = vector.multi_reduction <maximumf>, %22, %cst_18 [1] : vector<8x8xf32> to vector<8xf32>
    %26 = vector.shape_cast %25 : vector<8xf32> to vector<8x1xf32>
    %27 = arith.maximumf %24, %26 : vector<8x1xf32>
    %28 = arith.subf %24, %27 : vector<8x1xf32>
    %29 = math.exp %28 : vector<8x1xf32>
    %30 = vector.broadcast %27 : vector<8x1xf32> to vector<8x8xf32>
    %31 = arith.subf %22, %30 : vector<8x8xf32>
    %32 = math.exp %31 : vector<8x8xf32>
    %c0_19 = arith.constant 0 : index
    %c0_20 = arith.constant 0 : index
    %c0_21 = arith.constant 0 : index
    %33 = vector.load %arg9[%c0_19, %c0_20, %c0_21] : memref<4x8x1xf32, #tpu.memory_space<vmem>>, vector<1x8x1xf32>
    %34 = vector.shape_cast %33 : vector<1x8x1xf32> to vector<8x1xf32>
    %35 = arith.mulf %29, %34 : vector<8x1xf32>
    %cst_22 = arith.constant dense<0.000000e+00> : vector<8xf32>
    %36 = vector.multi_reduction <add>, %32, %cst_22 [1] : vector<8x8xf32> to vector<8xf32>
    %37 = vector.shape_cast %36 : vector<8xf32> to vector<8x1xf32>
    %38 = arith.addf %35, %37 : vector<8x1xf32>
    %c0_23 = arith.constant 0 : index
    %c0_24 = arith.constant 0 : index
    %c0_25 = arith.constant 0 : index
    %39 = vector.load %arg9[%c0_23, %c0_24, %c0_25] : memref<4x8x1xf32, #tpu.memory_space<vmem>>, vector<1x8x1xf32>
    %40 = vector.shape_cast %39 : vector<1x8x1xf32> to vector<8x1xf32>
    %41 = vector.shape_cast %38 : vector<8x1xf32> to vector<1x8x1xf32>
    tpu.vector_store %arg9[%c0_23, %c0_24, %c0_25], %41 {strides = array<i32>} : memref<4x8x1xf32, #tpu.memory_space<vmem>>, vector<1x8x1xf32>,
    %42 = arith.truncf %32 : vector<8x8xf32> to vector<8x8xbf16>
    %cst_26 = arith.constant dense<0.000000e+00> : vector<8x32xf32>
    %43 = tpu.matmul %42, %17, %cst_26 {dimension_numbers = #tpu.dot_dimension_numbers<[1], [0], [0], [1], [0, 0, 1, 1], [], []>} : vector<8x8xbf16>, vector<8x32xbf16>, vector<8x32xf32> -> vector<8x32xf32>
    %c0_27 = arith.constant 0 : index
    %c0_28 = arith.constant 0 : index
    %c0_29 = arith.constant 0 : index
    %44 = vector.load %arg10[%c0_27, %c0_28, %c0_29] : memref<4x8x32xf32, #tpu.memory_space<vmem>>, vector<1x8x32xf32>
    %45 = vector.shape_cast %44 : vector<1x8x32xf32> to vector<8x32xf32>
    %46 = vector.broadcast %29 : vector<8x1xf32> to vector<8x32xf32>
    %47 = arith.mulf %46, %45 : vector<8x32xf32>
    %48 = arith.addf %47, %43 : vector<8x32xf32>
    %c0_30 = arith.constant 0 : index
    %c0_31 = arith.constant 0 : index
    %c0_32 = arith.constant 0 : index
    %49 = vector.load %arg10[%c0_30, %c0_31, %c0_32] : memref<4x8x32xf32, #tpu.memory_space<vmem>>, vector<1x8x32xf32>
    %50 = vector.shape_cast %49 : vector<1x8x32xf32> to vector<8x32xf32>
    %51 = vector.shape_cast %48 : vector<8x32xf32> to vector<1x8x32xf32>
    tpu.vector_store %arg10[%c0_30, %c0_31, %c0_32], %51 {strides = array<i32>} : memref<4x8x32xf32, #tpu.memory_space<vmem>>, vector<1x8x32xf32>,
    %c0_33 = arith.constant 0 : index
    %c0_34 = arith.constant 0 : index
    %c0_35 = arith.constant 0 : index
    %52 = vector.load %arg8[%c0_33, %c0_34, %c0_35] : memref<4x8x1xf32, #tpu.memory_space<vmem>>, vector<1x8x1xf32>
    %53 = vector.shape_cast %52 : vector<1x8x1xf32> to vector<8x1xf32>
    %54 = vector.shape_cast %27 : vector<8x1xf32> to vector<1x8x1xf32>
    tpu.vector_store %arg8[%c0_33, %c0_34, %c0_35], %54 {strides = array<i32>} : memref<4x8x1xf32, #tpu.memory_space<vmem>>, vector<1x8x1xf32>,
    %55 = vector.extract_strided_slice %4 {offsets = [0, 32], sizes = [8, 32], strides = [1, 1]} : vector<8x128xbf16> to vector<8x32xbf16>
    %56 = vector.extract_strided_slice %6 {offsets = [0, 32], sizes = [8, 32], strides = [1, 1]} : vector<8x128xbf16> to vector<8x32xbf16>
    %57 = vector.extract_strided_slice %8 {offsets = [0, 32], sizes = [8, 32], strides = [1, 1]} : vector<8x128xbf16> to vector<8x32xbf16>
    %cst_36 = arith.constant dense<0.000000e+00> : vector<8x8xf32>
    %58 = tpu.matmul %55, %56, %cst_36 {dimension_numbers = #tpu.dot_dimension_numbers<[1], [1], [0], [0], [0, 0, 1, 0], [], []>} : vector<8x32xbf16>, vector<8x32xbf16>, vector<8x8xf32> -> vector<8x8xf32>
    %cst_37 = arith.constant 0.176776692 : f32
    %59 = vector.broadcast %cst_37 : f32 to vector<8x8xf32>
    %60 = arith.mulf %58, %59 : vector<8x8xf32>
    %61 = vector.broadcast %14 : vector<1x8xf32> to vector<8x8xf32>
    %62 = arith.addf %60, %61 : vector<8x8xf32>
    %c1 = arith.constant 1 : index
    %c0_38 = arith.constant 0 : index
    %c0_39 = arith.constant 0 : index
    %63 = vector.load %arg8[%c1, %c0_38, %c0_39] : memref<4x8x1xf32, #tpu.memory_space<vmem>>, vector<1x8x1xf32>
    %64 = vector.shape_cast %63 : vector<1x8x1xf32> to vector<8x1xf32>
    %cst_40 = arith.constant dense<0xFF800000> : vector<8xf32>
    %65 = vector.multi_reduction <maximumf>, %62, %cst_40 [1] : vector<8x8xf32> to vector<8xf32>
    %66 = vector.shape_cast %65 : vector<8xf32> to vector<8x1xf32>
    %67 = arith.maximumf %64, %66 : vector<8x1xf32>
    %68 = arith.subf %64, %67 : vector<8x1xf32>
    %69 = math.exp %68 : vector<8x1xf32>
    %70 = vector.broadcast %67 : vector<8x1xf32> to vector<8x8xf32>
    %71 = arith.subf %62, %70 : vector<8x8xf32>
    %72 = math.exp %71 : vector<8x8xf32>
    %c1_41 = arith.constant 1 : index
    %c0_42 = arith.constant 0 : index
    %c0_43 = arith.constant 0 : index
    %73 = vector.load %arg9[%c1_41, %c0_42, %c0_43] : memref<4x8x1xf32, #tpu.memory_space<vmem>>, vector<1x8x1xf32>
    %74 = vector.shape_cast %73 : vector<1x8x1xf32> to vector<8x1xf32>
    %75 = arith.mulf %69, %74 : vector<8x1xf32>
    %cst_44 = arith.constant dense<0.000000e+00> : vector<8xf32>
    %76 = vector.multi_reduction <add>, %72, %cst_44 [1] : vector<8x8xf32> to vector<8xf32>
    %77 = vector.shape_cast %76 : vector<8xf32> to vector<8x1xf32>
    %78 = arith.addf %75, %77 : vector<8x1xf32>
    %c1_45 = arith.constant 1 : index
    %c0_46 = arith.constant 0 : index
    %c0_47 = arith.constant 0 : index
    %79 = vector.load %arg9[%c1_45, %c0_46, %c0_47] : memref<4x8x1xf32, #tpu.memory_space<vmem>>, vector<1x8x1xf32>
    %80 = vector.shape_cast %79 : vector<1x8x1xf32> to vector<8x1xf32>
    %81 = vector.shape_cast %78 : vector<8x1xf32> to vector<1x8x1xf32>
    tpu.vector_store %arg9[%c1_45, %c0_46, %c0_47], %81 {strides = array<i32>} : memref<4x8x1xf32, #tpu.memory_space<vmem>>, vector<1x8x1xf32>,
    %82 = arith.truncf %72 : vector<8x8xf32> to vector<8x8xbf16>
    %cst_48 = arith.constant dense<0.000000e+00> : vector<8x32xf32>
    %83 = tpu.matmul %82, %57, %cst_48 {dimension_numbers = #tpu.dot_dimension_numbers<[1], [0], [0], [1], [0, 0, 1, 1], [], []>} : vector<8x8xbf16>, vector<8x32xbf16>, vector<8x32xf32> -> vector<8x32xf32>
    %c1_49 = arith.constant 1 : index
    %c0_50 = arith.constant 0 : index
    %c0_51 = arith.constant 0 : index
    %84 = vector.load %arg10[%c1_49, %c0_50, %c0_51] : memref<4x8x32xf32, #tpu.memory_space<vmem>>, vector<1x8x32xf32>
    %85 = vector.shape_cast %84 : vector<1x8x32xf32> to vector<8x32xf32>
    %86 = vector.broadcast %69 : vector<8x1xf32> to vector<8x32xf32>
    %87 = arith.mulf %86, %85 : vector<8x32xf32>
    %88 = arith.addf %87, %83 : vector<8x32xf32>
    %c1_52 = arith.constant 1 : index
    %c0_53 = arith.constant 0 : index
    %c0_54 = arith.constant 0 : index
    %89 = vector.load %arg10[%c1_52, %c0_53, %c0_54] : memref<4x8x32xf32, #tpu.memory_space<vmem>>, vector<1x8x32xf32>
    %90 = vector.shape_cast %89 : vector<1x8x32xf32> to vector<8x32xf32>
    %91 = vector.shape_cast %88 : vector<8x32xf32> to vector<1x8x32xf32>
    tpu.vector_store %arg10[%c1_52, %c0_53, %c0_54], %91 {strides = array<i32>} : memref<4x8x32xf32, #tpu.memory_space<vmem>>, vector<1x8x32xf32>,
    %c1_55 = arith.constant 1 : index
    %c0_56 = arith.constant 0 : index
    %c0_57 = arith.constant 0 : index
    %92 = vector.load %arg8[%c1_55, %c0_56, %c0_57] : memref<4x8x1xf32, #tpu.memory_space<vmem>>, vector<1x8x1xf32>
    %93 = vector.shape_cast %92 : vector<1x8x1xf32> to vector<8x1xf32>
    %94 = vector.shape_cast %67 : vector<8x1xf32> to vector<1x8x1xf32>
    tpu.vector_store %arg8[%c1_55, %c0_56, %c0_57], %94 {strides = array<i32>} : memref<4x8x1xf32, #tpu.memory_space<vmem>>, vector<1x8x1xf32>,
    %95 = vector.extract_strided_slice %4 {offsets = [0, 64], sizes = [8, 32], strides = [1, 1]} : vector<8x128xbf16> to vector<8x32xbf16>
    %96 = vector.extract_strided_slice %6 {offsets = [0, 64], sizes = [8, 32], strides = [1, 1]} : vector<8x128xbf16> to vector<8x32xbf16>
    %97 = vector.extract_strided_slice %8 {offsets = [0, 64], sizes = [8, 32], strides = [1, 1]} : vector<8x128xbf16> to vector<8x32xbf16>
    %cst_58 = arith.constant dense<0.000000e+00> : vector<8x8xf32>
    %98 = tpu.matmul %95, %96, %cst_58 {dimension_numbers = #tpu.dot_dimension_numbers<[1], [1], [0], [0], [0, 0, 1, 0], [], []>} : vector<8x32xbf16>, vector<8x32xbf16>, vector<8x8xf32> -> vector<8x8xf32>
    %cst_59 = arith.constant 0.176776692 : f32
    %99 = vector.broadcast %cst_59 : f32 to vector<8x8xf32>
    %100 = arith.mulf %98, %99 : vector<8x8xf32>
    %101 = vector.broadcast %14 : vector<1x8xf32> to vector<8x8xf32>
    %102 = arith.addf %100, %101 : vector<8x8xf32>
    %c2 = arith.constant 2 : index
    %c0_60 = arith.constant 0 : index
    %c0_61 = arith.constant 0 : index
    %103 = vector.load %arg8[%c2, %c0_60, %c0_61] : memref<4x8x1xf32, #tpu.memory_space<vmem>>, vector<1x8x1xf32>
    %104 = vector.shape_cast %103 : vector<1x8x1xf32> to vector<8x1xf32>
    %cst_62 = arith.constant dense<0xFF800000> : vector<8xf32>
    %105 = vector.multi_reduction <maximumf>, %102, %cst_62 [1] : vector<8x8xf32> to vector<8xf32>
    %106 = vector.shape_cast %105 : vector<8xf32> to vector<8x1xf32>
    %107 = arith.maximumf %104, %106 : vector<8x1xf32>
    %108 = arith.subf %104, %107 : vector<8x1xf32>
    %109 = math.exp %108 : vector<8x1xf32>
    %110 = vector.broadcast %107 : vector<8x1xf32> to vector<8x8xf32>
    %111 = arith.subf %102, %110 : vector<8x8xf32>
    %112 = math.exp %111 : vector<8x8xf32>
    %c2_63 = arith.constant 2 : index
    %c0_64 = arith.constant 0 : index
    %c0_65 = arith.constant 0 : index
    %113 = vector.load %arg9[%c2_63, %c0_64, %c0_65] : memref<4x8x1xf32, #tpu.memory_space<vmem>>, vector<1x8x1xf32>
    %114 = vector.shape_cast %113 : vector<1x8x1xf32> to vector<8x1xf32>
    %115 = arith.mulf %109, %114 : vector<8x1xf32>
    %cst_66 = arith.constant dense<0.000000e+00> : vector<8xf32>
    %116 = vector.multi_reduction <add>, %112, %cst_66 [1] : vector<8x8xf32> to vector<8xf32>
    %117 = vector.shape_cast %116 : vector<8xf32> to vector<8x1xf32>
    %118 = arith.addf %115, %117 : vector<8x1xf32>
    %c2_67 = arith.constant 2 : index
    %c0_68 = arith.constant 0 : index
    %c0_69 = arith.constant 0 : index
    %119 = vector.load %arg9[%c2_67, %c0_68, %c0_69] : memref<4x8x1xf32, #tpu.memory_space<vmem>>, vector<1x8x1xf32>
    %120 = vector.shape_cast %119 : vector<1x8x1xf32> to vector<8x1xf32>
    %121 = vector.shape_cast %118 : vector<8x1xf32> to vector<1x8x1xf32>
    tpu.vector_store %arg9[%c2_67, %c0_68, %c0_69], %121 {strides = array<i32>} : memref<4x8x1xf32, #tpu.memory_space<vmem>>, vector<1x8x1xf32>,
    %122 = arith.truncf %112 : vector<8x8xf32> to vector<8x8xbf16>
    %cst_70 = arith.constant dense<0.000000e+00> : vector<8x32xf32>
    %123 = tpu.matmul %122, %97, %cst_70 {dimension_numbers = #tpu.dot_dimension_numbers<[1], [0], [0], [1], [0, 0, 1, 1], [], []>} : vector<8x8xbf16>, vector<8x32xbf16>, vector<8x32xf32> -> vector<8x32xf32>
    %c2_71 = arith.constant 2 : index
    %c0_72 = arith.constant 0 : index
    %c0_73 = arith.constant 0 : index
    %124 = vector.load %arg10[%c2_71, %c0_72, %c0_73] : memref<4x8x32xf32, #tpu.memory_space<vmem>>, vector<1x8x32xf32>
    %125 = vector.shape_cast %124 : vector<1x8x32xf32> to vector<8x32xf32>
    %126 = vector.broadcast %109 : vector<8x1xf32> to vector<8x32xf32>
    %127 = arith.mulf %126, %125 : vector<8x32xf32>
    %128 = arith.addf %127, %123 : vector<8x32xf32>
    %c2_74 = arith.constant 2 : index
    %c0_75 = arith.constant 0 : index
    %c0_76 = arith.constant 0 : index
    %129 = vector.load %arg10[%c2_74, %c0_75, %c0_76] : memref<4x8x32xf32, #tpu.memory_space<vmem>>, vector<1x8x32xf32>
    %130 = vector.shape_cast %129 : vector<1x8x32xf32> to vector<8x32xf32>
    %131 = vector.shape_cast %128 : vector<8x32xf32> to vector<1x8x32xf32>
    tpu.vector_store %arg10[%c2_74, %c0_75, %c0_76], %131 {strides = array<i32>} : memref<4x8x32xf32, #tpu.memory_space<vmem>>, vector<1x8x32xf32>,
    %c2_77 = arith.constant 2 : index
    %c0_78 = arith.constant 0 : index
    %c0_79 = arith.constant 0 : index
    %132 = vector.load %arg8[%c2_77, %c0_78, %c0_79] : memref<4x8x1xf32, #tpu.memory_space<vmem>>, vector<1x8x1xf32>
    %133 = vector.shape_cast %132 : vector<1x8x1xf32> to vector<8x1xf32>
    %134 = vector.shape_cast %107 : vector<8x1xf32> to vector<1x8x1xf32>
    tpu.vector_store %arg8[%c2_77, %c0_78, %c0_79], %134 {strides = array<i32>} : memref<4x8x1xf32, #tpu.memory_space<vmem>>, vector<1x8x1xf32>,
    %135 = vector.extract_strided_slice %4 {offsets = [0, 96], sizes = [8, 32], strides = [1, 1]} : vector<8x128xbf16> to vector<8x32xbf16>
    %136 = vector.extract_strided_slice %6 {offsets = [0, 96], sizes = [8, 32], strides = [1, 1]} : vector<8x128xbf16> to vector<8x32xbf16>
    %137 = vector.extract_strided_slice %8 {offsets = [0, 96], sizes = [8, 32], strides = [1, 1]} : vector<8x128xbf16> to vector<8x32xbf16>
    %cst_80 = arith.constant dense<0.000000e+00> : vector<8x8xf32>
    %138 = tpu.matmul %135, %136, %cst_80 {dimension_numbers = #tpu.dot_dimension_numbers<[1], [1], [0], [0], [0, 0, 1, 0], [], []>} : vector<8x32xbf16>, vector<8x32xbf16>, vector<8x8xf32> -> vector<8x8xf32>
    %cst_81 = arith.constant 0.176776692 : f32
    %139 = vector.broadcast %cst_81 : f32 to vector<8x8xf32>
    %140 = arith.mulf %138, %139 : vector<8x8xf32>
    %141 = vector.broadcast %14 : vector<1x8xf32> to vector<8x8xf32>
    %142 = arith.addf %140, %141 : vector<8x8xf32>
    %c3 = arith.constant 3 : index
    %c0_82 = arith.constant 0 : index
    %c0_83 = arith.constant 0 : index
    %143 = vector.load %arg8[%c3, %c0_82, %c0_83] : memref<4x8x1xf32, #tpu.memory_space<vmem>>, vector<1x8x1xf32>
    %144 = vector.shape_cast %143 : vector<1x8x1xf32> to vector<8x1xf32>
    %cst_84 = arith.constant dense<0xFF800000> : vector<8xf32>
    %145 = vector.multi_reduction <maximumf>, %142, %cst_84 [1] : vector<8x8xf32> to vector<8xf32>
    %146 = vector.shape_cast %145 : vector<8xf32> to vector<8x1xf32>
    %147 = arith.maximumf %144, %146 : vector<8x1xf32>
    %148 = arith.subf %144, %147 : vector<8x1xf32>
    %149 = math.exp %148 : vector<8x1xf32>
    %150 = vector.broadcast %147 : vector<8x1xf32> to vector<8x8xf32>
    %151 = arith.subf %142, %150 : vector<8x8xf32>
    %152 = math.exp %151 : vector<8x8xf32>
    %c3_85 = arith.constant 3 : index
    %c0_86 = arith.constant 0 : index
    %c0_87 = arith.constant 0 : index
    %153 = vector.load %arg9[%c3_85, %c0_86, %c0_87] : memref<4x8x1xf32, #tpu.memory_space<vmem>>, vector<1x8x1xf32>
    %154 = vector.shape_cast %153 : vector<1x8x1xf32> to vector<8x1xf32>
    %155 = arith.mulf %149, %154 : vector<8x1xf32>
    %cst_88 = arith.constant dense<0.000000e+00> : vector<8xf32>
    %156 = vector.multi_reduction <add>, %152, %cst_88 [1] : vector<8x8xf32> to vector<8xf32>
    %157 = vector.shape_cast %156 : vector<8xf32> to vector<8x1xf32>
    %158 = arith.addf %155, %157 : vector<8x1xf32>
    %c3_89 = arith.constant 3 : index
    %c0_90 = arith.constant 0 : index
    %c0_91 = arith.constant 0 : index
    %159 = vector.load %arg9[%c3_89, %c0_90, %c0_91] : memref<4x8x1xf32, #tpu.memory_space<vmem>>, vector<1x8x1xf32>
    %160 = vector.shape_cast %159 : vector<1x8x1xf32> to vector<8x1xf32>
    %161 = vector.shape_cast %158 : vector<8x1xf32> to vector<1x8x1xf32>
    tpu.vector_store %arg9[%c3_89, %c0_90, %c0_91], %161 {strides = array<i32>} : memref<4x8x1xf32, #tpu.memory_space<vmem>>, vector<1x8x1xf32>,
    %162 = arith.truncf %152 : vector<8x8xf32> to vector<8x8xbf16>
    %cst_92 = arith.constant dense<0.000000e+00> : vector<8x32xf32>
    %163 = tpu.matmul %162, %137, %cst_92 {dimension_numbers = #tpu.dot_dimension_numbers<[1], [0], [0], [1], [0, 0, 1, 1], [], []>} : vector<8x8xbf16>, vector<8x32xbf16>, vector<8x32xf32> -> vector<8x32xf32>
    %c3_93 = arith.constant 3 : index
    %c0_94 = arith.constant 0 : index
    %c0_95 = arith.constant 0 : index
    %164 = vector.load %arg10[%c3_93, %c0_94, %c0_95] : memref<4x8x32xf32, #tpu.memory_space<vmem>>, vector<1x8x32xf32>
    %165 = vector.shape_cast %164 : vector<1x8x32xf32> to vector<8x32xf32>
    %166 = vector.broadcast %149 : vector<8x1xf32> to vector<8x32xf32>
    %167 = arith.mulf %166, %165 : vector<8x32xf32>
    %168 = arith.addf %167, %163 : vector<8x32xf32>
    %c3_96 = arith.constant 3 : index
    %c0_97 = arith.constant 0 : index
    %c0_98 = arith.constant 0 : index
    %169 = vector.load %arg10[%c3_96, %c0_97, %c0_98] : memref<4x8x32xf32, #tpu.memory_space<vmem>>, vector<1x8x32xf32>
    %170 = vector.shape_cast %169 : vector<1x8x32xf32> to vector<8x32xf32>
    %171 = vector.shape_cast %168 : vector<8x32xf32> to vector<1x8x32xf32>
    tpu.vector_store %arg10[%c3_96, %c0_97, %c0_98], %171 {strides = array<i32>} : memref<4x8x32xf32, #tpu.memory_space<vmem>>, vector<1x8x32xf32>,
    %c3_99 = arith.constant 3 : index
    %c0_100 = arith.constant 0 : index
    %c0_101 = arith.constant 0 : index
    %172 = vector.load %arg8[%c3_99, %c0_100, %c0_101] : memref<4x8x1xf32, #tpu.memory_space<vmem>>, vector<1x8x1xf32>
    %173 = vector.shape_cast %172 : vector<1x8x1xf32> to vector<8x1xf32>
    %174 = vector.shape_cast %147 : vector<8x1xf32> to vector<1x8x1xf32>
    tpu.vector_store %arg8[%c3_99, %c0_100, %c0_101], %174 {strides = array<i32>} : memref<4x8x1xf32, #tpu.memory_space<vmem>>, vector<1x8x1xf32>,
    %c0_i32_102 = arith.constant 0 : i32
    %175 = arith.cmpi eq, %arg2, %c0_i32_102 : i32
    %176 = arith.extui %175 : i1 to i32
    %c0_i32_103 = arith.constant 0 : i32
    %177 = arith.cmpi ne, %176, %c0_i32_103 : i32
    scf.if %177 {
      %c0_104 = arith.constant 0 : index
      %c0_105 = arith.constant 0 : index
      %c0_106 = arith.constant 0 : index
      %178 = vector.load %arg9[%c0_104, %c0_105, %c0_106] : memref<4x8x1xf32, #tpu.memory_space<vmem>>, vector<1x8x1xf32>
      %179 = vector.shape_cast %178 : vector<1x8x1xf32> to vector<8x1xf32>
      %180 = tpu.reciprocal %179 {approx = true} : vector<8x1xf32> -> vector<8x1xf32>
      %c0_107 = arith.constant 0 : index
      %c0_108 = arith.constant 0 : index
      %c0_109 = arith.constant 0 : index
      %181 = vector.load %arg10[%c0_107, %c0_108, %c0_109] : memref<4x8x32xf32, #tpu.memory_space<vmem>>, vector<1x8x32xf32>
      %182 = vector.shape_cast %181 : vector<1x8x32xf32> to vector<8x32xf32>
      %183 = vector.broadcast %180 : vector<8x1xf32> to vector<8x32xf32>
      %184 = arith.mulf %182, %183 : vector<8x32xf32>
      %c1_110 = arith.constant 1 : index
      %c0_111 = arith.constant 0 : index
      %c0_112 = arith.constant 0 : index
      %185 = vector.load %arg9[%c1_110, %c0_111, %c0_112] : memref<4x8x1xf32, #tpu.memory_space<vmem>>, vector<1x8x1xf32>
      %186 = vector.shape_cast %185 : vector<1x8x1xf32> to vector<8x1xf32>
      %187 = tpu.reciprocal %186 {approx = true} : vector<8x1xf32> -> vector<8x1xf32>
      %c1_113 = arith.constant 1 : index
      %c0_114 = arith.constant 0 : index
      %c0_115 = arith.constant 0 : index
      %188 = vector.load %arg10[%c1_113, %c0_114, %c0_115] : memref<4x8x32xf32, #tpu.memory_space<vmem>>, vector<1x8x32xf32>
      %189 = vector.shape_cast %188 : vector<1x8x32xf32> to vector<8x32xf32>
      %190 = vector.broadcast %187 : vector<8x1xf32> to vector<8x32xf32>
      %191 = arith.mulf %189, %190 : vector<8x32xf32>
      %c2_116 = arith.constant 2 : index
      %c0_117 = arith.constant 0 : index
      %c0_118 = arith.constant 0 : index
      %192 = vector.load %arg9[%c2_116, %c0_117, %c0_118] : memref<4x8x1xf32, #tpu.memory_space<vmem>>, vector<1x8x1xf32>
      %193 = vector.shape_cast %192 : vector<1x8x1xf32> to vector<8x1xf32>
      %194 = tpu.reciprocal %193 {approx = true} : vector<8x1xf32> -> vector<8x1xf32>
      %c2_119 = arith.constant 2 : index
      %c0_120 = arith.constant 0 : index
      %c0_121 = arith.constant 0 : index
      %195 = vector.load %arg10[%c2_119, %c0_120, %c0_121] : memref<4x8x32xf32, #tpu.memory_space<vmem>>, vector<1x8x32xf32>
      %196 = vector.shape_cast %195 : vector<1x8x32xf32> to vector<8x32xf32>
      %197 = vector.broadcast %194 : vector<8x1xf32> to vector<8x32xf32>
      %198 = arith.mulf %196, %197 : vector<8x32xf32>
      %c3_122 = arith.constant 3 : index
      %c0_123 = arith.constant 0 : index
      %c0_124 = arith.constant 0 : index
      %199 = vector.load %arg9[%c3_122, %c0_123, %c0_124] : memref<4x8x1xf32, #tpu.memory_space<vmem>>, vector<1x8x1xf32>
      %200 = vector.shape_cast %199 : vector<1x8x1xf32> to vector<8x1xf32>
      %201 = tpu.reciprocal %200 {approx = true} : vector<8x1xf32> -> vector<8x1xf32>
      %c3_125 = arith.constant 3 : index
      %c0_126 = arith.constant 0 : index
      %c0_127 = arith.constant 0 : index
      %202 = vector.load %arg10[%c3_125, %c0_126, %c0_127] : memref<4x8x32xf32, #tpu.memory_space<vmem>>, vector<1x8x32xf32>
      %203 = vector.shape_cast %202 : vector<1x8x32xf32> to vector<8x32xf32>
      %204 = vector.broadcast %201 : vector<8x1xf32> to vector<8x32xf32>
      %205 = arith.mulf %203, %204 : vector<8x32xf32>
      %206 = tpu.concatenate %184, %191, %198, %205 in 1 : vector<8x32xf32>, vector<8x32xf32>, vector<8x32xf32>, vector<8x32xf32> -> vector<8x128xf32>
      %207 = arith.truncf %206 : vector<8x128xf32> to vector<8x128xbf16>
      %c0_128 = arith.constant 0 : index
      %c0_129 = arith.constant 0 : index
      %c0_130 = arith.constant 0 : index
      %208 = vector.load %arg7[%c0_128, %c0_129, %c0_130] : memref<1x8x128xbf16, #tpu.memory_space<vmem>>, vector<1x8x128xbf16>
      %209 = vector.shape_cast %208 : vector<1x8x128xbf16> to vector<8x128xbf16>
      %210 = vector.shape_cast %207 : vector<8x128xbf16> to vector<1x8x128xbf16>
      tpu.vector_store %arg7[%c0_128, %c0_129, %c0_130], %210 {strides = array<i32>} : memref<1x8x128xbf16, #tpu.memory_space<vmem>>, vector<1x8x128xbf16>,
    } else {
    }
    return
  }
  func.func @transform_0(%arg0: i32, %arg1: i32, %arg2: i32) -> (i32, i32, i32) {
    %c0_i32 = arith.constant 0 : i32
    %c0_i32_0 = arith.constant 0 : i32
    return %arg0, %arg1, %c0_i32 : i32, i32, i32
  }
  func.func @transform_1(%arg0: i32, %arg1: i32, %arg2: i32) -> (i32, i32, i32) {
    %c1_i32 = arith.constant 1 : i32
    %c0_i32 = arith.constant 0 : i32
    return %arg0, %arg2, %c1_i32 : i32, i32, i32
  }
  func.func @transform_2(%arg0: i32, %arg1: i32, %arg2: i32) -> (i32, i32, i32) {
    %c2_i32 = arith.constant 2 : i32
    %c0_i32 = arith.constant 0 : i32
    return %arg0, %arg2, %c2_i32 : i32, i32, i32
  }
  func.func @transform_3(%arg0: i32, %arg1: i32, %arg2: i32) -> (i32, i32, i32) {
    %c0_i32 = arith.constant 0 : i32
    %c0_i32_0 = arith.constant 0 : i32
    return %arg0, %c0_i32, %arg2 : i32, i32, i32
  }
  func.func @transform_4(%arg0: i32, %arg1: i32, %arg2: i32) -> (i32, i32, i32) {
    %c0_i32 = arith.constant 0 : i32
    %c0_i32_0 = arith.constant 0 : i32
    return %arg0, %arg1, %c0_i32 : i32, i32, i32
  }
}

module attributes {stable_mosaic.version = 11 : i64} {
  func.func @_matmul_bias_add_ln_kernel(%arg0: i32, %arg1: i32, %arg2: memref<32x256xbf16, #tpu.memory_space<vmem>>, %arg3: memref<256x128xbf16, #tpu.memory_space<vmem>>, %arg4: memref<1x128xf32, #tpu.memory_space<vmem>>, %arg5: memref<32x128xbf16, #tpu.memory_space<vmem>>, %arg6: memref<1x128xf32, #tpu.memory_space<vmem>>, %arg7: memref<1x128xf32, #tpu.memory_space<vmem>>, %arg8: memref<32x128xbf16, #tpu.memory_space<vmem>>, %arg9: memref<32x128xf32, #tpu.memory_space<vmem>>) attributes {dimension_semantics = [#tpu.dimension_semantics<parallel>, #tpu.dimension_semantics<arbitrary>], iteration_bounds = array<i64: 1, 1>, scalar_prefetch = 0 : i64, scratch_operands = 1 : i64, tpu.core_type = #tpu.core_type<tc>, window_params = [{transform_indices = @transform_0, window_bounds = array<i64: 32, 256>}, {transform_indices = @transform_1, window_bounds = array<i64: 256, 128>}, {pipeline_mode = #tpu.pipeline_mode<synchronous>, transform_indices = @transform_2, window_bounds = array<i64: 1, 128>}, {transform_indices = @transform_3, window_bounds = array<i64: 32, 128>}, {pipeline_mode = #tpu.pipeline_mode<synchronous>, transform_indices = @transform_4, window_bounds = array<i64: 1, 128>}, {pipeline_mode = #tpu.pipeline_mode<synchronous>, transform_indices = @transform_5, window_bounds = array<i64: 1, 128>}, {transform_indices = @transform_6, window_bounds = array<i64: 32, 128>}]} {
    %c0_i32 = arith.constant 0 : i32
    %0 = arith.cmpi eq, %arg1, %c0_i32 : i32
    %1 = arith.extui %0 : i1 to i32
    %c0_i32_0 = arith.constant 0 : i32
    %2 = arith.cmpi ne, %1, %c0_i32_0 : i32
    scf.if %2 {
      %cst_10 = arith.constant 0.000000e+00 : f32
      %12 = vector.broadcast %cst_10 : f32 to vector<32x128xf32>
      %c0_11 = arith.constant 0 : index
      %c0_12 = arith.constant 0 : index
      %13 = vector.load %arg9[%c0_11, %c0_12] : memref<32x128xf32, #tpu.memory_space<vmem>>, vector<32x128xf32>
      tpu.vector_store %arg9[%c0_11, %c0_12], %12 {strides = array<i32>} : memref<32x128xf32, #tpu.memory_space<vmem>>, vector<32x128xf32>,
    } else {
    }
    %c0 = arith.constant 0 : index
    %c0_1 = arith.constant 0 : index
    %3 = vector.load %arg9[%c0, %c0_1] : memref<32x128xf32, #tpu.memory_space<vmem>>, vector<32x128xf32>
    %c0_2 = arith.constant 0 : index
    %c0_3 = arith.constant 0 : index
    %4 = vector.load %arg2[%c0_2, %c0_3] : memref<32x256xbf16, #tpu.memory_space<vmem>>, vector<32x256xbf16>
    %c0_4 = arith.constant 0 : index
    %c0_5 = arith.constant 0 : index
    %5 = vector.load %arg3[%c0_4, %c0_5] : memref<256x128xbf16, #tpu.memory_space<vmem>>, vector<256x128xbf16>
    %cst = arith.constant dense<0.000000e+00> : vector<32x128xf32>
    %6 = tpu.matmul %4, %5, %cst {dimension_numbers = #tpu.dot_dimension_numbers<[1], [0], [0], [1], [0, 0, 1, 1], [], []>} : vector<32x256xbf16>, vector<256x128xbf16>, vector<32x128xf32> -> vector<32x128xf32>
    %7 = arith.addf %3, %6 : vector<32x128xf32>
    %c0_6 = arith.constant 0 : index
    %c0_7 = arith.constant 0 : index
    %8 = vector.load %arg9[%c0_6, %c0_7] : memref<32x128xf32, #tpu.memory_space<vmem>>, vector<32x128xf32>
    tpu.vector_store %arg9[%c0_6, %c0_7], %7 {strides = array<i32>} : memref<32x128xf32, #tpu.memory_space<vmem>>, vector<32x128xf32>,
    %c0_i32_8 = arith.constant 0 : i32
    %9 = arith.cmpi eq, %arg1, %c0_i32_8 : i32
    %10 = arith.extui %9 : i1 to i32
    %c0_i32_9 = arith.constant 0 : i32
    %11 = arith.cmpi ne, %10, %c0_i32_9 : i32
    scf.if %11 {
      %c0_10 = arith.constant 0 : index
      %c0_11 = arith.constant 0 : index
      %12 = vector.load %arg9[%c0_10, %c0_11] : memref<32x128xf32, #tpu.memory_space<vmem>>, vector<32x128xf32>
      %c0_12 = arith.constant 0 : index
      %c0_13 = arith.constant 0 : index
      %13 = vector.load %arg4[%c0_12, %c0_13] : memref<1x128xf32, #tpu.memory_space<vmem>>, vector<1x128xf32>
      %14 = vector.broadcast %13 : vector<1x128xf32> to vector<32x128xf32>
      %15 = arith.addf %12, %14 : vector<32x128xf32>
      %c0_14 = arith.constant 0 : index
      %c0_15 = arith.constant 0 : index
      %16 = vector.load %arg5[%c0_14, %c0_15] : memref<32x128xbf16, #tpu.memory_space<vmem>>, vector<32x128xbf16>
      %17 = arith.extf %16 : vector<32x128xbf16> to vector<32x128xf32>
      %18 = arith.addf %15, %17 : vector<32x128xf32>
      %cst_16 = arith.constant dense<0.000000e+00> : vector<32xf32>
      %19 = vector.multi_reduction <add>, %18, %cst_16 [1] : vector<32x128xf32> to vector<32xf32>
      %20 = vector.shape_cast %19 : vector<32xf32> to vector<32x1xf32>
      %cst_17 = arith.constant 1.280000e+02 : f32
      %21 = vector.broadcast %cst_17 : f32 to vector<32x1xf32>
      %22 = arith.divf %20, %21 : vector<32x1xf32>
      %23 = vector.broadcast %22 : vector<32x1xf32> to vector<32x128xf32>
      %24 = arith.subf %18, %23 : vector<32x128xf32>
      %25 = vector.broadcast %22 : vector<32x1xf32> to vector<32x128xf32>
      %26 = arith.subf %18, %25 : vector<32x128xf32>
      %27 = arith.mulf %24, %26 : vector<32x128xf32>
      %cst_18 = arith.constant dense<0.000000e+00> : vector<32xf32>
      %28 = vector.multi_reduction <add>, %27, %cst_18 [1] : vector<32x128xf32> to vector<32xf32>
      %29 = vector.shape_cast %28 : vector<32xf32> to vector<32x1xf32>
      %cst_19 = arith.constant 1.280000e+02 : f32
      %30 = vector.broadcast %cst_19 : f32 to vector<32x1xf32>
      %31 = arith.divf %29, %30 : vector<32x1xf32>
      %32 = vector.broadcast %22 : vector<32x1xf32> to vector<32x128xf32>
      %33 = arith.subf %18, %32 : vector<32x128xf32>
      %cst_20 = arith.constant 9.99999974E-6 : f32
      %34 = vector.broadcast %cst_20 : f32 to vector<32x1xf32>
      %35 = arith.addf %31, %34 : vector<32x1xf32>
      %36 = math.rsqrt %35 : vector<32x1xf32>
      %37 = vector.broadcast %36 : vector<32x1xf32> to vector<32x128xf32>
      %38 = arith.mulf %33, %37 : vector<32x128xf32>
      %c0_21 = arith.constant 0 : index
      %c0_22 = arith.constant 0 : index
      %39 = vector.load %arg6[%c0_21, %c0_22] : memref<1x128xf32, #tpu.memory_space<vmem>>, vector<1x128xf32>
      %40 = vector.broadcast %39 : vector<1x128xf32> to vector<32x128xf32>
      %41 = arith.mulf %38, %40 : vector<32x128xf32>
      %c0_23 = arith.constant 0 : index
      %c0_24 = arith.constant 0 : index
      %42 = vector.load %arg7[%c0_23, %c0_24] : memref<1x128xf32, #tpu.memory_space<vmem>>, vector<1x128xf32>
      %43 = vector.broadcast %42 : vector<1x128xf32> to vector<32x128xf32>
      %44 = arith.addf %41, %43 : vector<32x128xf32>
      %45 = arith.truncf %44 : vector<32x128xf32> to vector<32x128xbf16>
      %c0_25 = arith.constant 0 : index
      %c0_26 = arith.constant 0 : index
      %46 = vector.load %arg8[%c0_25, %c0_26] : memref<32x128xbf16, #tpu.memory_space<vmem>>, vector<32x128xbf16>
      tpu.vector_store %arg8[%c0_25, %c0_26], %45 {strides = array<i32>} : memref<32x128xbf16, #tpu.memory_space<vmem>>, vector<32x128xbf16>,
    } else {
    }
    return
  }
  func.func @transform_0(%arg0: i32, %arg1: i32) -> (i32, i32) {
    %c0_i32 = arith.constant 0 : i32
    return %arg0, %arg1 : i32, i32
  }
  func.func @transform_1(%arg0: i32, %arg1: i32) -> (i32, i32) {
    %c0_i32 = arith.constant 0 : i32
    %c0_i32_0 = arith.constant 0 : i32
    return %arg1, %c0_i32 : i32, i32
  }
  func.func @transform_2(%arg0: i32, %arg1: i32) -> (i32, i32) {
    %c0_i32 = arith.constant 0 : i32
    %c0_i32_0 = arith.constant 0 : i32
    %c0_i32_1 = arith.constant 0 : i32
    return %c0_i32, %c0_i32_0 : i32, i32
  }
  func.func @transform_3(%arg0: i32, %arg1: i32) -> (i32, i32) {
    %c0_i32 = arith.constant 0 : i32
    %c0_i32_0 = arith.constant 0 : i32
    return %arg0, %c0_i32 : i32, i32
  }
  func.func @transform_4(%arg0: i32, %arg1: i32) -> (i32, i32) {
    %c0_i32 = arith.constant 0 : i32
    %c0_i32_0 = arith.constant 0 : i32
    %c0_i32_1 = arith.constant 0 : i32
    return %c0_i32, %c0_i32_0 : i32, i32
  }
  func.func @transform_5(%arg0: i32, %arg1: i32) -> (i32, i32) {
    %c0_i32 = arith.constant 0 : i32
    %c0_i32_0 = arith.constant 0 : i32
    %c0_i32_1 = arith.constant 0 : i32
    return %c0_i32, %c0_i32_0 : i32, i32
  }
  func.func @transform_6(%arg0: i32, %arg1: i32) -> (i32, i32) {
    %c0_i32 = arith.constant 0 : i32
    %c0_i32_0 = arith.constant 0 : i32
    return %arg0, %c0_i32 : i32, i32
  }
}

module attributes {stable_mosaic.version = 11 : i64} {
  func.func @_matmul_bias_kernel(%arg0: i32, %arg1: i32, %arg2: i32, %arg3: memref<32x128xbf16, #tpu.memory_space<vmem>>, %arg4: memref<128x256xbf16, #tpu.memory_space<vmem>>, %arg5: memref<1x256xf32, #tpu.memory_space<vmem>>, %arg6: memref<32x256xbf16, #tpu.memory_space<vmem>>, %arg7: memref<32x256xf32, #tpu.memory_space<vmem>>) attributes {dimension_semantics = [#tpu.dimension_semantics<parallel>, #tpu.dimension_semantics<parallel>, #tpu.dimension_semantics<arbitrary>], iteration_bounds = array<i64: 1, 1, 1>, scalar_prefetch = 0 : i64, scratch_operands = 1 : i64, tpu.core_type = #tpu.core_type<tc>, window_params = [{transform_indices = @transform_0, window_bounds = array<i64: 32, 128>}, {transform_indices = @transform_1, window_bounds = array<i64: 128, 256>}, {transform_indices = @transform_2, window_bounds = array<i64: 1, 256>}, {transform_indices = @transform_3, window_bounds = array<i64: 32, 256>}]} {
    %c0_i32 = arith.constant 0 : i32
    %0 = arith.cmpi eq, %arg2, %c0_i32 : i32
    %1 = arith.extui %0 : i1 to i32
    %c0_i32_0 = arith.constant 0 : i32
    %2 = arith.cmpi ne, %1, %c0_i32_0 : i32
    scf.if %2 {
      %cst_10 = arith.constant 0.000000e+00 : f32
      %12 = vector.broadcast %cst_10 : f32 to vector<32x256xf32>
      %c0_11 = arith.constant 0 : index
      %c0_12 = arith.constant 0 : index
      %13 = vector.load %arg7[%c0_11, %c0_12] : memref<32x256xf32, #tpu.memory_space<vmem>>, vector<32x256xf32>
      tpu.vector_store %arg7[%c0_11, %c0_12], %12 {strides = array<i32>} : memref<32x256xf32, #tpu.memory_space<vmem>>, vector<32x256xf32>,
    } else {
    }
    %c0 = arith.constant 0 : index
    %c0_1 = arith.constant 0 : index
    %3 = vector.load %arg7[%c0, %c0_1] : memref<32x256xf32, #tpu.memory_space<vmem>>, vector<32x256xf32>
    %c0_2 = arith.constant 0 : index
    %c0_3 = arith.constant 0 : index
    %4 = vector.load %arg3[%c0_2, %c0_3] : memref<32x128xbf16, #tpu.memory_space<vmem>>, vector<32x128xbf16>
    %c0_4 = arith.constant 0 : index
    %c0_5 = arith.constant 0 : index
    %5 = vector.load %arg4[%c0_4, %c0_5] : memref<128x256xbf16, #tpu.memory_space<vmem>>, vector<128x256xbf16>
    %cst = arith.constant dense<0.000000e+00> : vector<32x256xf32>
    %6 = tpu.matmul %4, %5, %cst {dimension_numbers = #tpu.dot_dimension_numbers<[1], [0], [0], [1], [0, 0, 1, 1], [], []>} : vector<32x128xbf16>, vector<128x256xbf16>, vector<32x256xf32> -> vector<32x256xf32>
    %7 = arith.addf %3, %6 : vector<32x256xf32>
    %c0_6 = arith.constant 0 : index
    %c0_7 = arith.constant 0 : index
    %8 = vector.load %arg7[%c0_6, %c0_7] : memref<32x256xf32, #tpu.memory_space<vmem>>, vector<32x256xf32>
    tpu.vector_store %arg7[%c0_6, %c0_7], %7 {strides = array<i32>} : memref<32x256xf32, #tpu.memory_space<vmem>>, vector<32x256xf32>,
    %c0_i32_8 = arith.constant 0 : i32
    %9 = arith.cmpi eq, %arg2, %c0_i32_8 : i32
    %10 = arith.extui %9 : i1 to i32
    %c0_i32_9 = arith.constant 0 : i32
    %11 = arith.cmpi ne, %10, %c0_i32_9 : i32
    scf.if %11 {
      %c0_10 = arith.constant 0 : index
      %c0_11 = arith.constant 0 : index
      %12 = vector.load %arg7[%c0_10, %c0_11] : memref<32x256xf32, #tpu.memory_space<vmem>>, vector<32x256xf32>
      %c0_12 = arith.constant 0 : index
      %c0_13 = arith.constant 0 : index
      %13 = vector.load %arg5[%c0_12, %c0_13] : memref<1x256xf32, #tpu.memory_space<vmem>>, vector<1x256xf32>
      %14 = vector.broadcast %13 : vector<1x256xf32> to vector<32x256xf32>
      %15 = arith.addf %12, %14 : vector<32x256xf32>
      %16 = arith.mulf %15, %15 : vector<32x256xf32>
      %17 = arith.mulf %15, %16 : vector<32x256xf32>
      %cst_14 = arith.constant 4.471500e-02 : f32
      %18 = vector.broadcast %cst_14 : f32 to vector<32x256xf32>
      %19 = arith.mulf %18, %17 : vector<32x256xf32>
      %20 = arith.addf %15, %19 : vector<32x256xf32>
      %cst_15 = arith.constant 0.797884583 : f32
      %21 = vector.broadcast %cst_15 : f32 to vector<32x256xf32>
      %22 = arith.mulf %21, %20 : vector<32x256xf32>
      %23 = math.tanh %22 : vector<32x256xf32>
      %cst_16 = arith.constant 1.000000e+00 : f32
      %24 = vector.broadcast %cst_16 : f32 to vector<32x256xf32>
      %25 = arith.addf %24, %23 : vector<32x256xf32>
      %cst_17 = arith.constant 5.000000e-01 : f32
      %26 = vector.broadcast %cst_17 : f32 to vector<32x256xf32>
      %27 = arith.mulf %26, %25 : vector<32x256xf32>
      %28 = arith.mulf %15, %27 : vector<32x256xf32>
      %29 = arith.truncf %28 : vector<32x256xf32> to vector<32x256xbf16>
      %c0_18 = arith.constant 0 : index
      %c0_19 = arith.constant 0 : index
      %30 = vector.load %arg6[%c0_18, %c0_19] : memref<32x256xbf16, #tpu.memory_space<vmem>>, vector<32x256xbf16>
      tpu.vector_store %arg6[%c0_18, %c0_19], %29 {strides = array<i32>} : memref<32x256xbf16, #tpu.memory_space<vmem>>, vector<32x256xbf16>,
    } else {
    }
    return
  }
  func.func @transform_0(%arg0: i32, %arg1: i32, %arg2: i32) -> (i32, i32) {
    %c0_i32 = arith.constant 0 : i32
    return %arg0, %arg2 : i32, i32
  }
  func.func @transform_1(%arg0: i32, %arg1: i32, %arg2: i32) -> (i32, i32) {
    %c0_i32 = arith.constant 0 : i32
    return %arg2, %arg1 : i32, i32
  }
  func.func @transform_2(%arg0: i32, %arg1: i32, %arg2: i32) -> (i32, i32) {
    %c0_i32 = arith.constant 0 : i32
    %c0_i32_0 = arith.constant 0 : i32
    return %c0_i32, %arg1 : i32, i32
  }
  func.func @transform_3(%arg0: i32, %arg1: i32, %arg2: i32) -> (i32, i32) {
    %c0_i32 = arith.constant 0 : i32
    return %arg0, %arg1 : i32, i32
  }
}

module attributes {stable_mosaic.version = 11 : i64} {
  func.func @_pool_norm_kernel(%arg0: i32, %arg1: memref<1x8x128xbf16, #tpu.memory_space<vmem>>, %arg2: memref<1x8x128xbf16, #tpu.memory_space<vmem>>, %arg3: memref<1x8x1xf32, #tpu.memory_space<vmem>>, %arg4: memref<1x8x1xf32, #tpu.memory_space<vmem>>, %arg5: memref<1x2x128xf32, #tpu.memory_space<vmem>>) attributes {dimension_semantics = [#tpu.dimension_semantics<parallel>], iteration_bounds = array<i64: 2>, scalar_prefetch = 0 : i64, scratch_operands = 0 : i64, tpu.core_type = #tpu.core_type<tc>, window_params = [{transform_indices = @transform_0, window_bounds = array<i64: 1, 8, 128>}, {transform_indices = @transform_1, window_bounds = array<i64: 1, 8, 128>}, {transform_indices = @transform_2, window_bounds = array<i64: 1, 8, 1>}, {transform_indices = @transform_3, window_bounds = array<i64: 1, 8, 1>}, {transform_indices = @transform_4, window_bounds = array<i64: 1, 2, 128>}]} {
    %c0 = arith.constant 0 : index
    %c0_0 = arith.constant 0 : index
    %c0_1 = arith.constant 0 : index
    %0 = vector.load %arg1[%c0, %c0_0, %c0_1] : memref<1x8x128xbf16, #tpu.memory_space<vmem>>, vector<1x8x128xbf16>
    %1 = vector.shape_cast %0 : vector<1x8x128xbf16> to vector<8x128xbf16>
    %2 = arith.extf %1 : vector<8x128xbf16> to vector<8x128xf32>
    %c0_2 = arith.constant 0 : index
    %c0_3 = arith.constant 0 : index
    %c0_4 = arith.constant 0 : index
    %3 = vector.load %arg3[%c0_2, %c0_3, %c0_4] : memref<1x8x1xf32, #tpu.memory_space<vmem>>, vector<1x8x1xf32>
    %4 = vector.shape_cast %3 : vector<1x8x1xf32> to vector<8x1xf32>
    %5 = vector.broadcast %4 : vector<8x1xf32> to vector<8x128xf32>
    %6 = arith.mulf %2, %5 : vector<8x128xf32>
    %cst = arith.constant dense<0.000000e+00> : vector<128xf32>
    %7 = vector.multi_reduction <add>, %6, %cst [0] : vector<8x128xf32> to vector<128xf32>
    %8 = vector.shape_cast %7 : vector<128xf32> to vector<1x128xf32>
    %9 = vector.shape_cast %4 : vector<8x1xf32> to vector<1x8x1xf32>
    %cst_5 = arith.constant dense<0.000000e+00> : vector<1xf32>
    %10 = vector.multi_reduction <add>, %9, %cst_5 [1, 2] : vector<1x8x1xf32> to vector<1xf32>
    %11 = vector.shape_cast %10 : vector<1xf32> to vector<1x1x1xf32>
    %12 = vector.extract %11[0, 0, 0] : f32 from vector<1x1x1xf32>
    %cst_6 = arith.constant 9.99999971E-10 : f32
    %13 = arith.maximumf %12, %cst_6 : f32
    %14 = vector.broadcast %13 : f32 to vector<1x128xf32>
    %15 = arith.divf %8, %14 : vector<1x128xf32>
    %16 = arith.mulf %15, %15 : vector<1x128xf32>
    %cst_7 = arith.constant dense<0.000000e+00> : vector<1xf32>
    %17 = vector.multi_reduction <add>, %16, %cst_7 [1] : vector<1x128xf32> to vector<1xf32>
    %18 = vector.shape_cast %17 : vector<1xf32> to vector<1x1xf32>
    %19 = math.sqrt %18 : vector<1x1xf32>
    %cst_8 = arith.constant 9.99999996E-13 : f32
    %20 = vector.broadcast %cst_8 : f32 to vector<1x1xf32>
    %21 = arith.maximumf %19, %20 : vector<1x1xf32>
    %22 = vector.broadcast %21 : vector<1x1xf32> to vector<1x128xf32>
    %23 = arith.divf %15, %22 : vector<1x128xf32>
    %c0_9 = arith.constant 0 : index
    %c0_10 = arith.constant 0 : index
    %c0_11 = arith.constant 0 : index
    %24 = vector.load %arg2[%c0_9, %c0_10, %c0_11] : memref<1x8x128xbf16, #tpu.memory_space<vmem>>, vector<1x8x128xbf16>
    %25 = vector.shape_cast %24 : vector<1x8x128xbf16> to vector<8x128xbf16>
    %26 = arith.extf %25 : vector<8x128xbf16> to vector<8x128xf32>
    %c0_12 = arith.constant 0 : index
    %c0_13 = arith.constant 0 : index
    %c0_14 = arith.constant 0 : index
    %27 = vector.load %arg4[%c0_12, %c0_13, %c0_14] : memref<1x8x1xf32, #tpu.memory_space<vmem>>, vector<1x8x1xf32>
    %28 = vector.shape_cast %27 : vector<1x8x1xf32> to vector<8x1xf32>
    %29 = vector.broadcast %28 : vector<8x1xf32> to vector<8x128xf32>
    %30 = arith.mulf %26, %29 : vector<8x128xf32>
    %cst_15 = arith.constant dense<0.000000e+00> : vector<128xf32>
    %31 = vector.multi_reduction <add>, %30, %cst_15 [0] : vector<8x128xf32> to vector<128xf32>
    %32 = vector.shape_cast %31 : vector<128xf32> to vector<1x128xf32>
    %33 = vector.shape_cast %28 : vector<8x1xf32> to vector<1x8x1xf32>
    %cst_16 = arith.constant dense<0.000000e+00> : vector<1xf32>
    %34 = vector.multi_reduction <add>, %33, %cst_16 [1, 2] : vector<1x8x1xf32> to vector<1xf32>
    %35 = vector.shape_cast %34 : vector<1xf32> to vector<1x1x1xf32>
    %36 = vector.extract %35[0, 0, 0] : f32 from vector<1x1x1xf32>
    %cst_17 = arith.constant 9.99999971E-10 : f32
    %37 = arith.maximumf %36, %cst_17 : f32
    %38 = vector.broadcast %37 : f32 to vector<1x128xf32>
    %39 = arith.divf %32, %38 : vector<1x128xf32>
    %40 = arith.mulf %39, %39 : vector<1x128xf32>
    %cst_18 = arith.constant dense<0.000000e+00> : vector<1xf32>
    %41 = vector.multi_reduction <add>, %40, %cst_18 [1] : vector<1x128xf32> to vector<1xf32>
    %42 = vector.shape_cast %41 : vector<1xf32> to vector<1x1xf32>
    %43 = math.sqrt %42 : vector<1x1xf32>
    %cst_19 = arith.constant 9.99999996E-13 : f32
    %44 = vector.broadcast %cst_19 : f32 to vector<1x1xf32>
    %45 = arith.maximumf %43, %44 : vector<1x1xf32>
    %46 = vector.broadcast %45 : vector<1x1xf32> to vector<1x128xf32>
    %47 = arith.divf %39, %46 : vector<1x128xf32>
    %48 = tpu.concatenate %23, %47 in 0 : vector<1x128xf32>, vector<1x128xf32> -> vector<2x128xf32>
    %c0_20 = arith.constant 0 : index
    %c0_21 = arith.constant 0 : index
    %c0_22 = arith.constant 0 : index
    %49 = vector.load %arg5[%c0_20, %c0_21, %c0_22] : memref<1x2x128xf32, #tpu.memory_space<vmem>>, vector<1x2x128xf32>
    %50 = vector.shape_cast %49 : vector<1x2x128xf32> to vector<2x128xf32>
    %51 = vector.shape_cast %48 : vector<2x128xf32> to vector<1x2x128xf32>
    tpu.vector_store %arg5[%c0_20, %c0_21, %c0_22], %51 {strides = array<i32>} : memref<1x2x128xf32, #tpu.memory_space<vmem>>, vector<1x2x128xf32>,
    return
  }
  func.func @transform_0(%arg0: i32) -> (i32, i32, i32) {
    %c0_i32 = arith.constant 0 : i32
    %c0_i32_0 = arith.constant 0 : i32
    %c0_i32_1 = arith.constant 0 : i32
    return %arg0, %c0_i32, %c0_i32_0 : i32, i32, i32
  }
  func.func @transform_1(%arg0: i32) -> (i32, i32, i32) {
    %c2_i32 = arith.constant 2 : i32
    %0 = arith.addi %arg0, %c2_i32 : i32
    %c0_i32 = arith.constant 0 : i32
    %c0_i32_0 = arith.constant 0 : i32
    %c0_i32_1 = arith.constant 0 : i32
    return %0, %c0_i32, %c0_i32_0 : i32, i32, i32
  }
  func.func @transform_2(%arg0: i32) -> (i32, i32, i32) {
    %c0_i32 = arith.constant 0 : i32
    %c0_i32_0 = arith.constant 0 : i32
    %c0_i32_1 = arith.constant 0 : i32
    return %arg0, %c0_i32, %c0_i32_0 : i32, i32, i32
  }
  func.func @transform_3(%arg0: i32) -> (i32, i32, i32) {
    %c2_i32 = arith.constant 2 : i32
    %0 = arith.addi %arg0, %c2_i32 : i32
    %c0_i32 = arith.constant 0 : i32
    %c0_i32_0 = arith.constant 0 : i32
    %c0_i32_1 = arith.constant 0 : i32
    return %0, %c0_i32, %c0_i32_0 : i32, i32, i32
  }
  func.func @transform_4(%arg0: i32) -> (i32, i32, i32) {
    %c0_i32 = arith.constant 0 : i32
    %c0_i32_0 = arith.constant 0 : i32
    %c0_i32_1 = arith.constant 0 : i32
    return %arg0, %c0_i32, %c0_i32_0 : i32, i32, i32
  }
}

</mosaic_0001>

<llo_original>
// kernel: barlow_twins_forward.15
$region0: #{barlow_twins_forward.15}
  #allocation0 [shape = 'u32[]', space=smem, size = 0x4, offset = 0x4, fixed_abs, tag = 'smem constant byte address 0x4 - core index']
  #allocation1 [shape = 'u32[144,128]{1,0:T(1,128)}', space=vmem, size = 0x12000, scoped, tag = 'internal scratch']
  #allocation2 [shape = 'f32[32,128]{1,0:T(8,128)}', space=vmem, size = 0x4000, scoped, tag = 'scratch operand']
  %s0 = inlined_call_operand.hbm [shape: bf16[32,128], index: 0, kind: input, shape index: {}]
  %s1 = inlined_call_operand.hbm [shape: bf16[128,128], index: 1, kind: input, shape index: {}]
  %s2 = inlined_call_operand.hbm [shape: f32[1,128], index: 2, kind: input, shape index: {}]
  %s3 = inlined_call_operand.hbm [shape: bf16[32,128], index: 3, kind: input, shape index: {}]
  %s4 = inlined_call_operand.hbm [shape: f32[1,128], index: 4, kind: input, shape index: {}]
  %s5 = inlined_call_operand.hbm [shape: f32[1,128], index: 5, kind: input, shape index: {}]
  %s6 = inlined_call_operand.hbm [shape: bf16[32,128], index: 6, kind: output, shape index: {}]
  %s7 = sld [smem:[#allocation0]]
  $region66: #{barlow_twins_forward.15} parent=0
    _
  %s9 = ssub.s32 1, %s7
  %s10 = scalar_select 0, %s9, %s7
  $region1: #{barlow_twins_forward.15} parent=0
    #allocation3 [shape = 'u8[8192]{0}', space=vmem, size = 0x2000, scoped, tag = 'input window, operand 0, single buffered']
    #allocation4 [shape = 's32[1]{0}', space=sflag, size = 0x4, scoped, tag = 'scoped memory for barlow_twins_forward.15']
    #allocation5 [shape = 's32[1]{0}', space=sflag, size = 0x4, scoped, tag = 'scoped memory for barlow_twins_forward.15']
    #allocation6 [shape = 'u8[32768]{0}', space=vmem, size = 0x8000, scoped, tag = 'input window, operand 1, single buffered']
    #allocation7 [shape = 's32[1]{0}', space=sflag, size = 0x4, scoped, tag = 'scoped memory for barlow_twins_forward.15']
    #allocation8 [shape = 'u8[512]{0}', space=vmem, size = 0x400, scoped, tag = 'input window, operand 2, single buffered']
    #allocation9 [shape = 'u8[8192]{0}', space=vmem, size = 0x2000, scoped, tag = 'input window, operand 3, single buffered']
    #allocation10 [shape = 's32[1]{0}', space=sflag, size = 0x4, scoped, tag = 'scoped memory for barlow_twins_forward.15']
    #allocation11 [shape = 'u8[512]{0}', space=vmem, size = 0x400, scoped, tag = 'input window, operand 4, single buffered']
    #allocation12 [shape = 'u8[512]{0}', space=vmem, size = 0x400, scoped, tag = 'input window, operand 5, single buffered']
    #allocation13 [shape = 's32[1]{0}', space=sflag, size = 0x4, scoped, tag = 'scoped memory for barlow_twins_forward.15']
    #allocation14 [shape = 'u8[8192]{0}', space=vmem, size = 0x2000, scoped, tag = 'output window, operand 0, single buffered']
    %11 = vsyncpa [#allocation4], 0
    %12 = vsyncpa [#allocation7], 0
    %13 = vsyncpa [#allocation10], 0
    %14 = vsyncpa [#allocation13], 0
    %15 = vsyncpa [#allocation5], 0
    // Predicated region
    $region2: #{barlow_twins_forward.15} parent=1 // pred_check
      _
    $region3: #{barlow_twins_forward.15} parent=1 // pred_check_branch
      %17 = sbr.rel (0) target = $region5
    $region4: #{barlow_twins_forward.15} parent=1 // pred_region
      %s19 = ssub.s32 256, 256
      %20 = vsyncadd [#allocation4], %s19
      %s21 = sshll.u32 [#allocation3], 4
      %s22 = int_to_ptr.vmem [resolvable:$true] %s21
      %27 = dma.hbm_to_vmem [thread:$0]  %s0, 256, %s22, [#allocation4], 64, 64, 4
    $region5: #{barlow_twins_forward.15} parent=1 // pred_fallthru
      _
    // Predicated region
    $region6: #{barlow_twins_forward.15} parent=1 // pred_check
      _
    $region7: #{barlow_twins_forward.15} parent=1 // pred_check_branch
      %29 = sbr.rel (0) target = $region9
    $region8: #{barlow_twins_forward.15} parent=1 // pred_region
      %s31 = ssub.s32 1024, 1024
      %32 = vsyncadd [#allocation7], %s31
      %s33 = sshll.u32 [#allocation6], 4
      %s34 = int_to_ptr.vmem [resolvable:$true] %s33
      %39 = dma.hbm_to_vmem [thread:$0]  %s1, 1024, %s34, [#allocation7], 64, 64, 4
    $region9: #{barlow_twins_forward.15} parent=1 // pred_fallthru
      _
    // Predicated region
    $region10: #{barlow_twins_forward.15} parent=1 // pred_check
      _
    $region11: #{barlow_twins_forward.15} parent=1 // pred_check_branch
      %41 = sbr.rel (0) target = $region13
    $region12: #{barlow_twins_forward.15} parent=1 // pred_region
      %s43 = ssub.s32 16, 16
      %44 = vsyncadd [#allocation7], %s43
      %s46 = sshll.u32 [#allocation8], 4
      %s47 = int_to_ptr.vmem [resolvable:$true] %s46
      %49 = dma.hbm_to_vmem [thread:$0]  %s2, 16, %s47, [#allocation7]
    $region13: #{barlow_twins_forward.15} parent=1 // pred_fallthru
      _
    // Predicated region
    $region14: #{barlow_twins_forward.15} parent=1 // pred_check
      _
    $region15: #{barlow_twins_forward.15} parent=1 // pred_check_branch
      %51 = sbr.rel (0) target = $region17
    $region16: #{barlow_twins_forward.15} parent=1 // pred_region
      %s53 = ssub.s32 256, 256
      %54 = vsyncadd [#allocation10], %s53
      %s55 = sshll.u32 [#allocation9], 4
      %s56 = int_to_ptr.vmem [resolvable:$true] %s55
      %61 = dma.hbm_to_vmem [thread:$0]  %s3, 256, %s56, [#allocation10], 64, 64, 4
    $region17: #{barlow_twins_forward.15} parent=1 // pred_fallthru
      _
    // Predicated region
    $region18: #{barlow_twins_forward.15} parent=1 // pred_check
      _
    $region19: #{barlow_twins_forward.15} parent=1 // pred_check_branch
      %63 = sbr.rel (0) target = $region21
    $region20: #{barlow_twins_forward.15} parent=1 // pred_region
      %s65 = ssub.s32 16, 16
      %66 = vsyncadd [#allocation10], %s65
      %s68 = sshll.u32 [#allocation11], 4
      %s69 = int_to_ptr.vmem [resolvable:$true] %s68
      %71 = dma.hbm_to_vmem [thread:$0]  %s4, 16, %s69, [#allocation10]
    $region21: #{barlow_twins_forward.15} parent=1 // pred_fallthru
      _
    // Predicated region
    $region22: #{barlow_twins_forward.15} parent=1 // pred_check
      _
    $region23: #{barlow_twins_forward.15} parent=1 // pred_check_branch
      %73 = sbr.rel (0) target = $region25
    $region24: #{barlow_twins_forward.15} parent=1 // pred_region
      %s75 = ssub.s32 16, 16
      %76 = vsyncadd [#allocation13], %s75
      %s78 = sshll.u32 [#allocation12], 4
      %s79 = int_to_ptr.vmem [resolvable:$true] %s78
      %81 = dma.hbm_to_vmem [thread:$0]  %s5, 16, %s79, [#allocation13]
    $region25: #{barlow_twins_forward.15} parent=1 // pred_fallthru
      _
    // Predicated region
    $region26: #{barlow_twins_forward.15} parent=1 // pred_check
      _
    $region27: #{barlow_twins_forward.15} parent=1 // pred_check_branch
      %83 = sbr.rel (0) target = $region29
    $region28: #{barlow_twins_forward.15} parent=1 // pred_region
      %84 = dma.done [#allocation4], 256
    $region29: #{barlow_twins_forward.15} parent=1 // pred_fallthru
      _
    // Predicated region
    $region30: #{barlow_twins_forward.15} parent=1 // pred_check
      _
    $region31: #{barlow_twins_forward.15} parent=1 // pred_check_branch
      %86 = sbr.rel (0) target = $region33
    $region32: #{barlow_twins_forward.15} parent=1 // pred_region
      %87 = dma.done [#allocation7], 1024
    $region33: #{barlow_twins_forward.15} parent=1 // pred_fallthru
      _
    // Predicated region
    $region34: #{barlow_twins_forward.15} parent=1 // pred_check
      _
    $region35: #{barlow_twins_forward.15} parent=1 // pred_check_branch
      %89 = sbr.rel (0) target = $region37
    $region36: #{barlow_twins_forward.15} parent=1 // pred_region
      %90 = dma.done [#allocation7], 16
    $region37: #{barlow_twins_forward.15} parent=1 // pred_fallthru
      _
    // Predicated region
    $region38: #{barlow_twins_forward.15} parent=1 // pred_check
      _
    $region39: #{barlow_twins_forward.15} parent=1 // pred_check_branch
      %92 = sbr.rel (0) target = $region41
    $region40: #{barlow_twins_forward.15} parent=1 // pred_region
      %93 = dma.done [#allocation10], 256
    $region41: #{barlow_twins_forward.15} parent=1 // pred_fallthru
      _
    // Predicated region
    $region42: #{barlow_twins_forward.15} parent=1 // pred_check
      _
    $region43: #{barlow_twins_forward.15} parent=1 // pred_check_branch
      %95 = sbr.rel (0) target = $region45
    $region44: #{barlow_twins_forward.15} parent=1 // pred_region
      %96 = dma.done [#allocation10], 16
    $region45: #{barlow_twins_forward.15} parent=1 // pred_fallthru
      _
    // Predicated region
    $region46: #{barlow_twins_forward.15} parent=1 // pred_check
      _
    $region47: #{barlow_twins_forward.15} parent=1 // pred_check_branch
      %98 = sbr.rel (0) target = $region49
    $region48: #{barlow_twins_forward.15} parent=1 // pred_region
      %99 = dma.done [#allocation13], 16
    $region49: #{barlow_twins_forward.15} parent=1 // pred_fallthru
      _
    %p101 = scmp.eq.s32.totalorder 0, 0
    // Predicated region
    $region50: #{barlow_twins_forward.15} parent=1 // pred_check
      %p102 = pneg %p101
    $region51: #{barlow_twins_forward.15} parent=1 // pred_check_branch
      %104 = sbr.rel (%p102) target = $region53
    $region52: #{barlow_twins_forward.15} parent=1 // pred_region
      %105 = vst [vmem:[#allocation2] sm:$0xff] 0.0
      %106 = vst [vmem:[#allocation2 + $0x8] sm:$0xff] 0.0
      %107 = vst [vmem:[#allocation2 + $0x10] sm:$0xff] 0.0
      %108 = vst [vmem:[#allocation2 + $0x18] sm:$0xff] 0.0
    $region53: #{barlow_twins_forward.15} parent=1 // pred_fallthru
      _
    %v109 = vld [vmem:[#allocation2] sm:$0xff]
    %v110 = vld [vmem:[#allocation2 + $0x8] sm:$0xff]
    %v111 = vld [vmem:[#allocation2 + $0x10] sm:$0xff]
    %v112 = vld [vmem:[#allocation2 + $0x18] sm:$0xff]
    %v113 = vld [vmem:[#allocation3] sm:$0xf]
    %v114 = vld [vmem:[#allocation3 + $0x4] sm:$0xf]
    %v115 = vld [vmem:[#allocation3 + $0x8] sm:$0xf]
    %v116 = vld [vmem:[#allocation3 + $0xc] sm:$0xf]
    %v117 = vld [vmem:[#allocation6] sm:$0xf]
    %v118 = vld [vmem:[#allocation6 + $0x4] sm:$0xf]
    %v119 = vld [vmem:[#allocation6 + $0x8] sm:$0xf]
    %v120 = vld [vmem:[#allocation6 + $0xc] sm:$0xf]
    %v121 = vld [vmem:[#allocation6 + $0x10] sm:$0xf]
    %v122 = vld [vmem:[#allocation6 + $0x14] sm:$0xf]
    %v123 = vld [vmem:[#allocation6 + $0x18] sm:$0xf]
    %v124 = vld [vmem:[#allocation6 + $0x1c] sm:$0xf]
    %v125 = vld [vmem:[#allocation6 + $0x20] sm:$0xf]
    %v126 = vld [vmem:[#allocation6 + $0x24] sm:$0xf]
    %v127 = vld [vmem:[#allocation6 + $0x28] sm:$0xf]
    %v128 = vld [vmem:[#allocation6 + $0x2c] sm:$0xf]
    %v129 = vld [vmem:[#allocation6 + $0x30] sm:$0xf]
    %v130 = vld [vmem:[#allocation6 + $0x34] sm:$0xf]
    %v131 = vld [vmem:[#allocation6 + $0x38] sm:$0xf]
    %v132 = vld [vmem:[#allocation6 + $0x3c] sm:$0xf]
    %v137 = vunpack.c.l.b16 %v113
    %v138 = vunpack.c.l.b16 %v114
    %v139 = vunpack.c.l.b16 %v115
    %v140 = vunpack.c.l.b16 %v116
    %v141 = vpack.c.b16 %v138, %v137
    %v142 = vpack.c.b16 %v140, %v139
    %v161 = vunpack.c.l.b16 %v117
    %v162 = vunpack.c.l.b16 %v118
    %v163 = vunpack.c.l.b16 %v119
    %v164 = vunpack.c.l.b16 %v120
    %v165 = vunpack.c.l.b16 %v121
    %v166 = vunpack.c.l.b16 %v122
    %v167 = vunpack.c.l.b16 %v123
    %v168 = vunpack.c.l.b16 %v124
    %v169 = vunpack.c.l.b16 %v125
    %v170 = vunpack.c.l.b16 %v126
    %v171 = vunpack.c.l.b16 %v127
    %v172 = vunpack.c.l.b16 %v128
    %v173 = vunpack.c.l.b16 %v129
    %v174 = vunpack.c.l.b16 %v130
    %v175 = vunpack.c.l.b16 %v131
    %v176 = vunpack.c.l.b16 %v132
    %v177 = vpack.c.b16 %v162, %v161
    %v178 = vpack.c.b16 %v164, %v163
    %v179 = vpack.c.b16 %v166, %v165
    %v180 = vpack.c.b16 %v168, %v167
    %v181 = vpack.c.b16 %v170, %v169
    %v182 = vpack.c.b16 %v172, %v171
    %v183 = vpack.c.b16 %v174, %v173
    %v184 = vpack.c.b16 %v176, %v175
    %193 = vmatprep.subr.bf16.mxu0 0
    %194 = vmatpush1.bf16.msra.mxu0 %v177
    %195 = vmatprep.subr.bf16.mxu0 0
    %196 = vmatpush1.bf16.msra.mxu0 %v178
    %197 = vmatprep.subr.bf16.mxu0 0
    %198 = vmatpush1.bf16.msra.mxu0 %v179
    %199 = vmatprep.subr.bf16.mxu0 0
    %200 = vmatpush1.bf16.msra.mxu0 %v180
    %201 = vmatprep.subr.bf16.mxu0 0
    %202 = vmatpush1.bf16.msra.mxu0 %v181
    %203 = vmatprep.subr.bf16.mxu0 0
    %204 = vmatpush1.bf16.msra.mxu0 %v182
    %205 = vmatprep.subr.bf16.mxu0 0
    %206 = vmatpush1.bf16.msra.mxu0 %v183
    %207 = vmatprep.subr.bf16.mxu0 0
    %208 = vmatpush1.bf16.msra.mxu0 %v184
    %209 = vmatprep.subr.bf16.mxu0 0
    %210 = vmatpush1.bf16.msra.mxu0 0
    %211 = vmatprep.subr.bf16.mxu0 0
    %212 = vmatpush1.bf16.msra.mxu0 0
    %213 = vmatprep.subr.bf16.mxu0 0
    %214 = vmatpush1.bf16.msra.mxu0 0
    %215 = vmatprep.subr.bf16.mxu0 0
    %216 = vmatpush1.bf16.msra.mxu0 0
    %217 = vmatprep.subr.bf16.mxu0 0
    %218 = vmatpush1.bf16.msra.mxu0 0
    %219 = vmatprep.subr.bf16.mxu0 0
    %220 = vmatpush1.bf16.msra.mxu0 0
    %221 = vmatprep.subr.bf16.mxu0 0
    %222 = vmatpush1.bf16.msra.mxu0 0
    %223 = vmatprep.subr.bf16.mxu0 0
    %224 = vmatpush1.bf16.msra.mxu0 0
    %225 = vmatprep.mubr.bf16.mxu0 0
    %226 = vmatmul.mubr.bf16.gmra.mrb[0].mxu0 %v141
    %v227 = vpop.f32.mrb[0].mxu0
    %v228 = vadd.f32 0.0, %v227
    %v229 = vpop.f32.mrb[0].mxu0
    %v230 = vpop.f32.mrb[0].mxu0
    %v231 = vadd.f32 0.0, %v230
    %v232 = vpop.f32.mrb[0].mxu0
    %233 = vmatprep.mubr.bf16.mxu0 0
    %234 = vmatmul.mubr.bf16.gmra.mrb[0].mxu0 %v142
    %v235 = vpop.f32.mrb[0].mxu0
    %v236 = vadd.f32 0.0, %v235
    %v237 = vpop.f32.mrb[0].mxu0
    %v238 = vpop.f32.mrb[0].mxu0
    %v239 = vadd.f32 0.0, %v238
    %v240 = vpop.f32.mrb[0].mxu0
    %241 = vdwg.mxu0
    %v242 = vadd.f32 %v109, %v228
    %v243 = vadd.f32 %v110, %v231
    %v244 = vadd.f32 %v111, %v236
    %v245 = vadd.f32 %v112, %v239
    %246 = vst [vmem:[#allocation2] sm:$0xff] %v242
    %247 = vst [vmem:[#allocation2 + $0x8] sm:$0xff] %v243
    %248 = vst [vmem:[#allocation2 + $0x10] sm:$0xff] %v244
    %249 = vst [vmem:[#allocation2 + $0x18] sm:$0xff] %v245
    // Predicated region
    $region54: #{barlow_twins_forward.15} parent=1 // pred_check
      %p250 = pneg %p101
    $region55: #{barlow_twins_forward.15} parent=1 // pred_check_branch
      %252 = sbr.rel (%p250) target = $region57
    $region56: #{barlow_twins_forward.15} parent=1 // pred_region
      %v253 = vld [vmem:[#allocation2] sm:$0xff]
      %v254 = vld [vmem:[#allocation2 + $0x8] sm:$0xff]
      %v255 = vld [vmem:[#allocation2 + $0x10] sm:$0xff]
      %v256 = vld [vmem:[#allocation2 + $0x18] sm:$0xff]
      %v257 = vld [vmem:[#allocation8] sm:$0x1]
      %v259 = vlaneseq
      %v260 = vshrl.u32 %v259, 7
      %v261 = vsub.s32 0, %v260
      %v262 = vrot.slane %v257, %v261
      %v264 = vadd.f32 %v253, %v262
      %v265 = vadd.f32 %v254, %v262
      %v266 = vadd.f32 %v255, %v262
      %v267 = vadd.f32 %v256, %v262
      %v268 = vld [vmem:[#allocation9] sm:$0xf]
      %v269 = vld [vmem:[#allocation9 + $0x4] sm:$0xf]
      %v270 = vld [vmem:[#allocation9 + $0x8] sm:$0xf]
      %v271 = vld [vmem:[#allocation9 + $0xc] sm:$0xf]
      %v272 = vunpack.c.l.bf16 %v268
      %v273 = vunpack.c.l.bf16 %v269
      %v274 = vunpack.c.l.bf16 %v270
      %v275 = vunpack.c.l.bf16 %v271
      %v276 = vadd.f32 %v264, %v272
      %v277 = vadd.f32 %v265, %v273
      %v278 = vadd.f32 %v266, %v274
      %v279 = vadd.f32 %v267, %v275
      %280 = vadd.xlane.f32.xlu0 %v276
      %v281 = vpop.xlane.xlu0 %280
      %282 = vadd.xlane.f32.xlu0 %v277
      %v283 = vpop.xlane.xlu0 %282
      %284 = vadd.xlane.f32.xlu0 %v278
      %v285 = vpop.xlane.xlu0 %284
      %286 = vadd.xlane.f32.xlu0 %v279
      %v287 = vpop.xlane.xlu0 %286
      %v288 = vrcp.pop 128.0
      %v289 = vmul.f32 %v281, %v288
      %v290 = vmul.f32 %v283, %v288
      %v291 = vmul.f32 %v285, %v288
      %v292 = vmul.f32 %v287, %v288
      %v293 = vsub.f32 %v276, %v289
      %v294 = vsub.f32 %v277, %v290
      %v295 = vsub.f32 %v278, %v291
      %v296 = vsub.f32 %v279, %v292
      %v297 = vmul.f32 %v293, %v293
      %v298 = vmul.f32 %v294, %v294
      %v299 = vmul.f32 %v295, %v295
      %v300 = vmul.f32 %v296, %v296
      %301 = vadd.xlane.f32.xlu0 %v297
      %v302 = vpop.xlane.xlu0 %301
      %303 = vadd.xlane.f32.xlu0 %v298
      %v304 = vpop.xlane.xlu0 %303
      %305 = vadd.xlane.f32.xlu0 %v299
      %v306 = vpop.xlane.xlu0 %305
      %307 = vadd.xlane.f32.xlu0 %v300
      %v308 = vpop.xlane.xlu0 %307
      %v309 = vmul.f32 %v302, %v288
      %v310 = vmul.f32 %v304, %v288
      %v311 = vmul.f32 %v306, %v288
      %v312 = vmul.f32 %v308, %v288
      %v313 = vadd.f32 %v309, 1e-05
      %v314 = vadd.f32 %v310, 1e-05
      %v315 = vadd.f32 %v311, 1e-05
      %v316 = vadd.f32 %v312, 1e-05
      %v317 = vrsqrt.pop %v313
      %v318 = vrsqrt.pop %v314
      %v319 = vrsqrt.pop %v315
      %v320 = vrsqrt.pop %v316
      %v321 = vmul.f32 %v293, %v317
      %v322 = vmul.f32 %v294, %v318
      %v323 = vmul.f32 %v295, %v319
      %v324 = vmul.f32 %v296, %v320
      %v325 = vld [vmem:[#allocation11] sm:$0x1]
      %v327 = vlaneseq
      %v328 = vshrl.u32 %v327, 7
      %v329 = vsub.s32 0, %v328
      %v330 = vrot.slane %v325, %v329
      %v332 = vmul.f32 %v321, %v330
      %v333 = vmul.f32 %v322, %v330
      %v334 = vmul.f32 %v323, %v330
      %v335 = vmul.f32 %v324, %v330
      %v336 = vld [vmem:[#allocation12] sm:$0x1]
      %v338 = vlaneseq
      %v339 = vshrl.u32 %v338, 7
      %v340 = vsub.s32 0, %v339
      %v341 = vrot.slane %v336, %v340
      %v343 = vadd.f32 %v332, %v341
      %v344 = vadd.f32 %v333, %v341
      %v345 = vadd.f32 %v334, %v341
      %v346 = vadd.f32 %v335, %v341
      %v347 = vpack.c.bf16 %v344, %v343
      %v348 = vpack.c.bf16 %v346, %v345
      %v351 = vunpack.c.l.b16 %v347
      %v352 = vunpack.c.h.b16 %v347
      %v353 = vunpack.c.l.b16 %v348
      %v354 = vunpack.c.h.b16 %v348
      %v355 = vpack.c.b16 %v351, %v351
      %v356 = vpack.c.b16 %v352, %v352
      %v357 = vpack.c.b16 %v353, %v353
      %v358 = vpack.c.b16 %v354, %v354
      %363 = vst [vmem:[#allocation14] sm:$0xf] %v355
      %364 = vst [vmem:[#allocation14 + $0x4] sm:$0xf] %v356
      %365 = vst [vmem:[#allocation14 + $0x8] sm:$0xf] %v357
      %366 = vst [vmem:[#allocation14 + $0xc] sm:$0xf] %v358
    $region57: #{barlow_twins_forward.15} parent=1 // pred_fallthru
      _
    // Predicated region
    $region58: #{barlow_twins_forward.15} parent=1 // pred_check
      _
    $region59: #{barlow_twins_forward.15} parent=1 // pred_check_branch
      %368 = sbr.rel (0) target = $region61
    $region60: #{barlow_twins_forward.15} parent=1 // pred_region
      %s370 = ssub.s32 256, 256
      %371 = vsyncadd [#allocation5], %s370
      %s372 = sshll.u32 [#allocation14], 4
      %s373 = int_to_ptr.vmem [resolvable:$true] %s372
      %378 = dma.vmem_to_hbm [thread:$0]  %s373, 256, %s6, [#allocation5], 64, 64, 4
    $region61: #{barlow_twins_forward.15} parent=1 // pred_fallthru
      _
    // Predicated region
    $region62: #{barlow_twins_forward.15} parent=1 // pred_check
      _
    $region63: #{barlow_twins_forward.15} parent=1 // pred_check_branch
      %380 = sbr.rel (0) target = $region65
    $region64: #{barlow_twins_forward.15} parent=1 // pred_region
      %381 = dma.done [#allocation5], 256
    $region65: #{barlow_twins_forward.15} parent=1 // pred_fallthru
      _
    %382 = vsyncpa [#allocation4], 1
    %383 = vsyncpa [#allocation7], 1
    %384 = vsyncpa [#allocation10], 1
    %385 = vsyncpa [#allocation13], 1
    %386 = vsyncpa [#allocation5], 1

// kernel: barlow_twins_forward.13
$region0: #{barlow_twins_forward.13}
  #allocation0 [shape = 'u32[]', space=smem, size = 0x4, offset = 0x4, fixed_abs, tag = 'smem constant byte address 0x4 - core index']
  #allocation1 [shape = 'u32[144,128]{1,0:T(1,128)}', space=vmem, size = 0x12000, scoped, tag = 'internal scratch']
  #allocation2 [shape = 'f32[32,128]{1,0:T(8,128)}', space=vmem, size = 0x4000, scoped, tag = 'scratch operand']
  %s0 = inlined_call_operand.hbm [shape: bf16[32,128], index: 0, kind: input, shape index: {}]
  %s1 = inlined_call_operand.hbm [shape: bf16[128,384], index: 1, kind: input, shape index: {}]
  %s2 = inlined_call_operand.hbm [shape: f32[1,384], index: 2, kind: input, shape index: {}]
  %s3 = inlined_call_operand.hbm [shape: bf16[32,384], index: 3, kind: output, shape index: {}]
  %s4 = sld [smem:[#allocation0]]
  $region65: #{barlow_twins_forward.13} parent=0
    _
  %s6 = ssub.s32 1, %s4
  %s7 = scalar_select 0, %s6, %s4
  $region1: #{barlow_twins_forward.13} parent=0
    #allocation3 [shape = 'u8[8192]{0}', space=vmem, size = 0x2000, scoped, tag = 'input window, operand 0, single buffered']
    #allocation4 [shape = 's32[2]{0}', space=sflag, size = 0x8, scoped, tag = 'scoped memory for barlow_twins_forward.13']
    #allocation5 [shape = 's32[2]{0}', space=sflag, size = 0x8, scoped, tag = 'scoped memory for barlow_twins_forward.13']
    #allocation6 [shape = 'u8[65536]{0}', space=vmem, size = 0x10000, scoped, tag = 'input window, operand 1']
    #allocation7 [shape = 's32[2]{0}', space=sflag, size = 0x8, scoped, tag = 'scoped memory for barlow_twins_forward.13']
    #allocation8 [shape = 'u8[1024]{0}', space=vmem, size = 0x400, scoped, tag = 'input window, operand 2']
    #allocation9 [shape = 'u8[16384]{0}', space=vmem, size = 0x4000, scoped, tag = 'output window, operand 0']
    %8 = vsyncpa [#allocation4], 0
    %9 = vsyncpa [#allocation7], 0
    %s10 = scalar_lea.sflag [#allocation7], 1
    %11 = vsyncpa %s10, 0
    %12 = vsyncpa [#allocation5], 0
    %s13 = scalar_lea.sflag [#allocation5], 1
    %14 = vsyncpa %s13, 0
    loop: start=0, step=1, limit=5
    $region2: #{barlow_twins_forward.13} parent=1 // loop_pre_header
      _
    $region3: #{barlow_twins_forward.13} parent=1 // loop_header
      %s16 = sphi 0, %s20
      %p17 = scmp.ge.s32.totalorder %s16, 5
      %s23 = sphi 0, %s42
      %s24 = sphi 0, %s38
      %s25 = sphi 0, %s34
      %s26 = sphi 0, %s23
      %s27 = sphi 0, %s24
      %s28 = sphi 0, %s25
      %s29 = sphi 0, %s26
      %s30 = sphi 0, %s27
      %s31 = sphi 0, %s28
      %s47 = sphi 0, %s49
      %s50 = sphi 0, %s47
      %s51 = sphi 0, %s50
      %s67 = sphi 0, %s51
      %s75 = sphi 0, %s77
      %s78 = sphi 0, %s75
      %s79 = sphi 0, %s78
      %s95 = sphi 0, %s79
      %s101 = sphi 0, %s103
      %s104 = sphi 0, %s101
      %s105 = sphi 0, %s104
      %s121 = sphi 0, %s105
      %s129 = sphi 0, %s131
      %s132 = sphi 0, %s129
      %s133 = sphi 0, %s132
      %s149 = sphi 0, %s133
    $region4: #{barlow_twins_forward.13} parent=1 // loop_header_branch
      %19 = sbr.rel (%p17) target = $region8
    $region5: #{barlow_twins_forward.13} parent=1 // loop_body
      %s21 = ssub.s32 %s16, 1
      %s22 = ssub.s32 %s16, 2
      %s32 = sadd.s32 1, %s25
      %p33 = scmp.ge.s32.totalorder %s32, 1
      %s34 = scalar_select %p33, 0, %s32
      %s35 = sadd.s32 1, %s24
      %s36 = scalar_select %p33, %s35, %s24
      %p37 = scmp.ge.s32.totalorder %s36, 3
      %s38 = scalar_select %p37, 0, %s36
      %s39 = sadd.s32 1, %s23
      %s40 = scalar_select %p37, %s39, %s23
      %p41 = scmp.ge.s32.totalorder %s40, 1
      %s42 = scalar_select %p41, 0, %s40
      %s43 = ssub.s32 %s23, %s42
      %s44 = ssub.s32 %s25, %s34
      %s45 = sor.u32 %s43, %s44
      %p46 = scmp.eq.s32.totalorder %s45, 0
      %s48 = sadd.s32 %s47, 1
      %s49 = scalar_select %p46, %s47, %s48
      %p52 = pneg %p46
      %p53 = scmp.eq.s32.totalorder %s16, 2
      %p54 = por %p52, %p53
      %p55 = scmp.ne.s32.totalorder %s47, %s50
      %p56 = scmp.eq.s32.totalorder %s16, 0
      %p57 = por %p55, %p56
      %p58 = scmp.ne.s32.totalorder %s47, %s50
      %p59 = scmp.eq.s32.totalorder %s21, 2
      %p60 = por %p58, %p59
      %p61 = scmp.ne.s32.totalorder %s50, %s51
      %p62 = scmp.eq.s32.totalorder %s21, 0
      %p63 = por %p61, %p62
      %p64 = scmp.ne.s32.totalorder %s50, %s51
      %p65 = scmp.eq.s32.totalorder %s22, 2
      %p66 = por %p64, %p65
      %p68 = scmp.ne.s32.totalorder %s51, %s67
      %p69 = scmp.eq.s32.totalorder %s22, 0
      %p70 = por %p68, %p69
      %s71 = ssub.s32 %s25, %s34
      %s72 = ssub.s32 %s24, %s38
      %s73 = sor.u32 %s71, %s72
      %p74 = scmp.eq.s32.totalorder %s73, 0
      %s76 = sadd.s32 %s75, 1
      %s77 = scalar_select %p74, %s75, %s76
      %p80 = pneg %p74
      %p81 = scmp.eq.s32.totalorder %s16, 2
      %p82 = por %p80, %p81
      %p83 = scmp.ne.s32.totalorder %s75, %s78
      %p84 = scmp.eq.s32.totalorder %s16, 0
      %p85 = por %p83, %p84
      %p86 = scmp.ne.s32.totalorder %s75, %s78
      %p87 = scmp.eq.s32.totalorder %s21, 2
      %p88 = por %p86, %p87
      %p89 = scmp.ne.s32.totalorder %s78, %s79
      %p90 = scmp.eq.s32.totalorder %s21, 0
      %p91 = por %p89, %p90
      %p92 = scmp.ne.s32.totalorder %s78, %s79
      %p93 = scmp.eq.s32.totalorder %s22, 2
      %p94 = por %p92, %p93
      %p96 = scmp.ne.s32.totalorder %s79, %s95
      %p97 = scmp.eq.s32.totalorder %s22, 0
      %p98 = por %p96, %p97
      %s99 = ssub.s32 %s24, %s38
      %p100 = scmp.eq.s32.totalorder %s99, 0
      %s102 = sadd.s32 %s101, 1
      %s103 = scalar_select %p100, %s101, %s102
      %p106 = pneg %p100
      %p107 = scmp.eq.s32.totalorder %s16, 2
      %p108 = por %p106, %p107
      %p109 = scmp.ne.s32.totalorder %s101, %s104
      %p110 = scmp.eq.s32.totalorder %s16, 0
      %p111 = por %p109, %p110
      %p112 = scmp.ne.s32.totalorder %s101, %s104
      %p113 = scmp.eq.s32.totalorder %s21, 2
      %p114 = por %p112, %p113
      %p115 = scmp.ne.s32.totalorder %s104, %s105
      %p116 = scmp.eq.s32.totalorder %s21, 0
      %p117 = por %p115, %p116
      %p118 = scmp.ne.s32.totalorder %s104, %s105
      %p119 = scmp.eq.s32.totalorder %s22, 2
      %p120 = por %p118, %p119
      %p122 = scmp.ne.s32.totalorder %s105, %s121
      %p123 = scmp.eq.s32.totalorder %s22, 0
      %p124 = por %p122, %p123
      %s125 = ssub.s32 %s23, %s42
      %s126 = ssub.s32 %s24, %s38
      %s127 = sor.u32 %s125, %s126
      %p128 = scmp.eq.s32.totalorder %s127, 0
      %s130 = sadd.s32 %s129, 1
      %s131 = scalar_select %p128, %s129, %s130
      %p134 = pneg %p128
      %p135 = scmp.eq.s32.totalorder %s16, 2
      %p136 = por %p134, %p135
      %p137 = scmp.ne.s32.totalorder %s129, %s132
      %p138 = scmp.eq.s32.totalorder %s16, 0
      %p139 = por %p137, %p138
      %p140 = scmp.ne.s32.totalorder %s129, %s132
      %p141 = scmp.eq.s32.totalorder %s21, 2
      %p142 = por %p140, %p141
      %p143 = scmp.ne.s32.totalorder %s132, %s133
      %p144 = scmp.eq.s32.totalorder %s21, 0
      %p145 = por %p143, %p144
      %p146 = scmp.ne.s32.totalorder %s132, %s133
      %p147 = scmp.eq.s32.totalorder %s22, 2
      %p148 = por %p146, %p147
      %p150 = scmp.ne.s32.totalorder %s133, %s149
      %p151 = scmp.eq.s32.totalorder %s22, 0
      %p152 = por %p150, %p151
      %p153 = scmp.le.s32.totalorder 1, %s16
      %p154 = scmp.lt.s32.totalorder %s16, 4
      %p155 = pnand %p153, %p154
      %p156 = pneg %p155
      // Predicated region
      $region9: #{barlow_twins_forward.13} parent=5 // pred_check
        _
      $region10: #{barlow_twins_forward.13} parent=5 // pred_check_branch
        %158 = sbr.rel (%p155) target = $region12
      $region11: #{barlow_twins_forward.13} parent=5 // pred_region
        %s159 = ssub.s32 %s16, 1
        // Predicated region
        $region13: #{barlow_twins_forward.13} parent=11 // pred_check
          %p160 = pneg %p63
        $region14: #{barlow_twins_forward.13} parent=11 // pred_check_branch
          %162 = sbr.rel (%p160) target = $region16
        $region15: #{barlow_twins_forward.13} parent=11 // pred_region
          %s163 = smul.u32 4, %s26
          %s165 = ssub.s32 256, 256
          %166 = vsyncadd [#allocation4], %s165
          %s167 = sadd.s32 %s28, %s163
          %s168 = smul.addr %s167, 64
          %s169 = scalar_lea.hbm %s0, %s168
          %s170 = sshll.u32 [#allocation3], 4
          %s171 = int_to_ptr.vmem [resolvable:$true] %s170
          %176 = dma.hbm_to_vmem [thread:$0]  %s169, 256, %s171, [#allocation4], 64, 64, 4
        $region16: #{barlow_twins_forward.13} parent=11 // pred_fallthru
          _
      $region12: #{barlow_twins_forward.13} parent=5 // pred_fallthru
        _
      %p177 = scmp.lt.s32.totalorder %s16, 3
      // Predicated region
      $region17: #{barlow_twins_forward.13} parent=5 // pred_check
        %p178 = pneg %p177
      $region18: #{barlow_twins_forward.13} parent=5 // pred_check_branch
        %180 = sbr.rel (%p178) target = $region20
      $region19: #{barlow_twins_forward.13} parent=5 // pred_region
        // Predicated region
        $region21: #{barlow_twins_forward.13} parent=19 // pred_check
          %p181 = pneg %p85
        $region22: #{barlow_twins_forward.13} parent=19 // pred_check_branch
          %183 = sbr.rel (%p181) target = $region24
        $region23: #{barlow_twins_forward.13} parent=19 // pred_region
          %s184 = sand.u32 %s16, 1
          %s185 = scalar_lea.sflag [#allocation7], %s184
          %s186 = sand.u32 %s75, 1
          %s187 = smul.addr %s186, 64
          %s188 = scalar_lea.vmem [#allocation6], %s187
          %s189 = smul.u32 16, %s25
          %s191 = ssub.s32 1024, 1024
          %192 = vsyncadd %s185, %s191
          %s193 = smul.addr %s189, 3
          %s194 = sadd.s32 %s24, %s193
          %s195 = smul.addr %s194, 64
          %s196 = scalar_lea.hbm %s1, %s195
          %s197 = sshll.u32 %s188, 4
          %s198 = int_to_ptr.vmem [resolvable:$true] %s197
          %203 = dma.hbm_to_vmem [thread:$0]  %s196, 1024, %s198, %s185, 192, 64, 4
        $region24: #{barlow_twins_forward.13} parent=19 // pred_fallthru
          _
        // Predicated region
        $region25: #{barlow_twins_forward.13} parent=19 // pred_check
          %p204 = pneg %p111
        $region26: #{barlow_twins_forward.13} parent=19 // pred_check_branch
          %206 = sbr.rel (%p204) target = $region28
        $region27: #{barlow_twins_forward.13} parent=19 // pred_region
          %s207 = sand.u32 %s16, 1
          %s208 = scalar_lea.sflag [#allocation7], %s207
          %s209 = sand.u32 %s101, 1
          %s210 = scalar_lea.vmem [#allocation8], %s209
          %s212 = ssub.s32 16, 16
          %213 = vsyncadd %s208, %s212
          %s214 = smul.addr %s24, 16
          %s215 = scalar_lea.hbm %s2, %s214
          %s217 = sshll.u32 %s210, 4
          %s218 = int_to_ptr.vmem [resolvable:$true] %s217
          %220 = dma.hbm_to_vmem [thread:$0]  %s215, 16, %s218, %s208
        $region28: #{barlow_twins_forward.13} parent=19 // pred_fallthru
          _
      $region20: #{barlow_twins_forward.13} parent=5 // pred_fallthru
        _
      %p221 = scmp.le.s32.totalorder 1, %s16
      %p222 = scmp.lt.s32.totalorder %s16, 4
      %p223 = pnand %p221, %p222
      %p224 = pneg %p223
      // Predicated region
      $region29: #{barlow_twins_forward.13} parent=5 // pred_check
        _
      $region30: #{barlow_twins_forward.13} parent=5 // pred_check_branch
        %226 = sbr.rel (%p223) target = $region32
      $region31: #{barlow_twins_forward.13} parent=5 // pred_region
        %s227 = ssub.s32 %s16, 1
        // Predicated region
        $region33: #{barlow_twins_forward.13} parent=31 // pred_check
          %p228 = pneg %p63
        $region34: #{barlow_twins_forward.13} parent=31 // pred_check_branch
          %230 = sbr.rel (%p228) target = $region36
        $region35: #{barlow_twins_forward.13} parent=31 // pred_region
          %231 = dma.done [#allocation4], 256
        $region36: #{barlow_twins_forward.13} parent=31 // pred_fallthru
          _
        %s232 = sand.u32 %s21, 1
        %s233 = scalar_lea.sflag [#allocation7], %s232
        %s234 = sand.u32 %s78, 1
        %s235 = smul.addr %s234, 64
        %s236 = scalar_lea.vmem [#allocation6], %s235
        // Predicated region
        $region37: #{barlow_twins_forward.13} parent=31 // pred_check
          %p237 = pneg %p91
        $region38: #{barlow_twins_forward.13} parent=31 // pred_check_branch
          %239 = sbr.rel (%p237) target = $region40
        $region39: #{barlow_twins_forward.13} parent=31 // pred_region
          %240 = dma.done %s233, 1024
        $region40: #{barlow_twins_forward.13} parent=31 // pred_fallthru
          _
        %s241 = sand.u32 %s21, 1
        %s242 = scalar_lea.sflag [#allocation7], %s241
        %s243 = sand.u32 %s104, 1
        %s244 = scalar_lea.vmem [#allocation8], %s243
        // Predicated region
        $region41: #{barlow_twins_forward.13} parent=31 // pred_check
          %p245 = pneg %p117
        $region42: #{barlow_twins_forward.13} parent=31 // pred_check_branch
          %247 = sbr.rel (%p245) target = $region44
        $region43: #{barlow_twins_forward.13} parent=31 // pred_region
          %248 = dma.done %s242, 16
        $region44: #{barlow_twins_forward.13} parent=31 // pred_fallthru
          _
        %p249 = pneg %p63
        %p250 = pneg %p60
        %s251 = sand.u32 %s21, 1
        %s252 = scalar_lea.sflag [#allocation7], %s251
        %s253 = sand.u32 %s78, 1
        %s254 = smul.addr %s253, 64
        %s255 = scalar_lea.vmem [#allocation6], %s254
        %p256 = pneg %p91
        %p257 = pneg %p88
        %s258 = sand.u32 %s21, 1
        %s259 = scalar_lea.sflag [#allocation7], %s258
        %s260 = sand.u32 %s104, 1
        %s261 = scalar_lea.vmem [#allocation8], %s260
        %p262 = pneg %p117
        %p263 = pneg %p114
        %p264 = pneg %p145
        %p265 = pneg %p142
        %s266 = sand.u32 %s132, 1
        %s267 = scalar_lea.sflag [#allocation5], %s266
        %s268 = sand.u32 %s132, 1
        %s269 = smul.addr %s268, 16
        %s270 = scalar_lea.vmem [#allocation9], %s269
        %s271 = smul.u32 4, %s26
        %s272 = smul.u32 16, %s28
        %s273 = smul.u32 4, %s26
        %p275 = scmp.eq.s32.totalorder %s28, 0
        // Predicated region
        $region45: #{barlow_twins_forward.13} parent=31 // pred_check
          %p276 = pneg %p275
        $region46: #{barlow_twins_forward.13} parent=31 // pred_check_branch
          %278 = sbr.rel (%p276) target = $region48
        $region47: #{barlow_twins_forward.13} parent=31 // pred_region
          %279 = vst [vmem:[#allocation2] sm:$0xff] 0.0
          %280 = vst [vmem:[#allocation2 + $0x8] sm:$0xff] 0.0
          %281 = vst [vmem:[#allocation2 + $0x10] sm:$0xff] 0.0
          %282 = vst [vmem:[#allocation2 + $0x18] sm:$0xff] 0.0
        $region48: #{barlow_twins_forward.13} parent=31 // pred_fallthru
          _
        %v283 = vld [vmem:[#allocation2] sm:$0xff]
        %v284 = vld [vmem:[#allocation2 + $0x8] sm:$0xff]
        %v285 = vld [vmem:[#allocation2 + $0x10] sm:$0xff]
        %v286 = vld [vmem:[#allocation2 + $0x18] sm:$0xff]
        %v287 = vld [vmem:[#allocation3] sm:$0xf]
        %v288 = vld [vmem:[#allocation3 + $0x4] sm:$0xf]
        %v289 = vld [vmem:[#allocation3 + $0x8] sm:$0xf]
        %v290 = vld [vmem:[#allocation3 + $0xc] sm:$0xf]
        %v291 = vld [vmem:[%s236] sm:$0xf]
        %v292 = vld [vmem:[%s236 + $0x4] sm:$0xf]
        %v293 = vld [vmem:[%s236 + $0x8] sm:$0xf]
        %v294 = vld [vmem:[%s236 + $0xc] sm:$0xf]
        %v295 = vld [vmem:[%s236 + $0x10] sm:$0xf]
        %v296 = vld [vmem:[%s236 + $0x14] sm:$0xf]
        %v297 = vld [vmem:[%s236 + $0x18] sm:$0xf]
        %v298 = vld [vmem:[%s236 + $0x1c] sm:$0xf]
        %v299 = vld [vmem:[%s236 + $0x20] sm:$0xf]
        %v300 = vld [vmem:[%s236 + $0x24] sm:$0xf]
        %v301 = vld [vmem:[%s236 + $0x28] sm:$0xf]
        %v302 = vld [vmem:[%s236 + $0x2c] sm:$0xf]
        %v303 = vld [vmem:[%s236 + $0x30] sm:$0xf]
        %v304 = vld [vmem:[%s236 + $0x34] sm:$0xf]
        %v305 = vld [vmem:[%s236 + $0x38] sm:$0xf]
        %v306 = vld [vmem:[%s236 + $0x3c] sm:$0xf]
        %v311 = vunpack.c.l.b16 %v287
        %v312 = vunpack.c.l.b16 %v288
        %v313 = vunpack.c.l.b16 %v289
        %v314 = vunpack.c.l.b16 %v290
        %v315 = vpack.c.b16 %v312, %v311
        %v316 = vpack.c.b16 %v314, %v313
        %v335 = vunpack.c.l.b16 %v291
        %v336 = vunpack.c.l.b16 %v292
        %v337 = vunpack.c.l.b16 %v293
        %v338 = vunpack.c.l.b16 %v294
        %v339 = vunpack.c.l.b16 %v295
        %v340 = vunpack.c.l.b16 %v296
        %v341 = vunpack.c.l.b16 %v297
        %v342 = vunpack.c.l.b16 %v298
        %v343 = vunpack.c.l.b16 %v299
        %v344 = vunpack.c.l.b16 %v300
        %v345 = vunpack.c.l.b16 %v301
        %v346 = vunpack.c.l.b16 %v302
        %v347 = vunpack.c.l.b16 %v303
        %v348 = vunpack.c.l.b16 %v304
        %v349 = vunpack.c.l.b16 %v305
        %v350 = vunpack.c.l.b16 %v306
        %v351 = vpack.c.b16 %v336, %v335
        %v352 = vpack.c.b16 %v338, %v337
        %v353 = vpack.c.b16 %v340, %v339
        %v354 = vpack.c.b16 %v342, %v341
        %v355 = vpack.c.b16 %v344, %v343
        %v356 = vpack.c.b16 %v346, %v345
        %v357 = vpack.c.b16 %v348, %v347
        %v358 = vpack.c.b16 %v350, %v349
        %367 = vmatprep.subr.bf16.mxu0 0
        %368 = vmatpush1.bf16.msra.mxu0 %v351
        %369 = vmatprep.subr.bf16.mxu0 0
        %370 = vmatpush1.bf16.msra.mxu0 %v352
        %371 = vmatprep.subr.bf16.mxu0 0
        %372 = vmatpush1.bf16.msra.mxu0 %v353
        %373 = vmatprep.subr.bf16.mxu0 0
        %374 = vmatpush1.bf16.msra.mxu0 %v354
        %375 = vmatprep.subr.bf16.mxu0 0
        %376 = vmatpush1.bf16.msra.mxu0 %v355
        %377 = vmatprep.subr.bf16.mxu0 0
        %378 = vmatpush1.bf16.msra.mxu0 %v356
        %379 = vmatprep.subr.bf16.mxu0 0
        %380 = vmatpush1.bf16.msra.mxu0 %v357
        %381 = vmatprep.subr.bf16.mxu0 0
        %382 = vmatpush1.bf16.msra.mxu0 %v358
        %383 = vmatprep.subr.bf16.mxu0 0
        %384 = vmatpush1.bf16.msra.mxu0 0
        %385 = vmatprep.subr.bf16.mxu0 0
        %386 = vmatpush1.bf16.msra.mxu0 0
        %387 = vmatprep.subr.bf16.mxu0 0
        %388 = vmatpush1.bf16.msra.mxu0 0
        %389 = vmatprep.subr.bf16.mxu0 0
        %390 = vmatpush1.bf16.msra.mxu0 0
        %391 = vmatprep.subr.bf16.mxu0 0
        %392 = vmatpush1.bf16.msra.mxu0 0
        %393 = vmatprep.subr.bf16.mxu0 0
        %394 = vmatpush1.bf16.msra.mxu0 0
        %395 = vmatprep.subr.bf16.mxu0 0
        %396 = vmatpush1.bf16.msra.mxu0 0
        %397 = vmatprep.subr.bf16.mxu0 0
        %398 = vmatpush1.bf16.msra.mxu0 0
        %399 = vmatprep.mubr.bf16.mxu0 0
        %400 = vmatmul.mubr.bf16.gmra.mrb[0].mxu0 %v315
        %v401 = vpop.f32.mrb[0].mxu0
        %v402 = vadd.f32 0.0, %v401
        %v403 = vpop.f32.mrb[0].mxu0
        %v404 = vpop.f32.mrb[0].mxu0
        %v405 = vadd.f32 0.0, %v404
        %v406 = vpop.f32.mrb[0].mxu0
        %407 = vmatprep.mubr.bf16.mxu0 0
        %408 = vmatmul.mubr.bf16.gmra.mrb[0].mxu0 %v316
        %v409 = vpop.f32.mrb[0].mxu0
        %v410 = vadd.f32 0.0, %v409
        %v411 = vpop.f32.mrb[0].mxu0
        %v412 = vpop.f32.mrb[0].mxu0
        %v413 = vadd.f32 0.0, %v412
        %v414 = vpop.f32.mrb[0].mxu0
        %415 = vdwg.mxu0
        %v416 = vadd.f32 %v283, %v402
        %v417 = vadd.f32 %v284, %v405
        %v418 = vadd.f32 %v285, %v410
        %v419 = vadd.f32 %v286, %v413
        %420 = vst [vmem:[#allocation2] sm:$0xff] %v416
        %421 = vst [vmem:[#allocation2 + $0x8] sm:$0xff] %v417
        %422 = vst [vmem:[#allocation2 + $0x10] sm:$0xff] %v418
        %423 = vst [vmem:[#allocation2 + $0x18] sm:$0xff] %v419
        // Predicated region
        $region49: #{barlow_twins_forward.13} parent=31 // pred_check
          %p424 = pneg %p275
        $region50: #{barlow_twins_forward.13} parent=31 // pred_check_branch
          %426 = sbr.rel (%p424) target = $region52
        $region51: #{barlow_twins_forward.13} parent=31 // pred_region
          %v427 = vld [vmem:[#allocation2] sm:$0xff]
          %v428 = vld [vmem:[#allocation2 + $0x8] sm:$0xff]
          %v429 = vld [vmem:[#allocation2 + $0x10] sm:$0xff]
          %v430 = vld [vmem:[#allocation2 + $0x18] sm:$0xff]
          %v431 = vld [vmem:[%s244] sm:$0x1]
          %v433 = vlaneseq
          %v434 = vshrl.u32 %v433, 7
          %v435 = vsub.s32 0, %v434
          %v436 = vrot.slane %v431, %v435
          %v438 = vadd.f32 %v427, %v436
          %v439 = vadd.f32 %v428, %v436
          %v440 = vadd.f32 %v429, %v436
          %v441 = vadd.f32 %v430, %v436
          %v442 = vpack.c.bf16 %v439, %v438
          %v443 = vpack.c.bf16 %v441, %v440
          %v446 = vunpack.c.l.b16 %v442
          %v447 = vunpack.c.h.b16 %v442
          %v448 = vunpack.c.l.b16 %v443
          %v449 = vunpack.c.h.b16 %v443
          %v450 = vpack.c.b16 %v446, %v446
          %v451 = vpack.c.b16 %v447, %v447
          %v452 = vpack.c.b16 %v448, %v448
          %v453 = vpack.c.b16 %v449, %v449
          %458 = vst [vmem:[%s270] sm:$0xf] %v450
          %459 = vst [vmem:[%s270 + $0x4] sm:$0xf] %v451
          %460 = vst [vmem:[%s270 + $0x8] sm:$0xf] %v452
          %461 = vst [vmem:[%s270 + $0xc] sm:$0xf] %v453
        $region52: #{barlow_twins_forward.13} parent=31 // pred_fallthru
          _
        %s462 = sand.u32 %s132, 1
        %s463 = scalar_lea.sflag [#allocation5], %s462
        %s464 = sand.u32 %s132, 1
        %s465 = smul.addr %s464, 16
        %s466 = scalar_lea.vmem [#allocation9], %s465
        // Predicated region
        $region53: #{barlow_twins_forward.13} parent=31 // pred_check
          %p467 = pneg %p142
        $region54: #{barlow_twins_forward.13} parent=31 // pred_check_branch
          %469 = sbr.rel (%p467) target = $region56
        $region55: #{barlow_twins_forward.13} parent=31 // pred_region
          %s470 = smul.u32 4, %s26
          %s472 = ssub.s32 256, 256
          %473 = vsyncadd %s463, %s472
          %s474 = smul.addr %s470, 3
          %s475 = sadd.s32 %s27, %s474
          %s476 = smul.addr %s475, 64
          %s477 = scalar_lea.hbm %s3, %s476
          %s478 = sshll.u32 %s466, 4
          %s479 = int_to_ptr.vmem [resolvable:$true] %s478
          %484 = dma.vmem_to_hbm [thread:$0]  %s479, 256, %s477, %s463, 64, 192, 4
        $region56: #{barlow_twins_forward.13} parent=31 // pred_fallthru
          _
      $region32: #{barlow_twins_forward.13} parent=5 // pred_fallthru
        _
      %p485 = scmp.le.s32.totalorder 2, %s16
      // Predicated region
      $region57: #{barlow_twins_forward.13} parent=5 // pred_check
        %p486 = pneg %p485
      $region58: #{barlow_twins_forward.13} parent=5 // pred_check_branch
        %488 = sbr.rel (%p486) target = $region60
      $region59: #{barlow_twins_forward.13} parent=5 // pred_region
        %s489 = ssub.s32 %s16, 2
        // Predicated region
        $region61: #{barlow_twins_forward.13} parent=59 // pred_check
          %p490 = pneg %p148
        $region62: #{barlow_twins_forward.13} parent=59 // pred_check_branch
          %492 = sbr.rel (%p490) target = $region64
        $region63: #{barlow_twins_forward.13} parent=59 // pred_region
          %s493 = sand.u32 %s133, 1
          %s494 = scalar_lea.sflag [#allocation5], %s493
          %s495 = sand.u32 %s133, 1
          %s496 = smul.addr %s495, 16
          %s497 = scalar_lea.vmem [#allocation9], %s496
          %498 = dma.done %s494, 256
        $region64: #{barlow_twins_forward.13} parent=59 // pred_fallthru
          _
      $region60: #{barlow_twins_forward.13} parent=5 // pred_fallthru
        _
    $region6: #{barlow_twins_forward.13} parent=1 // loop_footer
      %s20 = sadd.s32 1, %s16
    $region7: #{barlow_twins_forward.13} parent=1 // loop_footer_branch
      %15 = sbr.rel target = $region3
    $region8: #{barlow_twins_forward.13} parent=1 // loop_exit
      _
    %499 = vsyncpa [#allocation4], 1
    %s500 = scalar_lea.sflag [#allocation4], 1
    %501 = vsyncpa %s500, 1
    %502 = vsyncpa [#allocation7], 1
    %s503 = scalar_lea.sflag [#allocation7], 1
    %504 = vsyncpa %s503, 1
    %505 = vsyncpa [#allocation5], 1
    %s506 = scalar_lea.sflag [#allocation5], 1
    %507 = vsyncpa %s506, 1

// kernel: barlow_twins_forward.12
$region0: #{barlow_twins_forward.12}
  #allocation0 [shape = 'u32[]', space=smem, size = 0x4, offset = 0x4, fixed_abs, tag = 'smem constant byte address 0x4 - core index']
  #allocation1 [shape = 'u32[144,128]{1,0:T(1,128)}', space=vmem, size = 0x12000, scoped, tag = 'internal scratch']
  %s0 = inlined_call_operand.hbm [shape: f32[32,128], index: 0, kind: input, shape index: {}]
  %s1 = inlined_call_operand.hbm [shape: f32[1,128], index: 1, kind: input, shape index: {}]
  %s2 = inlined_call_operand.hbm [shape: f32[1,128], index: 2, kind: input, shape index: {}]
  %s3 = inlined_call_operand.hbm [shape: bf16[32,128], index: 3, kind: output, shape index: {}]
  %s4 = sld [smem:[#allocation0]]
  $region34: #{barlow_twins_forward.12} parent=0
    _
  %s6 = ssub.s32 1, %s4
  %s7 = scalar_select 0, %s6, %s4
  $region1: #{barlow_twins_forward.12} parent=0
    #allocation2 [shape = 'u8[16384]{0}', space=vmem, size = 0x4000, scoped, tag = 'input window, operand 0, single buffered']
    #allocation3 [shape = 's32[1]{0}', space=sflag, size = 0x4, scoped, tag = 'scoped memory for barlow_twins_forward.12']
    #allocation4 [shape = 's32[1]{0}', space=sflag, size = 0x4, scoped, tag = 'scoped memory for barlow_twins_forward.12']
    #allocation5 [shape = 'u8[512]{0}', space=vmem, size = 0x400, scoped, tag = 'input window, operand 1, single buffered']
    #allocation6 [shape = 's32[1]{0}', space=sflag, size = 0x4, scoped, tag = 'scoped memory for barlow_twins_forward.12']
    #allocation7 [shape = 'u8[512]{0}', space=vmem, size = 0x400, scoped, tag = 'input window, operand 2, single buffered']
    #allocation8 [shape = 'u8[8192]{0}', space=vmem, size = 0x2000, scoped, tag = 'output window, operand 0, single buffered']
    %8 = vsyncpa [#allocation3], 0
    %9 = vsyncpa [#allocation6], 0
    %10 = vsyncpa [#allocation4], 0
    // Predicated region
    $region2: #{barlow_twins_forward.12} parent=1 // pred_check
      _
    $region3: #{barlow_twins_forward.12} parent=1 // pred_check_branch
      %12 = sbr.rel (0) target = $region5
    $region4: #{barlow_twins_forward.12} parent=1 // pred_region
      %s14 = ssub.s32 512, 512
      %15 = vsyncadd [#allocation3], %s14
      %s16 = sshll.u32 [#allocation2], 4
      %s17 = int_to_ptr.vmem [resolvable:$true] %s16
      %22 = dma.hbm_to_vmem [thread:$0]  %s0, 512, %s17, [#allocation3], 128, 128, 8
    $region5: #{barlow_twins_forward.12} parent=1 // pred_fallthru
      _
    // Predicated region
    $region6: #{barlow_twins_forward.12} parent=1 // pred_check
      _
    $region7: #{barlow_twins_forward.12} parent=1 // pred_check_branch
      %24 = sbr.rel (0) target = $region9
    $region8: #{barlow_twins_forward.12} parent=1 // pred_region
      %s26 = ssub.s32 16, 16
      %27 = vsyncadd [#allocation6], %s26
      %s29 = sshll.u32 [#allocation5], 4
      %s30 = int_to_ptr.vmem [resolvable:$true] %s29
      %32 = dma.hbm_to_vmem [thread:$0]  %s1, 16, %s30, [#allocation6]
    $region9: #{barlow_twins_forward.12} parent=1 // pred_fallthru
      _
    // Predicated region
    $region10: #{barlow_twins_forward.12} parent=1 // pred_check
      _
    $region11: #{barlow_twins_forward.12} parent=1 // pred_check_branch
      %34 = sbr.rel (0) target = $region13
    $region12: #{barlow_twins_forward.12} parent=1 // pred_region
      %s36 = ssub.s32 16, 16
      %37 = vsyncadd [#allocation6], %s36
      %s39 = sshll.u32 [#allocation7], 4
      %s40 = int_to_ptr.vmem [resolvable:$true] %s39
      %42 = dma.hbm_to_vmem [thread:$0]  %s2, 16, %s40, [#allocation6]
    $region13: #{barlow_twins_forward.12} parent=1 // pred_fallthru
      _
    // Predicated region
    $region14: #{barlow_twins_forward.12} parent=1 // pred_check
      _
    $region15: #{barlow_twins_forward.12} parent=1 // pred_check_branch
      %44 = sbr.rel (0) target = $region17
    $region16: #{barlow_twins_forward.12} parent=1 // pred_region
      %45 = dma.done [#allocation3], 512
    $region17: #{barlow_twins_forward.12} parent=1 // pred_fallthru
      _
    // Predicated region
    $region18: #{barlow_twins_forward.12} parent=1 // pred_check
      _
    $region19: #{barlow_twins_forward.12} parent=1 // pred_check_branch
      %47 = sbr.rel (0) target = $region21
    $region20: #{barlow_twins_forward.12} parent=1 // pred_region
      %48 = dma.done [#allocation6], 16
    $region21: #{barlow_twins_forward.12} parent=1 // pred_fallthru
      _
    // Predicated region
    $region22: #{barlow_twins_forward.12} parent=1 // pred_check
      _
    $region23: #{barlow_twins_forward.12} parent=1 // pred_check_branch
      %50 = sbr.rel (0) target = $region25
    $region24: #{barlow_twins_forward.12} parent=1 // pred_region
      %51 = dma.done [#allocation6], 16
    $region25: #{barlow_twins_forward.12} parent=1 // pred_fallthru
      _
    %v52 = vld [vmem:[#allocation2] sm:$0xff]
    %v53 = vld [vmem:[#allocation2 + $0x8] sm:$0xff]
    %v54 = vld [vmem:[#allocation2 + $0x10] sm:$0xff]
    %v55 = vld [vmem:[#allocation2 + $0x18] sm:$0xff]
    %56 = vadd.xlane.f32.xlu0 %v52
    %v57 = vpop.xlane.xlu0 %56
    %58 = vadd.xlane.f32.xlu0 %v53
    %v59 = vpop.xlane.xlu0 %58
    %60 = vadd.xlane.f32.xlu0 %v54
    %v61 = vpop.xlane.xlu0 %60
    %62 = vadd.xlane.f32.xlu0 %v55
    %v63 = vpop.xlane.xlu0 %62
    %v64 = vrcp.pop 128.0
    %v65 = vmul.f32 %v57, %v64
    %v66 = vmul.f32 %v59, %v64
    %v67 = vmul.f32 %v61, %v64
    %v68 = vmul.f32 %v63, %v64
    %v69 = vsub.f32 %v52, %v65
    %v70 = vsub.f32 %v53, %v66
    %v71 = vsub.f32 %v54, %v67
    %v72 = vsub.f32 %v55, %v68
    %v73 = vmul.f32 %v69, %v69
    %v74 = vmul.f32 %v70, %v70
    %v75 = vmul.f32 %v71, %v71
    %v76 = vmul.f32 %v72, %v72
    %77 = vadd.xlane.f32.xlu0 %v73
    %v78 = vpop.xlane.xlu0 %77
    %79 = vadd.xlane.f32.xlu0 %v74
    %v80 = vpop.xlane.xlu0 %79
    %81 = vadd.xlane.f32.xlu0 %v75
    %v82 = vpop.xlane.xlu0 %81
    %83 = vadd.xlane.f32.xlu0 %v76
    %v84 = vpop.xlane.xlu0 %83
    %v85 = vmul.f32 %v78, %v64
    %v86 = vmul.f32 %v80, %v64
    %v87 = vmul.f32 %v82, %v64
    %v88 = vmul.f32 %v84, %v64
    %v89 = vadd.f32 %v85, 1e-05
    %v90 = vadd.f32 %v86, 1e-05
    %v91 = vadd.f32 %v87, 1e-05
    %v92 = vadd.f32 %v88, 1e-05
    %v93 = vrsqrt.pop %v89
    %v94 = vrsqrt.pop %v90
    %v95 = vrsqrt.pop %v91
    %v96 = vrsqrt.pop %v92
    %v97 = vmul.f32 %v69, %v93
    %v98 = vmul.f32 %v70, %v94
    %v99 = vmul.f32 %v71, %v95
    %v100 = vmul.f32 %v72, %v96
    %v101 = vld [vmem:[#allocation5] sm:$0x1]
    %v103 = vlaneseq
    %v104 = vshrl.u32 %v103, 7
    %v105 = vsub.s32 0, %v104
    %v106 = vrot.slane %v101, %v105
    %v108 = vmul.f32 %v97, %v106
    %v109 = vmul.f32 %v98, %v106
    %v110 = vmul.f32 %v99, %v106
    %v111 = vmul.f32 %v100, %v106
    %v112 = vld [vmem:[#allocation7] sm:$0x1]
    %v114 = vlaneseq
    %v115 = vshrl.u32 %v114, 7
    %v116 = vsub.s32 0, %v115
    %v117 = vrot.slane %v112, %v116
    %v119 = vadd.f32 %v108, %v117
    %v120 = vadd.f32 %v109, %v117
    %v121 = vadd.f32 %v110, %v117
    %v122 = vadd.f32 %v111, %v117
    %v123 = vpack.c.bf16 %v120, %v119
    %v124 = vpack.c.bf16 %v122, %v121
    %v127 = vunpack.c.l.b16 %v123
    %v128 = vunpack.c.h.b16 %v123
    %v129 = vunpack.c.l.b16 %v124
    %v130 = vunpack.c.h.b16 %v124
    %v131 = vpack.c.b16 %v127, %v127
    %v132 = vpack.c.b16 %v128, %v128
    %v133 = vpack.c.b16 %v129, %v129
    %v134 = vpack.c.b16 %v130, %v130
    %139 = vst [vmem:[#allocation8] sm:$0xf] %v131
    %140 = vst [vmem:[#allocation8 + $0x4] sm:$0xf] %v132
    %141 = vst [vmem:[#allocation8 + $0x8] sm:$0xf] %v133
    %142 = vst [vmem:[#allocation8 + $0xc] sm:$0xf] %v134
    // Predicated region
    $region26: #{barlow_twins_forward.12} parent=1 // pred_check
      _
    $region27: #{barlow_twins_forward.12} parent=1 // pred_check_branch
      %144 = sbr.rel (0) target = $region29
    $region28: #{barlow_twins_forward.12} parent=1 // pred_region
      %s146 = ssub.s32 256, 256
      %147 = vsyncadd [#allocation4], %s146
      %s148 = sshll.u32 [#allocation8], 4
      %s149 = int_to_ptr.vmem [resolvable:$true] %s148
      %154 = dma.vmem_to_hbm [thread:$0]  %s149, 256, %s3, [#allocation4], 64, 64, 4
    $region29: #{barlow_twins_forward.12} parent=1 // pred_fallthru
      _
    // Predicated region
    $region30: #{barlow_twins_forward.12} parent=1 // pred_check
      _
    $region31: #{barlow_twins_forward.12} parent=1 // pred_check_branch
      %156 = sbr.rel (0) target = $region33
    $region32: #{barlow_twins_forward.12} parent=1 // pred_region
      %157 = dma.done [#allocation4], 256
    $region33: #{barlow_twins_forward.12} parent=1 // pred_fallthru
      _
    %158 = vsyncpa [#allocation3], 1
    %159 = vsyncpa [#allocation6], 1
    %160 = vsyncpa [#allocation4], 1

// kernel: barlow_twins_forward.14
$region0: #{barlow_twins_forward.14}
  #allocation0 [shape = 'u32[]', space=smem, size = 0x4, offset = 0x4, fixed_abs, tag = 'smem constant byte address 0x4 - core index']
  #allocation1 [shape = 'u32[144,128]{1,0:T(1,128)}', space=vmem, size = 0x12000, scoped, tag = 'internal scratch']
  #allocation2 [shape = 'f32[4,8,1]{2,1,0:T(8,128)}', space=vmem, size = 0x4000, scoped, tag = 'scratch operand']
  #allocation3 [shape = 'f32[4,8,1]{2,1,0:T(8,128)}', space=vmem, size = 0x4000, scoped, tag = 'scratch operand']
  #allocation4 [shape = 'f32[4,8,32]{2,1,0:T(8,128)}', space=vmem, size = 0x4000, scoped, tag = 'scratch operand']
  %s0 = inlined_call_operand.hbm [shape: bf16[4,8,384], index: 0, kind: input, shape index: {}, may-alias: {0,1,2}]
  %s1 = inlined_call_operand.hbm [shape: bf16[4,8,384], index: 1, kind: input, shape index: {}, may-alias: {0,1,2}]
  %s2 = inlined_call_operand.hbm [shape: bf16[4,8,384], index: 2, kind: input, shape index: {}, may-alias: {0,1,2}]
  %s3 = inlined_call_operand.hbm [shape: f32[4,1,8], index: 3, kind: input, shape index: {}]
  %s4 = inlined_call_operand.hbm [shape: bf16[4,8,128], index: 4, kind: output, shape index: {}]
  %s5 = sld [smem:[#allocation0]]
  $region73: #{barlow_twins_forward.14} parent=0
    _
  %s7 = ssub.s32 1, %s5
  %s8 = scalar_select 0, %s7, %s5
  $region1: #{barlow_twins_forward.14} parent=0
    #allocation5 [shape = 'u8[4096]{0}', space=vmem, size = 0x1000, scoped, tag = 'input window, operand 0']
    #allocation6 [shape = 's32[2]{0}', space=sflag, size = 0x8, scoped, tag = 'scoped memory for barlow_twins_forward.14']
    #allocation7 [shape = 's32[2]{0}', space=sflag, size = 0x8, scoped, tag = 'scoped memory for barlow_twins_forward.14']
    #allocation8 [shape = 'u8[4096]{0}', space=vmem, size = 0x1000, scoped, tag = 'input window, operand 1']
    #allocation9 [shape = 's32[2]{0}', space=sflag, size = 0x8, scoped, tag = 'scoped memory for barlow_twins_forward.14']
    #allocation10 [shape = 'u8[4096]{0}', space=vmem, size = 0x1000, scoped, tag = 'input window, operand 2']
    #allocation11 [shape = 'u8[1024]{0}', space=vmem, size = 0x400, scoped, tag = 'input window, operand 3']
    #allocation12 [shape = 's32[2]{0}', space=sflag, size = 0x8, scoped, tag = 'scoped memory for barlow_twins_forward.14']
    #allocation13 [shape = 'u8[4096]{0}', space=vmem, size = 0x1000, scoped, tag = 'output window, operand 0']
    %9 = vsyncpa [#allocation6], 0
    %s10 = scalar_lea.sflag [#allocation6], 1
    %11 = vsyncpa %s10, 0
    %12 = vsyncpa [#allocation9], 0
    %s13 = scalar_lea.sflag [#allocation9], 1
    %14 = vsyncpa %s13, 0
    %15 = vsyncpa [#allocation12], 0
    %s16 = scalar_lea.sflag [#allocation12], 1
    %17 = vsyncpa %s16, 0
    %18 = vsyncpa [#allocation7], 0
    %s19 = scalar_lea.sflag [#allocation7], 1
    %20 = vsyncpa %s19, 0
    loop: start=0, step=1, limit=6
    $region2: #{barlow_twins_forward.14} parent=1 // loop_pre_header
      _
    $region3: #{barlow_twins_forward.14} parent=1 // loop_header
      %s22 = sphi 0, %s26
      %p23 = scmp.ge.s32.totalorder %s22, 6
      %s29 = sphi 0, %s48
      %s30 = sphi 0, %s44
      %s31 = sphi 0, %s40
      %s32 = sphi 0, %s29
      %s33 = sphi 0, %s30
      %s34 = sphi 0, %s31
      %s35 = sphi 0, %s32
      %s36 = sphi 0, %s33
      %s37 = sphi 0, %s34
      %s53 = sphi 0, %s55
      %s56 = sphi 0, %s53
      %s57 = sphi 0, %s56
      %s73 = sphi 0, %s57
      %s81 = sphi 0, %s83
      %s84 = sphi 0, %s81
      %s85 = sphi 0, %s84
      %s101 = sphi 0, %s85
      %s109 = sphi 0, %s111
      %s112 = sphi 0, %s109
      %s113 = sphi 0, %s112
      %s129 = sphi 0, %s113
      %s137 = sphi 0, %s139
      %s140 = sphi 0, %s137
      %s141 = sphi 0, %s140
      %s157 = sphi 0, %s141
      %s165 = sphi 0, %s167
      %s168 = sphi 0, %s165
      %s169 = sphi 0, %s168
      %s185 = sphi 0, %s169
    $region4: #{barlow_twins_forward.14} parent=1 // loop_header_branch
      %25 = sbr.rel (%p23) target = $region8
    $region5: #{barlow_twins_forward.14} parent=1 // loop_body
      %s27 = ssub.s32 %s22, 1
      %s28 = ssub.s32 %s22, 2
      %s38 = sadd.s32 1, %s31
      %p39 = scmp.ge.s32.totalorder %s38, 1
      %s40 = scalar_select %p39, 0, %s38
      %s41 = sadd.s32 1, %s30
      %s42 = scalar_select %p39, %s41, %s30
      %p43 = scmp.ge.s32.totalorder %s42, 1
      %s44 = scalar_select %p43, 0, %s42
      %s45 = sadd.s32 1, %s29
      %s46 = scalar_select %p43, %s45, %s29
      %p47 = scmp.ge.s32.totalorder %s46, 4
      %s48 = scalar_select %p47, 0, %s46
      %s49 = ssub.s32 %s29, %s48
      %s50 = ssub.s32 %s30, %s44
      %s51 = sor.u32 %s49, %s50
      %p52 = scmp.eq.s32.totalorder %s51, 0
      %s54 = sadd.s32 %s53, 1
      %s55 = scalar_select %p52, %s53, %s54
      %p58 = pneg %p52
      %p59 = scmp.eq.s32.totalorder %s22, 3
      %p60 = por %p58, %p59
      %p61 = scmp.ne.s32.totalorder %s53, %s56
      %p62 = scmp.eq.s32.totalorder %s22, 0
      %p63 = por %p61, %p62
      %p64 = scmp.ne.s32.totalorder %s53, %s56
      %p65 = scmp.eq.s32.totalorder %s27, 3
      %p66 = por %p64, %p65
      %p67 = scmp.ne.s32.totalorder %s56, %s57
      %p68 = scmp.eq.s32.totalorder %s27, 0
      %p69 = por %p67, %p68
      %p70 = scmp.ne.s32.totalorder %s56, %s57
      %p71 = scmp.eq.s32.totalorder %s28, 3
      %p72 = por %p70, %p71
      %p74 = scmp.ne.s32.totalorder %s57, %s73
      %p75 = scmp.eq.s32.totalorder %s28, 0
      %p76 = por %p74, %p75
      %s77 = ssub.s32 %s29, %s48
      %s78 = ssub.s32 %s31, %s40
      %s79 = sor.u32 %s77, %s78
      %p80 = scmp.eq.s32.totalorder %s79, 0
      %s82 = sadd.s32 %s81, 1
      %s83 = scalar_select %p80, %s81, %s82
      %p86 = pneg %p80
      %p87 = scmp.eq.s32.totalorder %s22, 3
      %p88 = por %p86, %p87
      %p89 = scmp.ne.s32.totalorder %s81, %s84
      %p90 = scmp.eq.s32.totalorder %s22, 0
      %p91 = por %p89, %p90
      %p92 = scmp.ne.s32.totalorder %s81, %s84
      %p93 = scmp.eq.s32.totalorder %s27, 3
      %p94 = por %p92, %p93
      %p95 = scmp.ne.s32.totalorder %s84, %s85
      %p96 = scmp.eq.s32.totalorder %s27, 0
      %p97 = por %p95, %p96
      %p98 = scmp.ne.s32.totalorder %s84, %s85
      %p99 = scmp.eq.s32.totalorder %s28, 3
      %p100 = por %p98, %p99
      %p102 = scmp.ne.s32.totalorder %s85, %s101
      %p103 = scmp.eq.s32.totalorder %s28, 0
      %p104 = por %p102, %p103
      %s105 = ssub.s32 %s29, %s48
      %s106 = ssub.s32 %s31, %s40
      %s107 = sor.u32 %s105, %s106
      %p108 = scmp.eq.s32.totalorder %s107, 0
      %s110 = sadd.s32 %s109, 1
      %s111 = scalar_select %p108, %s109, %s110
      %p114 = pneg %p108
      %p115 = scmp.eq.s32.totalorder %s22, 3
      %p116 = por %p114, %p115
      %p117 = scmp.ne.s32.totalorder %s109, %s112
      %p118 = scmp.eq.s32.totalorder %s22, 0
      %p119 = por %p117, %p118
      %p120 = scmp.ne.s32.totalorder %s109, %s112
      %p121 = scmp.eq.s32.totalorder %s27, 3
      %p122 = por %p120, %p121
      %p123 = scmp.ne.s32.totalorder %s112, %s113
      %p124 = scmp.eq.s32.totalorder %s27, 0
      %p125 = por %p123, %p124
      %p126 = scmp.ne.s32.totalorder %s112, %s113
      %p127 = scmp.eq.s32.totalorder %s28, 3
      %p128 = por %p126, %p127
      %p130 = scmp.ne.s32.totalorder %s113, %s129
      %p131 = scmp.eq.s32.totalorder %s28, 0
      %p132 = por %p130, %p131
      %s133 = ssub.s32 %s29, %s48
      %s134 = ssub.s32 %s31, %s40
      %s135 = sor.u32 %s133, %s134
      %p136 = scmp.eq.s32.totalorder %s135, 0
      %s138 = sadd.s32 %s137, 1
      %s139 = scalar_select %p136, %s137, %s138
      %p142 = pneg %p136
      %p143 = scmp.eq.s32.totalorder %s22, 3
      %p144 = por %p142, %p143
      %p145 = scmp.ne.s32.totalorder %s137, %s140
      %p146 = scmp.eq.s32.totalorder %s22, 0
      %p147 = por %p145, %p146
      %p148 = scmp.ne.s32.totalorder %s137, %s140
      %p149 = scmp.eq.s32.totalorder %s27, 3
      %p150 = por %p148, %p149
      %p151 = scmp.ne.s32.totalorder %s140, %s141
      %p152 = scmp.eq.s32.totalorder %s27, 0
      %p153 = por %p151, %p152
      %p154 = scmp.ne.s32.totalorder %s140, %s141
      %p155 = scmp.eq.s32.totalorder %s28, 3
      %p156 = por %p154, %p155
      %p158 = scmp.ne.s32.totalorder %s141, %s157
      %p159 = scmp.eq.s32.totalorder %s28, 0
      %p160 = por %p158, %p159
      %s161 = ssub.s32 %s29, %s48
      %s162 = ssub.s32 %s30, %s44
      %s163 = sor.u32 %s161, %s162
      %p164 = scmp.eq.s32.totalorder %s163, 0
      %s166 = sadd.s32 %s165, 1
      %s167 = scalar_select %p164, %s165, %s166
      %p170 = pneg %p164
      %p171 = scmp.eq.s32.totalorder %s22, 3
      %p172 = por %p170, %p171
      %p173 = scmp.ne.s32.totalorder %s165, %s168
      %p174 = scmp.eq.s32.totalorder %s22, 0
      %p175 = por %p173, %p174
      %p176 = scmp.ne.s32.totalorder %s165, %s168
      %p177 = scmp.eq.s32.totalorder %s27, 3
      %p178 = por %p176, %p177
      %p179 = scmp.ne.s32.totalorder %s168, %s169
      %p180 = scmp.eq.s32.totalorder %s27, 0
      %p181 = por %p179, %p180
      %p182 = scmp.ne.s32.totalorder %s168, %s169
      %p183 = scmp.eq.s32.totalorder %s28, 3
      %p184 = por %p182, %p183
      %p186 = scmp.ne.s32.totalorder %s169, %s185
      %p187 = scmp.eq.s32.totalorder %s28, 0
      %p188 = por %p186, %p187
      %p189 = scmp.le.s32.totalorder 1, %s22
      %p190 = scmp.lt.s32.totalorder %s22, 5
      %p191 = pnand %p189, %p190
      %p192 = pneg %p191
      // Predicated region
      $region9: #{barlow_twins_forward.14} parent=5 // pred_check
        _
      $region10: #{barlow_twins_forward.14} parent=5 // pred_check_branch
        %194 = sbr.rel (%p191) target = $region12
      $region11: #{barlow_twins_forward.14} parent=5 // pred_region
        %s195 = ssub.s32 %s22, 1
      $region12: #{barlow_twins_forward.14} parent=5 // pred_fallthru
        _
      %p196 = scmp.lt.s32.totalorder %s22, 4
      // Predicated region
      $region13: #{barlow_twins_forward.14} parent=5 // pred_check
        %p197 = pneg %p196
      $region14: #{barlow_twins_forward.14} parent=5 // pred_check_branch
        %199 = sbr.rel (%p197) target = $region16
      $region15: #{barlow_twins_forward.14} parent=5 // pred_region
        // Predicated region
        $region17: #{barlow_twins_forward.14} parent=15 // pred_check
          %p200 = pneg %p63
        $region18: #{barlow_twins_forward.14} parent=15 // pred_check_branch
          %202 = sbr.rel (%p200) target = $region20
        $region19: #{barlow_twins_forward.14} parent=15 // pred_region
          %s203 = sand.u32 %s53, 1
          %s204 = scalar_lea.sflag [#allocation6], %s203
          %s205 = sand.u32 %s53, 1
          %s206 = smul.addr %s205, 4
          %s207 = scalar_lea.vmem [#allocation5], %s206
          %s209 = ssub.s32 64, 64
          %210 = vsyncadd %s204, %s209
          %s211 = smul.addr %s30, 3
          %s212 = smul.addr %s29, 3
          %s213 = sadd.s32 %s211, %s212
          %s214 = smul.addr %s213, 64
          %s215 = scalar_lea.hbm %s0, %s214
          %s217 = sshll.u32 %s207, 4
          %s218 = int_to_ptr.vmem [resolvable:$true] %s217
          %220 = dma.hbm_to_vmem [thread:$0]  %s215, 64, %s218, %s204
        $region20: #{barlow_twins_forward.14} parent=15 // pred_fallthru
          _
        // Predicated region
        $region21: #{barlow_twins_forward.14} parent=15 // pred_check
          %p221 = pneg %p91
        $region22: #{barlow_twins_forward.14} parent=15 // pred_check_branch
          %223 = sbr.rel (%p221) target = $region24
        $region23: #{barlow_twins_forward.14} parent=15 // pred_region
          %s224 = sand.u32 %s22, 1
          %s225 = scalar_lea.sflag [#allocation9], %s224
          %s226 = sand.u32 %s81, 1
          %s227 = smul.addr %s226, 4
          %s228 = scalar_lea.vmem [#allocation8], %s227
          %s230 = ssub.s32 64, 64
          %231 = vsyncadd %s225, %s230
          %s232 = smul.addr %s31, 3
          %s233 = sadd.s32 1, %s232
          %s234 = smul.addr %s29, 3
          %s235 = sadd.s32 %s233, %s234
          %s236 = smul.addr %s235, 64
          %s237 = scalar_lea.hbm %s1, %s236
          %s239 = sshll.u32 %s228, 4
          %s240 = int_to_ptr.vmem [resolvable:$true] %s239
          %242 = dma.hbm_to_vmem [thread:$0]  %s237, 64, %s240, %s225
        $region24: #{barlow_twins_forward.14} parent=15 // pred_fallthru
          _
        // Predicated region
        $region25: #{barlow_twins_forward.14} parent=15 // pred_check
          %p243 = pneg %p119
        $region26: #{barlow_twins_forward.14} parent=15 // pred_check_branch
          %245 = sbr.rel (%p243) target = $region28
        $region27: #{barlow_twins_forward.14} parent=15 // pred_region
          %s246 = sand.u32 %s22, 1
          %s247 = scalar_lea.sflag [#allocation9], %s246
          %s248 = sand.u32 %s109, 1
          %s249 = smul.addr %s248, 4
          %s250 = scalar_lea.vmem [#allocation10], %s249
          %s252 = ssub.s32 64, 64
          %253 = vsyncadd %s247, %s252
          %s254 = smul.addr %s31, 3
          %s255 = sadd.s32 2, %s254
          %s256 = smul.addr %s29, 3
          %s257 = sadd.s32 %s255, %s256
          %s258 = smul.addr %s257, 64
          %s259 = scalar_lea.hbm %s2, %s258
          %s261 = sshll.u32 %s250, 4
          %s262 = int_to_ptr.vmem [resolvable:$true] %s261
          %264 = dma.hbm_to_vmem [thread:$0]  %s259, 64, %s262, %s247
        $region28: #{barlow_twins_forward.14} parent=15 // pred_fallthru
          _
        // Predicated region
        $region29: #{barlow_twins_forward.14} parent=15 // pred_check
          %p265 = pneg %p147
        $region30: #{barlow_twins_forward.14} parent=15 // pred_check_branch
          %267 = sbr.rel (%p265) target = $region32
        $region31: #{barlow_twins_forward.14} parent=15 // pred_region
          %s268 = sand.u32 %s137, 1
          %s269 = scalar_lea.sflag [#allocation12], %s268
          %s270 = sand.u32 %s137, 1
          %s271 = scalar_lea.vmem [#allocation11], %s270
          %s273 = ssub.s32 16, 16
          %274 = vsyncadd %s269, %s273
          %s275 = sadd.s32 %s31, %s29
          %s276 = smul.addr %s275, 16
          %s277 = scalar_lea.hbm %s3, %s276
          %s279 = sshll.u32 %s271, 4
          %s280 = int_to_ptr.vmem [resolvable:$true] %s279
          %282 = dma.hbm_to_vmem [thread:$0]  %s277, 16, %s280, %s269
        $region32: #{barlow_twins_forward.14} parent=15 // pred_fallthru
          _
      $region16: #{barlow_twins_forward.14} parent=5 // pred_fallthru
        _
      %p283 = scmp.le.s32.totalorder 1, %s22
      %p284 = scmp.lt.s32.totalorder %s22, 5
      %p285 = pnand %p283, %p284
      %p286 = pneg %p285
      // Predicated region
      $region33: #{barlow_twins_forward.14} parent=5 // pred_check
        _
      $region34: #{barlow_twins_forward.14} parent=5 // pred_check_branch
        %288 = sbr.rel (%p285) target = $region36
      $region35: #{barlow_twins_forward.14} parent=5 // pred_region
        %s289 = ssub.s32 %s22, 1
        %s290 = sand.u32 %s56, 1
        %s291 = scalar_lea.sflag [#allocation6], %s290
        %s292 = sand.u32 %s56, 1
        %s293 = smul.addr %s292, 4
        %s294 = scalar_lea.vmem [#allocation5], %s293
        // Predicated region
        $region37: #{barlow_twins_forward.14} parent=35 // pred_check
          %p295 = pneg %p69
        $region38: #{barlow_twins_forward.14} parent=35 // pred_check_branch
          %297 = sbr.rel (%p295) target = $region40
        $region39: #{barlow_twins_forward.14} parent=35 // pred_region
          %298 = dma.done %s291, 64
        $region40: #{barlow_twins_forward.14} parent=35 // pred_fallthru
          _
        %s299 = sand.u32 %s27, 1
        %s300 = scalar_lea.sflag [#allocation9], %s299
        %s301 = sand.u32 %s84, 1
        %s302 = smul.addr %s301, 4
        %s303 = scalar_lea.vmem [#allocation8], %s302
        // Predicated region
        $region41: #{barlow_twins_forward.14} parent=35 // pred_check
          %p304 = pneg %p97
        $region42: #{barlow_twins_forward.14} parent=35 // pred_check_branch
          %306 = sbr.rel (%p304) target = $region44
        $region43: #{barlow_twins_forward.14} parent=35 // pred_region
          %307 = dma.done %s300, 64
        $region44: #{barlow_twins_forward.14} parent=35 // pred_fallthru
          _
        %s308 = sand.u32 %s27, 1
        %s309 = scalar_lea.sflag [#allocation9], %s308
        %s310 = sand.u32 %s112, 1
        %s311 = smul.addr %s310, 4
        %s312 = scalar_lea.vmem [#allocation10], %s311
        // Predicated region
        $region45: #{barlow_twins_forward.14} parent=35 // pred_check
          %p313 = pneg %p125
        $region46: #{barlow_twins_forward.14} parent=35 // pred_check_branch
          %315 = sbr.rel (%p313) target = $region48
        $region47: #{barlow_twins_forward.14} parent=35 // pred_region
          %316 = dma.done %s309, 64
        $region48: #{barlow_twins_forward.14} parent=35 // pred_fallthru
          _
        %s317 = sand.u32 %s140, 1
        %s318 = scalar_lea.sflag [#allocation12], %s317
        %s319 = sand.u32 %s140, 1
        %s320 = scalar_lea.vmem [#allocation11], %s319
        // Predicated region
        $region49: #{barlow_twins_forward.14} parent=35 // pred_check
          %p321 = pneg %p153
        $region50: #{barlow_twins_forward.14} parent=35 // pred_check_branch
          %323 = sbr.rel (%p321) target = $region52
        $region51: #{barlow_twins_forward.14} parent=35 // pred_region
          %324 = dma.done %s318, 16
        $region52: #{barlow_twins_forward.14} parent=35 // pred_fallthru
          _
        %s325 = sand.u32 %s56, 1
        %s326 = scalar_lea.sflag [#allocation6], %s325
        %s327 = sand.u32 %s56, 1
        %s328 = smul.addr %s327, 4
        %s329 = scalar_lea.vmem [#allocation5], %s328
        %p330 = pneg %p69
        %p331 = pneg %p66
        %s332 = sand.u32 %s27, 1
        %s333 = scalar_lea.sflag [#allocation9], %s332
        %s334 = sand.u32 %s84, 1
        %s335 = smul.addr %s334, 4
        %s336 = scalar_lea.vmem [#allocation8], %s335
        %p337 = pneg %p97
        %p338 = pneg %p94
        %s339 = sand.u32 %s27, 1
        %s340 = scalar_lea.sflag [#allocation9], %s339
        %s341 = sand.u32 %s112, 1
        %s342 = smul.addr %s341, 4
        %s343 = scalar_lea.vmem [#allocation10], %s342
        %p344 = pneg %p125
        %p345 = pneg %p122
        %s346 = sand.u32 %s140, 1
        %s347 = scalar_lea.sflag [#allocation12], %s346
        %s348 = sand.u32 %s140, 1
        %s349 = scalar_lea.vmem [#allocation11], %s348
        %p350 = pneg %p153
        %p351 = pneg %p150
        %p352 = pneg %p181
        %p353 = pneg %p178
        %s354 = sand.u32 %s168, 1
        %s355 = scalar_lea.sflag [#allocation7], %s354
        %s356 = sand.u32 %s168, 1
        %s357 = smul.addr %s356, 4
        %s358 = scalar_lea.vmem [#allocation13], %s357
        %p360 = scmp.eq.s32.totalorder %s34, 0
        // Predicated region
        $region53: #{barlow_twins_forward.14} parent=35 // pred_check
          %p361 = pneg %p360
        $region54: #{barlow_twins_forward.14} parent=35 // pred_check_branch
          %363 = sbr.rel (%p361) target = $region56
        $region55: #{barlow_twins_forward.14} parent=35 // pred_region
          %vm364 = vcmask 7168
          %365 = vst.msk [vmem:[#allocation2] sm:$0xff] %vm364, -inf
          %366 = vst.msk [vmem:[#allocation2 + $0x8] sm:$0xff] %vm364, -inf
          %367 = vst.msk [vmem:[#allocation2 + $0x10] sm:$0xff] %vm364, -inf
          %368 = vst.msk [vmem:[#allocation2 + $0x18] sm:$0xff] %vm364, -inf
          %369 = vst.msk [vmem:[#allocation3] sm:$0xff] %vm364, 0.0
          %370 = vst.msk [vmem:[#allocation3 + $0x8] sm:$0xff] %vm364, 0.0
          %371 = vst.msk [vmem:[#allocation3 + $0x10] sm:$0xff] %vm364, 0.0
          %372 = vst.msk [vmem:[#allocation3 + $0x18] sm:$0xff] %vm364, 0.0
          %vm373 = vcmask 261120
          %374 = vst.msk [vmem:[#allocation4] sm:$0xff] %vm373, 0.0
          %375 = vst.msk [vmem:[#allocation4 + $0x8] sm:$0xff] %vm373, 0.0
          %376 = vst.msk [vmem:[#allocation4 + $0x10] sm:$0xff] %vm373, 0.0
          %377 = vst.msk [vmem:[#allocation4 + $0x18] sm:$0xff] %vm373, 0.0
        $region56: #{barlow_twins_forward.14} parent=35 // pred_fallthru
          _
        %v378 = vld [vmem:[%s294] sm:$0xf]
        %v379 = vld [vmem:[%s303] sm:$0xf]
        %v380 = vld [vmem:[%s312] sm:$0xf]
        %v381 = vld [vmem:[%s320] sm:$0x1]
        %v382 = vsub.f32 1.0, %v381
        %v383 = vmul.f32 %v382, -1e+09
        %vm384 = vcmask 261120
        %v386 = vsel %vm384, %v378, 0
        %v389 = vsel %vm384, %v379, 0
        %391 = vmatprep.subr.bf16.mxu0 0
        %392 = vmatpush1.bf16.xpose.msra.mxu0 %v389
        %393 = vmatprep.subr.bf16.mxu0 0
        %394 = vmatpush1.bf16.xpose.msra.mxu0 0
        %395 = vmatprep.subr.bf16.mxu0 0
        %396 = vmatpush1.bf16.xpose.msra.mxu0 0
        %397 = vmatprep.subr.bf16.mxu0 0
        %398 = vmatpush1.bf16.xpose.msra.mxu0 0
        %399 = vmatprep.subr.bf16.mxu0 0
        %400 = vmatpush1.bf16.xpose.msra.mxu0 0
        %401 = vmatprep.subr.bf16.mxu0 0
        %402 = vmatpush1.bf16.xpose.msra.mxu0 0
        %403 = vmatprep.subr.bf16.mxu0 0
        %404 = vmatpush1.bf16.xpose.msra.mxu0 0
        %405 = vmatprep.subr.bf16.mxu0 0
        %406 = vmatpush1.bf16.xpose.msra.mxu0 0
        %407 = vmatprep.subr.bf16.mxu0 0
        %408 = vmatpush1.bf16.xpose.msra.mxu0 0
        %409 = vmatprep.subr.bf16.mxu0 0
        %410 = vmatpush1.bf16.xpose.msra.mxu0 0
        %411 = vmatprep.subr.bf16.mxu0 0
        %412 = vmatpush1.bf16.xpose.msra.mxu0 0
        %413 = vmatprep.subr.bf16.mxu0 0
        %414 = vmatpush1.bf16.xpose.msra.mxu0 0
        %415 = vmatprep.subr.bf16.mxu0 0
        %416 = vmatpush1.bf16.xpose.msra.mxu0 0
        %417 = vmatprep.subr.bf16.mxu0 0
        %418 = vmatpush1.bf16.xpose.msra.mxu0 0
        %419 = vmatprep.subr.bf16.mxu0 0
        %420 = vmatpush1.bf16.xpose.msra.mxu0 0
        %421 = vmatprep.subr.bf16.mxu0 0
        %422 = vmatpush1.bf16.xpose.msra.mxu0 0
        %423 = vmatprep.mubr.bf16.mxu0 0
        %424 = vmatmul.mubr.bf16.gmra.mrb[0].mxu0 %v386
        %v425 = vpop.f32.mrb[0].mxu0
        %v426 = vadd.f32 0.0, %v425
        %v427 = vpop.f32.mrb[0].mxu0
        %v428 = vpop.f32.mrb[0].mxu0
        %v429 = vpop.f32.mrb[0].mxu0
        %430 = vdwg.mxu0
        %v431 = vmul.f32 %v426, 0.17677669
        %v433 = vlaneseq
        %v434 = vshrl.u32 %v433, 7
        %v435 = vsub.s32 0, %v434
        %v436 = vrot.slane %v383, %v435
        %v438 = vadd.f32 %v431, %v436
        %v439 = vld [vmem:[#allocation2] sm:$0xff]
        %vm440 = vcmask 64512
        %v441 = vsel %vm440, %v438, -inf
        %442 = vmax.xlane.f32.xlu0 %v441
        %v443 = vpop.xlane.xlu0 %442
        %v444 = vmax.f32 %v439, %v443
        %v445 = vsub.f32 %v439, %v444
        %v446 = vmul.f32 %v445, 1.442695
        %v447 = vpow.pop %v446
        %449 = vset.pattern.permute.xlu0 0
        %450 = vperm.xlu0 %449, %v444
        %v451 = vpop.permute.xlu0 %450
        %v453 = vsub.f32 %v438, %v451
        %v454 = vmul.f32 %v453, 1.442695
        %v455 = vpow.pop %v454
        %v456 = vld [vmem:[#allocation3] sm:$0xff]
        %v457 = vmul.f32 %v447, %v456
        %v458 = vsel %vm440, %v455, 0.0
        %459 = vadd.xlane.f32.xlu0 %v458
        %v460 = vpop.xlane.xlu0 %459
        %v461 = vadd.f32 %v457, %v460
        %vm462 = vcmask 7168
        %463 = vst.msk [vmem:[#allocation3] sm:$0xff] %vm462, %v461
        %v464 = vpack.c.bf16 %v455, %v455
        %v466 = vsel %vm440, %v464, 0
        %vm468 = vcmask 1043456
        %v470 = vsel %vm468, %v380, 0
        %472 = vmatprep.subr.bf16.mxu0 0
        %473 = vmatpush1.bf16.msra.mxu0 %v470
        %474 = vmatprep.subr.bf16.mxu0 0
        %475 = vmatpush1.bf16.msra.mxu0 0
        %476 = vmatprep.subr.bf16.mxu0 0
        %477 = vmatpush1.bf16.msra.mxu0 0
        %478 = vmatprep.subr.bf16.mxu0 0
        %479 = vmatpush1.bf16.msra.mxu0 0
        %480 = vmatprep.subr.bf16.mxu0 0
        %481 = vmatpush1.bf16.msra.mxu0 0
        %482 = vmatprep.subr.bf16.mxu0 0
        %483 = vmatpush1.bf16.msra.mxu0 0
        %484 = vmatprep.subr.bf16.mxu0 0
        %485 = vmatpush1.bf16.msra.mxu0 0
        %486 = vmatprep.subr.bf16.mxu0 0
        %487 = vmatpush1.bf16.msra.mxu0 0
        %488 = vmatprep.subr.bf16.mxu0 0
        %489 = vmatpush1.bf16.msra.mxu0 0
        %490 = vmatprep.subr.bf16.mxu0 0
        %491 = vmatpush1.bf16.msra.mxu0 0
        %492 = vmatprep.subr.bf16.mxu0 0
        %493 = vmatpush1.bf16.msra.mxu0 0
        %494 = vmatprep.subr.bf16.mxu0 0
        %495 = vmatpush1.bf16.msra.mxu0 0
        %496 = vmatprep.subr.bf16.mxu0 0
        %497 = vmatpush1.bf16.msra.mxu0 0
        %498 = vmatprep.subr.bf16.mxu0 0
        %499 = vmatpush1.bf16.msra.mxu0 0
        %500 = vmatprep.subr.bf16.mxu0 0
        %501 = vmatpush1.bf16.msra.mxu0 0
        %502 = vmatprep.subr.bf16.mxu0 0
        %503 = vmatpush1.bf16.msra.mxu0 0
        %504 = vmatprep.mubr.bf16.mxu0 0
        %505 = vmatmul.mubr.bf16.gmra.mrb[0].mxu0 %v466
        %v506 = vpop.f32.mrb[0].mxu0
        %v507 = vadd.f32 0.0, %v506
        %v508 = vpop.f32.mrb[0].mxu0
        %v509 = vpop.f32.mrb[0].mxu0
        %v510 = vpop.f32.mrb[0].mxu0
        %511 = vdwg.mxu0
        %v512 = vld [vmem:[#allocation4] sm:$0xff]
        %514 = vset.pattern.permute.xlu0 0
        %515 = vperm.xlu0 %514, %v447
        %v516 = vpop.permute.xlu0 %515
        %v518 = vmul.f32 %v516, %v512
        %v519 = vadd.f32 %v518, %v507
        %520 = vst.msk [vmem:[#allocation4] sm:$0xff] %vm384, %v519
        %521 = vst.msk [vmem:[#allocation2] sm:$0xff] %vm462, %v444
        %v523 = vunpack.c.l.b16 %v378
        %v524 = vpack.c.b16 %v523, %v523
        %525 = vrot.lane.b32.xlu0 %v524, 96
        %v526 = vpop.permute.xlu0 %525
        %v528 = vunpack.c.l.b16 %v379
        %v529 = vpack.c.b16 %v528, %v528
        %530 = vrot.lane.b32.xlu0 %v529, 96
        %v531 = vpop.permute.xlu0 %530
        %v533 = vsel %vm384, %v526, 0
        %v536 = vsel %vm384, %v531, 0
        %538 = vmatprep.subr.bf16.mxu0 0
        %539 = vmatpush1.bf16.xpose.msra.mxu0 %v536
        %540 = vmatprep.subr.bf16.mxu0 0
        %541 = vmatpush1.bf16.xpose.msra.mxu0 0
        %542 = vmatprep.subr.bf16.mxu0 0
        %543 = vmatpush1.bf16.xpose.msra.mxu0 0
        %544 = vmatprep.subr.bf16.mxu0 0
        %545 = vmatpush1.bf16.xpose.msra.mxu0 0
        %546 = vmatprep.subr.bf16.mxu0 0
        %547 = vmatpush1.bf16.xpose.msra.mxu0 0
        %548 = vmatprep.subr.bf16.mxu0 0
        %549 = vmatpush1.bf16.xpose.msra.mxu0 0
        %550 = vmatprep.subr.bf16.mxu0 0
        %551 = vmatpush1.bf16.xpose.msra.mxu0 0
        %552 = vmatprep.subr.bf16.mxu0 0
        %553 = vmatpush1.bf16.xpose.msra.mxu0 0
        %554 = vmatprep.subr.bf16.mxu0 0
        %555 = vmatpush1.bf16.xpose.msra.mxu0 0
        %556 = vmatprep.subr.bf16.mxu0 0
        %557 = vmatpush1.bf16.xpose.msra.mxu0 0
        %558 = vmatprep.subr.bf16.mxu0 0
        %559 = vmatpush1.bf16.xpose.msra.mxu0 0
        %560 = vmatprep.subr.bf16.mxu0 0
        %561 = vmatpush1.bf16.xpose.msra.mxu0 0
        %562 = vmatprep.subr.bf16.mxu0 0
        %563 = vmatpush1.bf16.xpose.msra.mxu0 0
        %564 = vmatprep.subr.bf16.mxu0 0
        %565 = vmatpush1.bf16.xpose.msra.mxu0 0
        %566 = vmatprep.subr.bf16.mxu0 0
        %567 = vmatpush1.bf16.xpose.msra.mxu0 0
        %568 = vmatprep.subr.bf16.mxu0 0
        %569 = vmatpush1.bf16.xpose.msra.mxu0 0
        %570 = vmatprep.mubr.bf16.mxu0 0
        %571 = vmatmul.mubr.bf16.gmra.mrb[0].mxu0 %v533
        %v572 = vpop.f32.mrb[0].mxu0
        %v573 = vadd.f32 0.0, %v572
        %v574 = vpop.f32.mrb[0].mxu0
        %v575 = vpop.f32.mrb[0].mxu0
        %v576 = vpop.f32.mrb[0].mxu0
        %577 = vdwg.mxu0
        %v578 = vmul.f32 %v573, 0.17677669
        %v579 = vadd.f32 %v578, %v436
        %s580 = scalar_lea.vmem [#allocation2], 8
        %v581 = vld [vmem:[%s580] sm:$0xff]
        %v582 = vsel %vm440, %v579, -inf
        %583 = vmax.xlane.f32.xlu0 %v582
        %v584 = vpop.xlane.xlu0 %583
        %v585 = vmax.f32 %v581, %v584
        %v586 = vsub.f32 %v581, %v585
        %v587 = vmul.f32 %v586, 1.442695
        %v588 = vpow.pop %v587
        %590 = vset.pattern.permute.xlu0 0
        %591 = vperm.xlu0 %590, %v585
        %v592 = vpop.permute.xlu0 %591
        %v594 = vsub.f32 %v579, %v592
        %v595 = vmul.f32 %v594, 1.442695
        %v596 = vpow.pop %v595
        %s597 = scalar_lea.vmem [#allocation3], 8
        %v598 = vld [vmem:[%s597] sm:$0xff]
        %v599 = vmul.f32 %v588, %v598
        %v600 = vsel %vm440, %v596, 0.0
        %601 = vadd.xlane.f32.xlu0 %v600
        %v602 = vpop.xlane.xlu0 %601
        %v603 = vadd.f32 %v599, %v602
        %604 = vst.msk [vmem:[%s597] sm:$0xff] %vm462, %v603
        %v605 = vpack.c.bf16 %v596, %v596
        %v607 = vunpack.c.l.b16 %v380
        %v608 = vpack.c.b16 %v607, %v607
        %609 = vrot.lane.b32.xlu0 %v608, 96
        %v610 = vpop.permute.xlu0 %609
        %v612 = vsel %vm440, %v605, 0
        %v615 = vsel %vm468, %v610, 0
        %617 = vmatprep.subr.bf16.mxu0 0
        %618 = vmatpush1.bf16.msra.mxu0 %v615
        %619 = vmatprep.subr.bf16.mxu0 0
        %620 = vmatpush1.bf16.msra.mxu0 0
        %621 = vmatprep.subr.bf16.mxu0 0
        %622 = vmatpush1.bf16.msra.mxu0 0
        %623 = vmatprep.subr.bf16.mxu0 0
        %624 = vmatpush1.bf16.msra.mxu0 0
        %625 = vmatprep.subr.bf16.mxu0 0
        %626 = vmatpush1.bf16.msra.mxu0 0
        %627 = vmatprep.subr.bf16.mxu0 0
        %628 = vmatpush1.bf16.msra.mxu0 0
        %629 = vmatprep.subr.bf16.mxu0 0
        %630 = vmatpush1.bf16.msra.mxu0 0
        %631 = vmatprep.subr.bf16.mxu0 0
        %632 = vmatpush1.bf16.msra.mxu0 0
        %633 = vmatprep.subr.bf16.mxu0 0
        %634 = vmatpush1.bf16.msra.mxu0 0
        %635 = vmatprep.subr.bf16.mxu0 0
        %636 = vmatpush1.bf16.msra.mxu0 0
        %637 = vmatprep.subr.bf16.mxu0 0
        %638 = vmatpush1.bf16.msra.mxu0 0
        %639 = vmatprep.subr.bf16.mxu0 0
        %640 = vmatpush1.bf16.msra.mxu0 0
        %641 = vmatprep.subr.bf16.mxu0 0
        %642 = vmatpush1.bf16.msra.mxu0 0
        %643 = vmatprep.subr.bf16.mxu0 0
        %644 = vmatpush1.bf16.msra.mxu0 0
        %645 = vmatprep.subr.bf16.mxu0 0
        %646 = vmatpush1.bf16.msra.mxu0 0
        %647 = vmatprep.subr.bf16.mxu0 0
        %648 = vmatpush1.bf16.msra.mxu0 0
        %649 = vmatprep.mubr.bf16.mxu0 0
        %650 = vmatmul.mubr.bf16.gmra.mrb[0].mxu0 %v612
        %v651 = vpop.f32.mrb[0].mxu0
        %v652 = vadd.f32 0.0, %v651
        %v653 = vpop.f32.mrb[0].mxu0
        %v654 = vpop.f32.mrb[0].mxu0
        %v655 = vpop.f32.mrb[0].mxu0
        %656 = vdwg.mxu0
        %s657 = scalar_lea.vmem [#allocation4], 8
        %v658 = vld [vmem:[%s657] sm:$0xff]
        %660 = vset.pattern.permute.xlu0 0
        %661 = vperm.xlu0 %660, %v588
        %v662 = vpop.permute.xlu0 %661
        %v664 = vmul.f32 %v662, %v658
        %v665 = vadd.f32 %v664, %v652
        %666 = vst.msk [vmem:[%s657] sm:$0xff] %vm384, %v665
        %667 = vst.msk [vmem:[%s580] sm:$0xff] %vm462, %v585
        %668 = vrot.lane.b32.xlu0 %v524, 64
        %v669 = vpop.permute.xlu0 %668
        %670 = vrot.lane.b32.xlu0 %v529, 64
        %v671 = vpop.permute.xlu0 %670
        %v673 = vsel %vm384, %v669, 0
        %v676 = vsel %vm384, %v671, 0
        %678 = vmatprep.subr.bf16.mxu0 0
        %679 = vmatpush1.bf16.xpose.msra.mxu0 %v676
        %680 = vmatprep.subr.bf16.mxu0 0
        %681 = vmatpush1.bf16.xpose.msra.mxu0 0
        %682 = vmatprep.subr.bf16.mxu0 0
        %683 = vmatpush1.bf16.xpose.msra.mxu0 0
        %684 = vmatprep.subr.bf16.mxu0 0
        %685 = vmatpush1.bf16.xpose.msra.mxu0 0
        %686 = vmatprep.subr.bf16.mxu0 0
        %687 = vmatpush1.bf16.xpose.msra.mxu0 0
        %688 = vmatprep.subr.bf16.mxu0 0
        %689 = vmatpush1.bf16.xpose.msra.mxu0 0
        %690 = vmatprep.subr.bf16.mxu0 0
        %691 = vmatpush1.bf16.xpose.msra.mxu0 0
        %692 = vmatprep.subr.bf16.mxu0 0
        %693 = vmatpush1.bf16.xpose.msra.mxu0 0
        %694 = vmatprep.subr.bf16.mxu0 0
        %695 = vmatpush1.bf16.xpose.msra.mxu0 0
        %696 = vmatprep.subr.bf16.mxu0 0
        %697 = vmatpush1.bf16.xpose.msra.mxu0 0
        %698 = vmatprep.subr.bf16.mxu0 0
        %699 = vmatpush1.bf16.xpose.msra.mxu0 0
        %700 = vmatprep.subr.bf16.mxu0 0
        %701 = vmatpush1.bf16.xpose.msra.mxu0 0
        %702 = vmatprep.subr.bf16.mxu0 0
        %703 = vmatpush1.bf16.xpose.msra.mxu0 0
        %704 = vmatprep.subr.bf16.mxu0 0
        %705 = vmatpush1.bf16.xpose.msra.mxu0 0
        %706 = vmatprep.subr.bf16.mxu0 0
        %707 = vmatpush1.bf16.xpose.msra.mxu0 0
        %708 = vmatprep.subr.bf16.mxu0 0
        %709 = vmatpush1.bf16.xpose.msra.mxu0 0
        %710 = vmatprep.mubr.bf16.mxu0 0
        %711 = vmatmul.mubr.bf16.gmra.mrb[0].mxu0 %v673
        %v712 = vpop.f32.mrb[0].mxu0
        %v713 = vadd.f32 0.0, %v712
        %v714 = vpop.f32.mrb[0].mxu0
        %v715 = vpop.f32.mrb[0].mxu0
        %v716 = vpop.f32.mrb[0].mxu0
        %717 = vdwg.mxu0
        %v718 = vmul.f32 %v713, 0.17677669
        %v719 = vadd.f32 %v718, %v436
        %s720 = scalar_lea.vmem [#allocation2], 16
        %v721 = vld [vmem:[%s720] sm:$0xff]
        %v722 = vsel %vm440, %v719, -inf
        %723 = vmax.xlane.f32.xlu0 %v722
        %v724 = vpop.xlane.xlu0 %723
        %v725 = vmax.f32 %v721, %v724
        %v726 = vsub.f32 %v721, %v725
        %v727 = vmul.f32 %v726, 1.442695
        %v728 = vpow.pop %v727
        %730 = vset.pattern.permute.xlu0 0
        %731 = vperm.xlu0 %730, %v725
        %v732 = vpop.permute.xlu0 %731
        %v734 = vsub.f32 %v719, %v732
        %v735 = vmul.f32 %v734, 1.442695
        %v736 = vpow.pop %v735
        %s737 = scalar_lea.vmem [#allocation3], 16
        %v738 = vld [vmem:[%s737] sm:$0xff]
        %v739 = vmul.f32 %v728, %v738
        %v740 = vsel %vm440, %v736, 0.0
        %741 = vadd.xlane.f32.xlu0 %v740
        %v742 = vpop.xlane.xlu0 %741
        %v743 = vadd.f32 %v739, %v742
        %744 = vst.msk [vmem:[%s737] sm:$0xff] %vm462, %v743
        %v745 = vpack.c.bf16 %v736, %v736
        %746 = vrot.lane.b32.xlu0 %v608, 64
        %v747 = vpop.permute.xlu0 %746
        %v749 = vsel %vm440, %v745, 0
        %v752 = vsel %vm468, %v747, 0
        %754 = vmatprep.subr.bf16.mxu0 0
        %755 = vmatpush1.bf16.msra.mxu0 %v752
        %756 = vmatprep.subr.bf16.mxu0 0
        %757 = vmatpush1.bf16.msra.mxu0 0
        %758 = vmatprep.subr.bf16.mxu0 0
        %759 = vmatpush1.bf16.msra.mxu0 0
        %760 = vmatprep.subr.bf16.mxu0 0
        %761 = vmatpush1.bf16.msra.mxu0 0
        %762 = vmatprep.subr.bf16.mxu0 0
        %763 = vmatpush1.bf16.msra.mxu0 0
        %764 = vmatprep.subr.bf16.mxu0 0
        %765 = vmatpush1.bf16.msra.mxu0 0
        %766 = vmatprep.subr.bf16.mxu0 0
        %767 = vmatpush1.bf16.msra.mxu0 0
        %768 = vmatprep.subr.bf16.mxu0 0
        %769 = vmatpush1.bf16.msra.mxu0 0
        %770 = vmatprep.subr.bf16.mxu0 0
        %771 = vmatpush1.bf16.msra.mxu0 0
        %772 = vmatprep.subr.bf16.mxu0 0
        %773 = vmatpush1.bf16.msra.mxu0 0
        %774 = vmatprep.subr.bf16.mxu0 0
        %775 = vmatpush1.bf16.msra.mxu0 0
        %776 = vmatprep.subr.bf16.mxu0 0
        %777 = vmatpush1.bf16.msra.mxu0 0
        %778 = vmatprep.subr.bf16.mxu0 0
        %779 = vmatpush1.bf16.msra.mxu0 0
        %780 = vmatprep.subr.bf16.mxu0 0
        %781 = vmatpush1.bf16.msra.mxu0 0
        %782 = vmatprep.subr.bf16.mxu0 0
        %783 = vmatpush1.bf16.msra.mxu0 0
        %784 = vmatprep.subr.bf16.mxu0 0
        %785 = vmatpush1.bf16.msra.mxu0 0
        %786 = vmatprep.mubr.bf16.mxu0 0
        %787 = vmatmul.mubr.bf16.gmra.mrb[0].mxu0 %v749
        %v788 = vpop.f32.mrb[0].mxu0
        %v789 = vadd.f32 0.0, %v788
        %v790 = vpop.f32.mrb[0].mxu0
        %v791 = vpop.f32.mrb[0].mxu0
        %v792 = vpop.f32.mrb[0].mxu0
        %793 = vdwg.mxu0
        %s794 = scalar_lea.vmem [#allocation4], 16
        %v795 = vld [vmem:[%s794] sm:$0xff]
        %797 = vset.pattern.permute.xlu0 0
        %798 = vperm.xlu0 %797, %v728
        %v799 = vpop.permute.xlu0 %798
        %v801 = vmul.f32 %v799, %v795
        %v802 = vadd.f32 %v801, %v789
        %803 = vst.msk [vmem:[%s794] sm:$0xff] %vm384, %v802
        %804 = vst.msk [vmem:[%s720] sm:$0xff] %vm462, %v725
        %805 = vrot.lane.b32.xlu0 %v524, 32
        %v806 = vpop.permute.xlu0 %805
        %807 = vrot.lane.b32.xlu0 %v529, 32
        %v808 = vpop.permute.xlu0 %807
        %v810 = vsel %vm384, %v806, 0
        %v813 = vsel %vm384, %v808, 0
        %815 = vmatprep.subr.bf16.mxu0 0
        %816 = vmatpush1.bf16.xpose.msra.mxu0 %v813
        %817 = vmatprep.subr.bf16.mxu0 0
        %818 = vmatpush1.bf16.xpose.msra.mxu0 0
        %819 = vmatprep.subr.bf16.mxu0 0
        %820 = vmatpush1.bf16.xpose.msra.mxu0 0
        %821 = vmatprep.subr.bf16.mxu0 0
        %822 = vmatpush1.bf16.xpose.msra.mxu0 0
        %823 = vmatprep.subr.bf16.mxu0 0
        %824 = vmatpush1.bf16.xpose.msra.mxu0 0
        %825 = vmatprep.subr.bf16.mxu0 0
        %826 = vmatpush1.bf16.xpose.msra.mxu0 0
        %827 = vmatprep.subr.bf16.mxu0 0
        %828 = vmatpush1.bf16.xpose.msra.mxu0 0
        %829 = vmatprep.subr.bf16.mxu0 0
        %830 = vmatpush1.bf16.xpose.msra.mxu0 0
        %831 = vmatprep.subr.bf16.mxu0 0
        %832 = vmatpush1.bf16.xpose.msra.mxu0 0
        %833 = vmatprep.subr.bf16.mxu0 0
        %834 = vmatpush1.bf16.xpose.msra.mxu0 0
        %835 = vmatprep.subr.bf16.mxu0 0
        %836 = vmatpush1.bf16.xpose.msra.mxu0 0
        %837 = vmatprep.subr.bf16.mxu0 0
        %838 = vmatpush1.bf16.xpose.msra.mxu0 0
        %839 = vmatprep.subr.bf16.mxu0 0
        %840 = vmatpush1.bf16.xpose.msra.mxu0 0
        %841 = vmatprep.subr.bf16.mxu0 0
        %842 = vmatpush1.bf16.xpose.msra.mxu0 0
        %843 = vmatprep.subr.bf16.mxu0 0
        %844 = vmatpush1.bf16.xpose.msra.mxu0 0
        %845 = vmatprep.subr.bf16.mxu0 0
        %846 = vmatpush1.bf16.xpose.msra.mxu0 0
        %847 = vmatprep.mubr.bf16.mxu0 0
        %848 = vmatmul.mubr.bf16.gmra.mrb[0].mxu0 %v810
        %v849 = vpop.f32.mrb[0].mxu0
        %v850 = vadd.f32 0.0, %v849
        %v851 = vpop.f32.mrb[0].mxu0
        %v852 = vpop.f32.mrb[0].mxu0
        %v853 = vpop.f32.mrb[0].mxu0
        %854 = vdwg.mxu0
        %v855 = vmul.f32 %v850, 0.17677669
        %v856 = vadd.f32 %v855, %v436
        %s857 = scalar_lea.vmem [#allocation2], 24
        %v858 = vld [vmem:[%s857] sm:$0xff]
        %v859 = vsel %vm440, %v856, -inf
        %860 = vmax.xlane.f32.xlu0 %v859
        %v861 = vpop.xlane.xlu0 %860
        %v862 = vmax.f32 %v858, %v861
        %v863 = vsub.f32 %v858, %v862
        %v864 = vmul.f32 %v863, 1.442695
        %v865 = vpow.pop %v864
        %867 = vset.pattern.permute.xlu0 0
        %868 = vperm.xlu0 %867, %v862
        %v869 = vpop.permute.xlu0 %868
        %v871 = vsub.f32 %v856, %v869
        %v872 = vmul.f32 %v871, 1.442695
        %v873 = vpow.pop %v872
        %s874 = scalar_lea.vmem [#allocation3], 24
        %v875 = vld [vmem:[%s874] sm:$0xff]
        %v876 = vmul.f32 %v865, %v875
        %v877 = vsel %vm440, %v873, 0.0
        %878 = vadd.xlane.f32.xlu0 %v877
        %v879 = vpop.xlane.xlu0 %878
        %v880 = vadd.f32 %v876, %v879
        %881 = vst.msk [vmem:[%s874] sm:$0xff] %vm462, %v880
        %v882 = vpack.c.bf16 %v873, %v873
        %883 = vrot.lane.b32.xlu0 %v608, 32
        %v884 = vpop.permute.xlu0 %883
        %v886 = vsel %vm440, %v882, 0
        %v889 = vsel %vm468, %v884, 0
        %891 = vmatprep.subr.bf16.mxu0 0
        %892 = vmatpush1.bf16.msra.mxu0 %v889
        %893 = vmatprep.subr.bf16.mxu0 0
        %894 = vmatpush1.bf16.msra.mxu0 0
        %895 = vmatprep.subr.bf16.mxu0 0
        %896 = vmatpush1.bf16.msra.mxu0 0
        %897 = vmatprep.subr.bf16.mxu0 0
        %898 = vmatpush1.bf16.msra.mxu0 0
        %899 = vmatprep.subr.bf16.mxu0 0
        %900 = vmatpush1.bf16.msra.mxu0 0
        %901 = vmatprep.subr.bf16.mxu0 0
        %902 = vmatpush1.bf16.msra.mxu0 0
        %903 = vmatprep.subr.bf16.mxu0 0
        %904 = vmatpush1.bf16.msra.mxu0 0
        %905 = vmatprep.subr.bf16.mxu0 0
        %906 = vmatpush1.bf16.msra.mxu0 0
        %907 = vmatprep.subr.bf16.mxu0 0
        %908 = vmatpush1.bf16.msra.mxu0 0
        %909 = vmatprep.subr.bf16.mxu0 0
        %910 = vmatpush1.bf16.msra.mxu0 0
        %911 = vmatprep.subr.bf16.mxu0 0
        %912 = vmatpush1.bf16.msra.mxu0 0
        %913 = vmatprep.subr.bf16.mxu0 0
        %914 = vmatpush1.bf16.msra.mxu0 0
        %915 = vmatprep.subr.bf16.mxu0 0
        %916 = vmatpush1.bf16.msra.mxu0 0
        %917 = vmatprep.subr.bf16.mxu0 0
        %918 = vmatpush1.bf16.msra.mxu0 0
        %919 = vmatprep.subr.bf16.mxu0 0
        %920 = vmatpush1.bf16.msra.mxu0 0
        %921 = vmatprep.subr.bf16.mxu0 0
        %922 = vmatpush1.bf16.msra.mxu0 0
        %923 = vmatprep.mubr.bf16.mxu0 0
        %924 = vmatmul.mubr.bf16.gmra.mrb[0].mxu0 %v886
        %v925 = vpop.f32.mrb[0].mxu0
        %v926 = vadd.f32 0.0, %v925
        %v927 = vpop.f32.mrb[0].mxu0
        %v928 = vpop.f32.mrb[0].mxu0
        %v929 = vpop.f32.mrb[0].mxu0
        %930 = vdwg.mxu0
        %s931 = scalar_lea.vmem [#allocation4], 24
        %v932 = vld [vmem:[%s931] sm:$0xff]
        %934 = vset.pattern.permute.xlu0 0
        %935 = vperm.xlu0 %934, %v865
        %v936 = vpop.permute.xlu0 %935
        %v938 = vmul.f32 %v936, %v932
        %v939 = vadd.f32 %v938, %v926
        %940 = vst.msk [vmem:[%s931] sm:$0xff] %vm384, %v939
        %941 = vst.msk [vmem:[%s857] sm:$0xff] %vm462, %v862
        // Predicated region
        $region57: #{barlow_twins_forward.14} parent=35 // pred_check
          %p942 = pneg %p360
        $region58: #{barlow_twins_forward.14} parent=35 // pred_check_branch
          %944 = sbr.rel (%p942) target = $region60
        $region59: #{barlow_twins_forward.14} parent=35 // pred_region
          %v945 = vld [vmem:[#allocation3] sm:$0xff]
          %v946 = vrcp.pop %v945
          %v947 = vld [vmem:[#allocation4] sm:$0xff]
          %949 = vset.pattern.permute.xlu0 0
          %950 = vperm.xlu0 %949, %v946
          %v951 = vpop.permute.xlu0 %950
          %v953 = vmul.f32 %v947, %v951
          %v954 = vld [vmem:[%s597] sm:$0xff]
          %v955 = vrcp.pop %v954
          %v956 = vld [vmem:[%s657] sm:$0xff]
          %958 = vset.pattern.permute.xlu0 0
          %959 = vperm.xlu0 %958, %v955
          %v960 = vpop.permute.xlu0 %959
          %v962 = vmul.f32 %v956, %v960
          %v963 = vld [vmem:[%s737] sm:$0xff]
          %v964 = vrcp.pop %v963
          %v965 = vld [vmem:[%s794] sm:$0xff]
          %967 = vset.pattern.permute.xlu0 0
          %968 = vperm.xlu0 %967, %v964
          %v969 = vpop.permute.xlu0 %968
          %v971 = vmul.f32 %v965, %v969
          %v972 = vld [vmem:[%s874] sm:$0xff]
          %v973 = vrcp.pop %v972
          %v974 = vld [vmem:[%s931] sm:$0xff]
          %976 = vset.pattern.permute.xlu0 0
          %977 = vperm.xlu0 %976, %v973
          %v978 = vpop.permute.xlu0 %977
          %v980 = vmul.f32 %v974, %v978
          %982 = vrot.lane.b32.xlu0 %v962, 32
          %v983 = vpop.permute.xlu0 %982
          %986 = vrot.lane.b32.xlu0 %v971, 64
          %v987 = vpop.permute.xlu0 %986
          %990 = vrot.lane.b32.xlu0 %v980, 96
          %v991 = vpop.permute.xlu0 %990
          %v993 = vsel %vm384, %v953, %v983
          %vm994 = vcmask 523264
          %v995 = vsel %vm994, %v993, %v987
          %vm996 = vcmask 785408
          %v997 = vsel %vm996, %v995, %v991
          %v998 = vpack.c.bf16 %v997, %v997
          %999 = vst [vmem:[%s358] sm:$0xf] %v998
        $region60: #{barlow_twins_forward.14} parent=35 // pred_fallthru
          _
        %s1000 = sand.u32 %s168, 1
        %s1001 = scalar_lea.sflag [#allocation7], %s1000
        %s1002 = sand.u32 %s168, 1
        %s1003 = smul.addr %s1002, 4
        %s1004 = scalar_lea.vmem [#allocation13], %s1003
        // Predicated region
        $region61: #{barlow_twins_forward.14} parent=35 // pred_check
          %p1005 = pneg %p178
        $region62: #{barlow_twins_forward.14} parent=35 // pred_check_branch
          %1007 = sbr.rel (%p1005) target = $region64
        $region63: #{barlow_twins_forward.14} parent=35 // pred_region
          %s1009 = ssub.s32 64, 64
          %1010 = vsyncadd %s1001, %s1009
          %s1011 = sadd.s32 %s33, %s32
          %s1012 = smul.addr %s1011, 64
          %s1013 = scalar_lea.hbm %s4, %s1012
          %s1015 = sshll.u32 %s1004, 4
          %s1016 = int_to_ptr.vmem [resolvable:$true] %s1015
          %1018 = dma.vmem_to_hbm [thread:$0]  %s1016, 64, %s1013, %s1001
        $region64: #{barlow_twins_forward.14} parent=35 // pred_fallthru
          _
      $region36: #{barlow_twins_forward.14} parent=5 // pred_fallthru
        _
      %p1019 = scmp.le.s32.totalorder 2, %s22
      // Predicated region
      $region65: #{barlow_twins_forward.14} parent=5 // pred_check
        %p1020 = pneg %p1019
      $region66: #{barlow_twins_forward.14} parent=5 // pred_check_branch
        %1022 = sbr.rel (%p1020) target = $region68
      $region67: #{barlow_twins_forward.14} parent=5 // pred_region
        %s1023 = ssub.s32 %s22, 2
        // Predicated region
        $region69: #{barlow_twins_forward.14} parent=67 // pred_check
          %p1024 = pneg %p184
        $region70: #{barlow_twins_forward.14} parent=67 // pred_check_branch
          %1026 = sbr.rel (%p1024) target = $region72
        $region71: #{barlow_twins_forward.14} parent=67 // pred_region
          %s1027 = sand.u32 %s169, 1
          %s1028 = scalar_lea.sflag [#allocation7], %s1027
          %s1029 = sand.u32 %s169, 1
          %s1030 = smul.addr %s1029, 4
          %s1031 = scalar_lea.vmem [#allocation13], %s1030
          %1032 = dma.done %s1028, 64
        $region72: #{barlow_twins_forward.14} parent=67 // pred_fallthru
          _
      $region68: #{barlow_twins_forward.14} parent=5 // pred_fallthru
        _
    $region6: #{barlow_twins_forward.14} parent=1 // loop_footer
      %s26 = sadd.s32 1, %s22
    $region7: #{barlow_twins_forward.14} parent=1 // loop_footer_branch
      %21 = sbr.rel target = $region3
    $region8: #{barlow_twins_forward.14} parent=1 // loop_exit
      _
    %1033 = vsyncpa [#allocation6], 1
    %s1034 = scalar_lea.sflag [#allocation6], 1
    %1035 = vsyncpa %s1034, 1
    %1036 = vsyncpa [#allocation9], 1
    %s1037 = scalar_lea.sflag [#allocation9], 1
    %1038 = vsyncpa %s1037, 1
    %1039 = vsyncpa [#allocation12], 1
    %s1040 = scalar_lea.sflag [#allocation12], 1
    %1041 = vsyncpa %s1040, 1
    %1042 = vsyncpa [#allocation7], 1
    %s1043 = scalar_lea.sflag [#allocation7], 1
    %1044 = vsyncpa %s1043, 1

// kernel: barlow_twins_forward.23
$region0: #{barlow_twins_forward.23}
  #allocation0 [shape = 'u32[]', space=smem, size = 0x4, offset = 0x4, fixed_abs, tag = 'smem constant byte address 0x4 - core index']
  #allocation1 [shape = 'u32[144,128]{1,0:T(1,128)}', space=vmem, size = 0x12000, scoped, tag = 'internal scratch']
  %s0 = inlined_call_operand.hbm [shape: bf16[4,8,128], index: 0, kind: input, shape index: {}, may-alias: {0,1}]
  %s1 = inlined_call_operand.hbm [shape: bf16[4,8,128], index: 1, kind: input, shape index: {}, may-alias: {0,1}]
  %s2 = inlined_call_operand.hbm [shape: f32[4,8,1], index: 2, kind: input, shape index: {}, may-alias: {2,3}]
  %s3 = inlined_call_operand.hbm [shape: f32[4,8,1], index: 3, kind: input, shape index: {}, may-alias: {2,3}]
  %s4 = inlined_call_operand.hbm [shape: f32[2,2,128], index: 4, kind: output, shape index: {}]
  %s5 = sld [smem:[#allocation0]]
  $region65: #{barlow_twins_forward.23} parent=0
    _
  %s7 = ssub.s32 1, %s5
  %s8 = scalar_select 0, %s7, %s5
  $region1: #{barlow_twins_forward.23} parent=0
    #allocation2 [shape = 'u8[4096]{0}', space=vmem, size = 0x1000, scoped, tag = 'input window, operand 0']
    #allocation3 [shape = 's32[2]{0}', space=sflag, size = 0x8, scoped, tag = 'scoped memory for barlow_twins_forward.23']
    #allocation4 [shape = 's32[2]{0}', space=sflag, size = 0x8, scoped, tag = 'scoped memory for barlow_twins_forward.23']
    #allocation5 [shape = 'u8[4096]{0}', space=vmem, size = 0x1000, scoped, tag = 'input window, operand 1']
    #allocation6 [shape = 's32[2]{0}', space=sflag, size = 0x8, scoped, tag = 'scoped memory for barlow_twins_forward.23']
    #allocation7 [shape = 'u8[8192]{0}', space=vmem, size = 0x2000, scoped, tag = 'input window, operand 2']
    #allocation8 [shape = 'u8[8192]{0}', space=vmem, size = 0x2000, scoped, tag = 'input window, operand 3']
    #allocation9 [shape = 's32[2]{0}', space=sflag, size = 0x8, scoped, tag = 'scoped memory for barlow_twins_forward.23']
    #allocation10 [shape = 'u8[2048]{0}', space=vmem, size = 0x800, scoped, tag = 'output window, operand 0']
    %9 = vsyncpa [#allocation3], 0
    %s10 = scalar_lea.sflag [#allocation3], 1
    %11 = vsyncpa %s10, 0
    %12 = vsyncpa [#allocation6], 0
    %s13 = scalar_lea.sflag [#allocation6], 1
    %14 = vsyncpa %s13, 0
    %15 = vsyncpa [#allocation9], 0
    %s16 = scalar_lea.sflag [#allocation9], 1
    %17 = vsyncpa %s16, 0
    %18 = vsyncpa [#allocation4], 0
    %s19 = scalar_lea.sflag [#allocation4], 1
    %20 = vsyncpa %s19, 0
    loop: start=0, step=1, limit=4
    $region2: #{barlow_twins_forward.23} parent=1 // loop_pre_header
      _
    $region3: #{barlow_twins_forward.23} parent=1 // loop_header
      %s22 = sphi 0, %s26
      %p23 = scmp.ge.s32.totalorder %s22, 4
      %s32 = sphi 0, %s34
      %s35 = sphi 0, %s32
      %s36 = sphi 0, %s35
      %s52 = sphi 0, %s36
      %s60 = sphi 0, %s62
      %s63 = sphi 0, %s60
      %s64 = sphi 0, %s63
      %s80 = sphi 0, %s64
      %s86 = sphi 0, %s88
      %s89 = sphi 0, %s86
      %s90 = sphi 0, %s89
      %s106 = sphi 0, %s90
      %s114 = sphi 0, %s116
      %s117 = sphi 0, %s114
      %s118 = sphi 0, %s117
      %s134 = sphi 0, %s118
      %s140 = sphi 0, %s142
      %s143 = sphi 0, %s140
      %s144 = sphi 0, %s143
      %s160 = sphi 0, %s144
    $region4: #{barlow_twins_forward.23} parent=1 // loop_header_branch
      %25 = sbr.rel (%p23) target = $region8
    $region5: #{barlow_twins_forward.23} parent=1 // loop_body
      %s27 = ssub.s32 %s22, 1
      %s28 = ssub.s32 %s22, 2
      %s29 = sadd.s32 %s22, 1
      %s30 = ssub.s32 %s22, %s29
      %p31 = scmp.eq.s32.totalorder %s30, 0
      %s33 = sadd.s32 %s32, 1
      %s34 = scalar_select %p31, %s32, %s33
      %p37 = pneg %p31
      %p38 = scmp.eq.s32.totalorder %s22, 1
      %p39 = por %p37, %p38
      %p40 = scmp.ne.s32.totalorder %s32, %s35
      %p41 = scmp.eq.s32.totalorder %s22, 0
      %p42 = por %p40, %p41
      %p43 = scmp.ne.s32.totalorder %s32, %s35
      %p44 = scmp.eq.s32.totalorder %s27, 1
      %p45 = por %p43, %p44
      %p46 = scmp.ne.s32.totalorder %s35, %s36
      %p47 = scmp.eq.s32.totalorder %s27, 0
      %p48 = por %p46, %p47
      %p49 = scmp.ne.s32.totalorder %s35, %s36
      %p50 = scmp.eq.s32.totalorder %s28, 1
      %p51 = por %p49, %p50
      %p53 = scmp.ne.s32.totalorder %s36, %s52
      %p54 = scmp.eq.s32.totalorder %s28, 0
      %p55 = por %p53, %p54
      %s56 = sadd.s32 %s22, 2
      %s57 = sadd.s32 %s29, 2
      %s58 = ssub.s32 %s56, %s57
      %p59 = scmp.eq.s32.totalorder %s58, 0
      %s61 = sadd.s32 %s60, 1
      %s62 = scalar_select %p59, %s60, %s61
      %p65 = pneg %p59
      %p66 = scmp.eq.s32.totalorder %s22, 1
      %p67 = por %p65, %p66
      %p68 = scmp.ne.s32.totalorder %s60, %s63
      %p69 = scmp.eq.s32.totalorder %s22, 0
      %p70 = por %p68, %p69
      %p71 = scmp.ne.s32.totalorder %s60, %s63
      %p72 = scmp.eq.s32.totalorder %s27, 1
      %p73 = por %p71, %p72
      %p74 = scmp.ne.s32.totalorder %s63, %s64
      %p75 = scmp.eq.s32.totalorder %s27, 0
      %p76 = por %p74, %p75
      %p77 = scmp.ne.s32.totalorder %s63, %s64
      %p78 = scmp.eq.s32.totalorder %s28, 1
      %p79 = por %p77, %p78
      %p81 = scmp.ne.s32.totalorder %s64, %s80
      %p82 = scmp.eq.s32.totalorder %s28, 0
      %p83 = por %p81, %p82
      %s84 = ssub.s32 %s22, %s29
      %p85 = scmp.eq.s32.totalorder %s84, 0
      %s87 = sadd.s32 %s86, 1
      %s88 = scalar_select %p85, %s86, %s87
      %p91 = pneg %p85
      %p92 = scmp.eq.s32.totalorder %s22, 1
      %p93 = por %p91, %p92
      %p94 = scmp.ne.s32.totalorder %s86, %s89
      %p95 = scmp.eq.s32.totalorder %s22, 0
      %p96 = por %p94, %p95
      %p97 = scmp.ne.s32.totalorder %s86, %s89
      %p98 = scmp.eq.s32.totalorder %s27, 1
      %p99 = por %p97, %p98
      %p100 = scmp.ne.s32.totalorder %s89, %s90
      %p101 = scmp.eq.s32.totalorder %s27, 0
      %p102 = por %p100, %p101
      %p103 = scmp.ne.s32.totalorder %s89, %s90
      %p104 = scmp.eq.s32.totalorder %s28, 1
      %p105 = por %p103, %p104
      %p107 = scmp.ne.s32.totalorder %s90, %s106
      %p108 = scmp.eq.s32.totalorder %s28, 0
      %p109 = por %p107, %p108
      %s110 = sadd.s32 %s22, 2
      %s111 = sadd.s32 %s29, 2
      %s112 = ssub.s32 %s110, %s111
      %p113 = scmp.eq.s32.totalorder %s112, 0
      %s115 = sadd.s32 %s114, 1
      %s116 = scalar_select %p113, %s114, %s115
      %p119 = pneg %p113
      %p120 = scmp.eq.s32.totalorder %s22, 1
      %p121 = por %p119, %p120
      %p122 = scmp.ne.s32.totalorder %s114, %s117
      %p123 = scmp.eq.s32.totalorder %s22, 0
      %p124 = por %p122, %p123
      %p125 = scmp.ne.s32.totalorder %s114, %s117
      %p126 = scmp.eq.s32.totalorder %s27, 1
      %p127 = por %p125, %p126
      %p128 = scmp.ne.s32.totalorder %s117, %s118
      %p129 = scmp.eq.s32.totalorder %s27, 0
      %p130 = por %p128, %p129
      %p131 = scmp.ne.s32.totalorder %s117, %s118
      %p132 = scmp.eq.s32.totalorder %s28, 1
      %p133 = por %p131, %p132
      %p135 = scmp.ne.s32.totalorder %s118, %s134
      %p136 = scmp.eq.s32.totalorder %s28, 0
      %p137 = por %p135, %p136
      %s138 = ssub.s32 %s22, %s29
      %p139 = scmp.eq.s32.totalorder %s138, 0
      %s141 = sadd.s32 %s140, 1
      %s142 = scalar_select %p139, %s140, %s141
      %p145 = pneg %p139
      %p146 = scmp.eq.s32.totalorder %s22, 1
      %p147 = por %p145, %p146
      %p148 = scmp.ne.s32.totalorder %s140, %s143
      %p149 = scmp.eq.s32.totalorder %s22, 0
      %p150 = por %p148, %p149
      %p151 = scmp.ne.s32.totalorder %s140, %s143
      %p152 = scmp.eq.s32.totalorder %s27, 1
      %p153 = por %p151, %p152
      %p154 = scmp.ne.s32.totalorder %s143, %s144
      %p155 = scmp.eq.s32.totalorder %s27, 0
      %p156 = por %p154, %p155
      %p157 = scmp.ne.s32.totalorder %s143, %s144
      %p158 = scmp.eq.s32.totalorder %s28, 1
      %p159 = por %p157, %p158
      %p161 = scmp.ne.s32.totalorder %s144, %s160
      %p162 = scmp.eq.s32.totalorder %s28, 0
      %p163 = por %p161, %p162
      %p164 = scmp.le.s32.totalorder 1, %s22
      %p165 = scmp.lt.s32.totalorder %s22, 3
      %p166 = pnand %p164, %p165
      %p167 = pneg %p166
      // Predicated region
      $region9: #{barlow_twins_forward.23} parent=5 // pred_check
        _
      $region10: #{barlow_twins_forward.23} parent=5 // pred_check_branch
        %169 = sbr.rel (%p166) target = $region12
      $region11: #{barlow_twins_forward.23} parent=5 // pred_region
        %s170 = ssub.s32 %s22, 1
      $region12: #{barlow_twins_forward.23} parent=5 // pred_fallthru
        _
      %p171 = scmp.lt.s32.totalorder %s22, 2
      // Predicated region
      $region13: #{barlow_twins_forward.23} parent=5 // pred_check
        %p172 = pneg %p171
      $region14: #{barlow_twins_forward.23} parent=5 // pred_check_branch
        %174 = sbr.rel (%p172) target = $region16
      $region15: #{barlow_twins_forward.23} parent=5 // pred_region
        // Predicated region
        $region17: #{barlow_twins_forward.23} parent=15 // pred_check
          %p175 = pneg %p42
        $region18: #{barlow_twins_forward.23} parent=15 // pred_check_branch
          %177 = sbr.rel (%p175) target = $region20
        $region19: #{barlow_twins_forward.23} parent=15 // pred_region
          %s178 = sand.u32 %s32, 1
          %s179 = scalar_lea.sflag [#allocation3], %s178
          %s180 = sand.u32 %s32, 1
          %s181 = smul.addr %s180, 4
          %s182 = scalar_lea.vmem [#allocation2], %s181
          %s184 = ssub.s32 64, 64
          %185 = vsyncadd %s179, %s184
          %s186 = smul.addr %s22, 64
          %s187 = scalar_lea.hbm %s0, %s186
          %s189 = sshll.u32 %s182, 4
          %s190 = int_to_ptr.vmem [resolvable:$true] %s189
          %192 = dma.hbm_to_vmem [thread:$0]  %s187, 64, %s190, %s179
        $region20: #{barlow_twins_forward.23} parent=15 // pred_fallthru
          _
        // Predicated region
        $region21: #{barlow_twins_forward.23} parent=15 // pred_check
          %p193 = pneg %p70
        $region22: #{barlow_twins_forward.23} parent=15 // pred_check_branch
          %195 = sbr.rel (%p193) target = $region24
        $region23: #{barlow_twins_forward.23} parent=15 // pred_region
          %s196 = sand.u32 %s22, 1
          %s197 = scalar_lea.sflag [#allocation6], %s196
          %s198 = sand.u32 %s60, 1
          %s199 = smul.addr %s198, 4
          %s200 = scalar_lea.vmem [#allocation5], %s199
          %s201 = sadd.s32 %s22, 2
          %s203 = ssub.s32 64, 64
          %204 = vsyncadd %s197, %s203
          %s205 = smul.addr %s201, 64
          %s206 = scalar_lea.hbm %s1, %s205
          %s208 = sshll.u32 %s200, 4
          %s209 = int_to_ptr.vmem [resolvable:$true] %s208
          %211 = dma.hbm_to_vmem [thread:$0]  %s206, 64, %s209, %s197
        $region24: #{barlow_twins_forward.23} parent=15 // pred_fallthru
          _
        // Predicated region
        $region25: #{barlow_twins_forward.23} parent=15 // pred_check
          %p212 = pneg %p96
        $region26: #{barlow_twins_forward.23} parent=15 // pred_check_branch
          %214 = sbr.rel (%p212) target = $region28
        $region27: #{barlow_twins_forward.23} parent=15 // pred_region
          %s215 = sand.u32 %s22, 1
          %s216 = scalar_lea.sflag [#allocation6], %s215
          %s217 = sand.u32 %s86, 1
          %s218 = smul.addr %s217, 8
          %s219 = scalar_lea.vmem [#allocation7], %s218
          %s221 = ssub.s32 128, 128
          %222 = vsyncadd %s216, %s221
          %s223 = smul.addr %s22, 128
          %s224 = scalar_lea.hbm %s2, %s223
          %s226 = sshll.u32 %s219, 4
          %s227 = int_to_ptr.vmem [resolvable:$true] %s226
          %229 = dma.hbm_to_vmem [thread:$0]  %s224, 128, %s227, %s216
        $region28: #{barlow_twins_forward.23} parent=15 // pred_fallthru
          _
        // Predicated region
        $region29: #{barlow_twins_forward.23} parent=15 // pred_check
          %p230 = pneg %p124
        $region30: #{barlow_twins_forward.23} parent=15 // pred_check_branch
          %232 = sbr.rel (%p230) target = $region32
        $region31: #{barlow_twins_forward.23} parent=15 // pred_region
          %s233 = sand.u32 %s114, 1
          %s234 = scalar_lea.sflag [#allocation9], %s233
          %s235 = sand.u32 %s114, 1
          %s236 = smul.addr %s235, 8
          %s237 = scalar_lea.vmem [#allocation8], %s236
          %s238 = sadd.s32 %s22, 2
          %s240 = ssub.s32 128, 128
          %241 = vsyncadd %s234, %s240
          %s242 = smul.addr %s238, 128
          %s243 = scalar_lea.hbm %s3, %s242
          %s245 = sshll.u32 %s237, 4
          %s246 = int_to_ptr.vmem [resolvable:$true] %s245
          %248 = dma.hbm_to_vmem [thread:$0]  %s243, 128, %s246, %s234
        $region32: #{barlow_twins_forward.23} parent=15 // pred_fallthru
          _
      $region16: #{barlow_twins_forward.23} parent=5 // pred_fallthru
        _
      %p249 = scmp.le.s32.totalorder 1, %s22
      %p250 = scmp.lt.s32.totalorder %s22, 3
      %p251 = pnand %p249, %p250
      %p252 = pneg %p251
      // Predicated region
      $region33: #{barlow_twins_forward.23} parent=5 // pred_check
        _
      $region34: #{barlow_twins_forward.23} parent=5 // pred_check_branch
        %254 = sbr.rel (%p251) target = $region36
      $region35: #{barlow_twins_forward.23} parent=5 // pred_region
        %s255 = ssub.s32 %s22, 1
        %s256 = sand.u32 %s35, 1
        %s257 = scalar_lea.sflag [#allocation3], %s256
        %s258 = sand.u32 %s35, 1
        %s259 = smul.addr %s258, 4
        %s260 = scalar_lea.vmem [#allocation2], %s259
        // Predicated region
        $region37: #{barlow_twins_forward.23} parent=35 // pred_check
          %p261 = pneg %p48
        $region38: #{barlow_twins_forward.23} parent=35 // pred_check_branch
          %263 = sbr.rel (%p261) target = $region40
        $region39: #{barlow_twins_forward.23} parent=35 // pred_region
          %264 = dma.done %s257, 64
        $region40: #{barlow_twins_forward.23} parent=35 // pred_fallthru
          _
        %s265 = sand.u32 %s27, 1
        %s266 = scalar_lea.sflag [#allocation6], %s265
        %s267 = sand.u32 %s63, 1
        %s268 = smul.addr %s267, 4
        %s269 = scalar_lea.vmem [#allocation5], %s268
        // Predicated region
        $region41: #{barlow_twins_forward.23} parent=35 // pred_check
          %p270 = pneg %p76
        $region42: #{barlow_twins_forward.23} parent=35 // pred_check_branch
          %272 = sbr.rel (%p270) target = $region44
        $region43: #{barlow_twins_forward.23} parent=35 // pred_region
          %273 = dma.done %s266, 64
        $region44: #{barlow_twins_forward.23} parent=35 // pred_fallthru
          _
        %s274 = sand.u32 %s27, 1
        %s275 = scalar_lea.sflag [#allocation6], %s274
        %s276 = sand.u32 %s89, 1
        %s277 = smul.addr %s276, 8
        %s278 = scalar_lea.vmem [#allocation7], %s277
        // Predicated region
        $region45: #{barlow_twins_forward.23} parent=35 // pred_check
          %p279 = pneg %p102
        $region46: #{barlow_twins_forward.23} parent=35 // pred_check_branch
          %281 = sbr.rel (%p279) target = $region48
        $region47: #{barlow_twins_forward.23} parent=35 // pred_region
          %282 = dma.done %s275, 128
        $region48: #{barlow_twins_forward.23} parent=35 // pred_fallthru
          _
        %s283 = sand.u32 %s117, 1
        %s284 = scalar_lea.sflag [#allocation9], %s283
        %s285 = sand.u32 %s117, 1
        %s286 = smul.addr %s285, 8
        %s287 = scalar_lea.vmem [#allocation8], %s286
        // Predicated region
        $region49: #{barlow_twins_forward.23} parent=35 // pred_check
          %p288 = pneg %p130
        $region50: #{barlow_twins_forward.23} parent=35 // pred_check_branch
          %290 = sbr.rel (%p288) target = $region52
        $region51: #{barlow_twins_forward.23} parent=35 // pred_region
          %291 = dma.done %s284, 128
        $region52: #{barlow_twins_forward.23} parent=35 // pred_fallthru
          _
        %s292 = sand.u32 %s35, 1
        %s293 = scalar_lea.sflag [#allocation3], %s292
        %s294 = sand.u32 %s35, 1
        %s295 = smul.addr %s294, 4
        %s296 = scalar_lea.vmem [#allocation2], %s295
        %p297 = pneg %p48
        %p298 = pneg %p45
        %s299 = sand.u32 %s27, 1
        %s300 = scalar_lea.sflag [#allocation6], %s299
        %s301 = sand.u32 %s63, 1
        %s302 = smul.addr %s301, 4
        %s303 = scalar_lea.vmem [#allocation5], %s302
        %p304 = pneg %p76
        %p305 = pneg %p73
        %s306 = sand.u32 %s27, 1
        %s307 = scalar_lea.sflag [#allocation6], %s306
        %s308 = sand.u32 %s89, 1
        %s309 = smul.addr %s308, 8
        %s310 = scalar_lea.vmem [#allocation7], %s309
        %p311 = pneg %p102
        %p312 = pneg %p99
        %s313 = sand.u32 %s117, 1
        %s314 = scalar_lea.sflag [#allocation9], %s313
        %s315 = sand.u32 %s117, 1
        %s316 = smul.addr %s315, 8
        %s317 = scalar_lea.vmem [#allocation8], %s316
        %p318 = pneg %p130
        %p319 = pneg %p127
        %p320 = pneg %p156
        %p321 = pneg %p153
        %s322 = sand.u32 %s143, 1
        %s323 = scalar_lea.sflag [#allocation4], %s322
        %s324 = sand.u32 %s143, 1
        %s325 = smul.addr %s324, 2
        %s326 = scalar_lea.vmem [#allocation10], %s325
        %s327 = sadd.s32 %s27, 2
        %s328 = sadd.s32 %s27, 2
        %v329 = vld [vmem:[%s260] sm:$0xf]
        %v330 = vunpack.c.l.bf16 %v329
        %v331 = vld [vmem:[%s278] sm:$0xff]
        %333 = vset.pattern.permute.xlu0 0
        %334 = vperm.xlu0 %333, %v331
        %v335 = vpop.permute.xlu0 %334
        %v337 = vmul.f32 %v330, %v335
        %v338 = vrot.slane %v337, 4
        %v339 = vadd.f32 %v337, %v338
        %v340 = vrot.slane %v339, 2
        %v341 = vadd.f32 %v339, %v340
        %v342 = vrot.slane %v341, 1
        %v343 = vadd.f32 %v341, %v342
        %vm344 = vcmask 7168
        %v345 = vsel %vm344, %v331, 0.0
        %346 = vadd.xlane.f32.xlu0 %v345
        %v347 = vpop.xlane.xlu0 %346
        %v348 = vrot.slane %v347, 4
        %v349 = vadd.f32 %v347, %v348
        %v350 = vrot.slane %v349, 2
        %v351 = vadd.f32 %v349, %v350
        %v352 = vrot.slane %v351, 1
        %v353 = vadd.f32 %v351, %v352
        %s354 = vtos %v353
        %s355 = smax.f32 %s354, 1e-09
        %v356 = vstv %s355
        %v357 = vrcp.pop %v356
        %v358 = vmul.f32 %v343, %v357
        %v359 = vmul.f32 %v358, %v358
        %360 = vadd.xlane.f32.xlu0 %v359
        %v361 = vpop.xlane.xlu0 %360
        %v362 = vrsqrt.pop %v361
        %v363 = vmul.f32 %v361, %v362
        %vm364 = vcmp.eq.f32.partialorder %v361, inf
        %v365 = vsel %vm364, %v361, %v363
        %vm366 = vcmp.eq.f32.partialorder %v361, 0.0
        %v367 = vand.u32 %v361, 2147483648
        %v368 = vsel %vm366, %v367, %v365
        %v369 = vmax.f32 %v368, 1e-12
        %v370 = vrcp.pop %v369
        %v371 = vmul.f32 %v358, %v370
        %v372 = vld [vmem:[%s269] sm:$0xf]
        %v373 = vunpack.c.l.bf16 %v372
        %v374 = vld [vmem:[%s287] sm:$0xff]
        %376 = vset.pattern.permute.xlu0 0
        %377 = vperm.xlu0 %376, %v374
        %v378 = vpop.permute.xlu0 %377
        %v380 = vmul.f32 %v373, %v378
        %v381 = vrot.slane %v380, 4
        %v382 = vadd.f32 %v380, %v381
        %v383 = vrot.slane %v382, 2
        %v384 = vadd.f32 %v382, %v383
        %v385 = vrot.slane %v384, 1
        %v386 = vadd.f32 %v384, %v385
        %v387 = vsel %vm344, %v374, 0.0
        %388 = vadd.xlane.f32.xlu0 %v387
        %v389 = vpop.xlane.xlu0 %388
        %v390 = vrot.slane %v389, 4
        %v391 = vadd.f32 %v389, %v390
        %v392 = vrot.slane %v391, 2
        %v393 = vadd.f32 %v391, %v392
        %v394 = vrot.slane %v393, 1
        %v395 = vadd.f32 %v393, %v394
        %s396 = vtos %v395
        %s397 = smax.f32 %s396, 1e-09
        %v398 = vstv %s397
        %v399 = vrcp.pop %v398
        %v400 = vmul.f32 %v386, %v399
        %v401 = vmul.f32 %v400, %v400
        %402 = vadd.xlane.f32.xlu0 %v401
        %v403 = vpop.xlane.xlu0 %402
        %v404 = vrsqrt.pop %v403
        %v405 = vmul.f32 %v403, %v404
        %vm406 = vcmp.eq.f32.partialorder %v403, inf
        %v407 = vsel %vm406, %v403, %v405
        %vm408 = vcmp.eq.f32.partialorder %v403, 0.0
        %v409 = vand.u32 %v403, 2147483648
        %v410 = vsel %vm408, %v409, %v407
        %v411 = vmax.f32 %v410, 1e-12
        %v412 = vrcp.pop %v411
        %v413 = vmul.f32 %v400, %v412
        %vm414 = vcmask 1040384
        %v415 = vsel %vm414, %v371, %v413
        %416 = vst [vmem:[%s326] sm:$0x3] %v415
        %s417 = sand.u32 %s143, 1
        %s418 = scalar_lea.sflag [#allocation4], %s417
        %s419 = sand.u32 %s143, 1
        %s420 = smul.addr %s419, 2
        %s421 = scalar_lea.vmem [#allocation10], %s420
        // Predicated region
        $region53: #{barlow_twins_forward.23} parent=35 // pred_check
          %p422 = pneg %p153
        $region54: #{barlow_twins_forward.23} parent=35 // pred_check_branch
          %424 = sbr.rel (%p422) target = $region56
        $region55: #{barlow_twins_forward.23} parent=35 // pred_region
          %s426 = ssub.s32 32, 32
          %427 = vsyncadd %s418, %s426
          %s428 = smul.addr %s27, 32
          %s429 = scalar_lea.hbm %s4, %s428
          %s431 = sshll.u32 %s421, 4
          %s432 = int_to_ptr.vmem [resolvable:$true] %s431
          %434 = dma.vmem_to_hbm [thread:$0]  %s432, 32, %s429, %s418
        $region56: #{barlow_twins_forward.23} parent=35 // pred_fallthru
          _
      $region36: #{barlow_twins_forward.23} parent=5 // pred_fallthru
        _
      %p435 = scmp.le.s32.totalorder 2, %s22
      // Predicated region
      $region57: #{barlow_twins_forward.23} parent=5 // pred_check
        %p436 = pneg %p435
      $region58: #{barlow_twins_forward.23} parent=5 // pred_check_branch
        %438 = sbr.rel (%p436) target = $region60
      $region59: #{barlow_twins_forward.23} parent=5 // pred_region
        %s439 = ssub.s32 %s22, 2
        // Predicated region
        $region61: #{barlow_twins_forward.23} parent=59 // pred_check
          %p440 = pneg %p159
        $region62: #{barlow_twins_forward.23} parent=59 // pred_check_branch
          %442 = sbr.rel (%p440) target = $region64
        $region63: #{barlow_twins_forward.23} parent=59 // pred_region
          %s443 = sand.u32 %s144, 1
          %s444 = scalar_lea.sflag [#allocation4], %s443
          %s445 = sand.u32 %s144, 1
          %s446 = smul.addr %s445, 2
          %s447 = scalar_lea.vmem [#allocation10], %s446
          %448 = dma.done %s444, 32
        $region64: #{barlow_twins_forward.23} parent=59 // pred_fallthru
          _
      $region60: #{barlow_twins_forward.23} parent=5 // pred_fallthru
        _
    $region6: #{barlow_twins_forward.23} parent=1 // loop_footer
      %s26 = sadd.s32 1, %s22
    $region7: #{barlow_twins_forward.23} parent=1 // loop_footer_branch
      %21 = sbr.rel target = $region3
    $region8: #{barlow_twins_forward.23} parent=1 // loop_exit
      _
    %449 = vsyncpa [#allocation3], 1
    %s450 = scalar_lea.sflag [#allocation3], 1
    %451 = vsyncpa %s450, 1
    %452 = vsyncpa [#allocation6], 1
    %s453 = scalar_lea.sflag [#allocation6], 1
    %454 = vsyncpa %s453, 1
    %455 = vsyncpa [#allocation9], 1
    %s456 = scalar_lea.sflag [#allocation9], 1
    %457 = vsyncpa %s456, 1
    %458 = vsyncpa [#allocation4], 1
    %s459 = scalar_lea.sflag [#allocation4], 1
    %460 = vsyncpa %s459, 1

// kernel: barlow_twins_forward.17
$region0: #{barlow_twins_forward.17}
  #allocation0 [shape = 'u32[]', space=smem, size = 0x4, offset = 0x4, fixed_abs, tag = 'smem constant byte address 0x4 - core index']
  #allocation1 [shape = 'u32[144,128]{1,0:T(1,128)}', space=vmem, size = 0x12000, scoped, tag = 'internal scratch']
  #allocation2 [shape = 'f32[32,128]{1,0:T(8,128)}', space=vmem, size = 0x4000, scoped, tag = 'scratch operand']
  %s0 = inlined_call_operand.hbm [shape: bf16[32,256], index: 0, kind: input, shape index: {}]
  %s1 = inlined_call_operand.hbm [shape: bf16[256,128], index: 1, kind: input, shape index: {}]
  %s2 = inlined_call_operand.hbm [shape: f32[1,128], index: 2, kind: input, shape index: {}]
  %s3 = inlined_call_operand.hbm [shape: bf16[32,128], index: 3, kind: input, shape index: {}]
  %s4 = inlined_call_operand.hbm [shape: f32[1,128], index: 4, kind: input, shape index: {}]
  %s5 = inlined_call_operand.hbm [shape: f32[1,128], index: 5, kind: input, shape index: {}]
  %s6 = inlined_call_operand.hbm [shape: bf16[32,128], index: 6, kind: output, shape index: {}]
  %s7 = sld [smem:[#allocation0]]
  $region66: #{barlow_twins_forward.17} parent=0
    _
  %s9 = ssub.s32 1, %s7
  %s10 = scalar_select 0, %s9, %s7
  $region1: #{barlow_twins_forward.17} parent=0
    #allocation3 [shape = 'u8[16384]{0}', space=vmem, size = 0x4000, scoped, tag = 'input window, operand 0, single buffered']
    #allocation4 [shape = 's32[1]{0}', space=sflag, size = 0x4, scoped, tag = 'scoped memory for barlow_twins_forward.17']
    #allocation5 [shape = 's32[1]{0}', space=sflag, size = 0x4, scoped, tag = 'scoped memory for barlow_twins_forward.17']
    #allocation6 [shape = 'u8[65536]{0}', space=vmem, size = 0x10000, scoped, tag = 'input window, operand 1, single buffered']
    #allocation7 [shape = 's32[1]{0}', space=sflag, size = 0x4, scoped, tag = 'scoped memory for barlow_twins_forward.17']
    #allocation8 [shape = 'u8[512]{0}', space=vmem, size = 0x400, scoped, tag = 'input window, operand 2, single buffered']
    #allocation9 [shape = 'u8[8192]{0}', space=vmem, size = 0x2000, scoped, tag = 'input window, operand 3, single buffered']
    #allocation10 [shape = 's32[1]{0}', space=sflag, size = 0x4, scoped, tag = 'scoped memory for barlow_twins_forward.17']
    #allocation11 [shape = 'u8[512]{0}', space=vmem, size = 0x400, scoped, tag = 'input window, operand 4, single buffered']
    #allocation12 [shape = 'u8[512]{0}', space=vmem, size = 0x400, scoped, tag = 'input window, operand 5, single buffered']
    #allocation13 [shape = 's32[1]{0}', space=sflag, size = 0x4, scoped, tag = 'scoped memory for barlow_twins_forward.17']
    #allocation14 [shape = 'u8[8192]{0}', space=vmem, size = 0x2000, scoped, tag = 'output window, operand 0, single buffered']
    %11 = vsyncpa [#allocation4], 0
    %12 = vsyncpa [#allocation7], 0
    %13 = vsyncpa [#allocation10], 0
    %14 = vsyncpa [#allocation13], 0
    %15 = vsyncpa [#allocation5], 0
    // Predicated region
    $region2: #{barlow_twins_forward.17} parent=1 // pred_check
      _
    $region3: #{barlow_twins_forward.17} parent=1 // pred_check_branch
      %17 = sbr.rel (0) target = $region5
    $region4: #{barlow_twins_forward.17} parent=1 // pred_region
      %s19 = ssub.s32 512, 512
      %20 = vsyncadd [#allocation4], %s19
      %s21 = sshll.u32 [#allocation3], 4
      %s22 = int_to_ptr.vmem [resolvable:$true] %s21
      %27 = dma.hbm_to_vmem [thread:$0]  %s0, 512, %s22, [#allocation4], 128, 128, 8
    $region5: #{barlow_twins_forward.17} parent=1 // pred_fallthru
      _
    // Predicated region
    $region6: #{barlow_twins_forward.17} parent=1 // pred_check
      _
    $region7: #{barlow_twins_forward.17} parent=1 // pred_check_branch
      %29 = sbr.rel (0) target = $region9
    $region8: #{barlow_twins_forward.17} parent=1 // pred_region
      %s31 = ssub.s32 2048, 2048
      %32 = vsyncadd [#allocation7], %s31
      %s33 = sshll.u32 [#allocation6], 4
      %s34 = int_to_ptr.vmem [resolvable:$true] %s33
      %39 = dma.hbm_to_vmem [thread:$0]  %s1, 2048, %s34, [#allocation7], 64, 64, 4
    $region9: #{barlow_twins_forward.17} parent=1 // pred_fallthru
      _
    // Predicated region
    $region10: #{barlow_twins_forward.17} parent=1 // pred_check
      _
    $region11: #{barlow_twins_forward.17} parent=1 // pred_check_branch
      %41 = sbr.rel (0) target = $region13
    $region12: #{barlow_twins_forward.17} parent=1 // pred_region
      %s43 = ssub.s32 16, 16
      %44 = vsyncadd [#allocation7], %s43
      %s46 = sshll.u32 [#allocation8], 4
      %s47 = int_to_ptr.vmem [resolvable:$true] %s46
      %49 = dma.hbm_to_vmem [thread:$0]  %s2, 16, %s47, [#allocation7]
    $region13: #{barlow_twins_forward.17} parent=1 // pred_fallthru
      _
    // Predicated region
    $region14: #{barlow_twins_forward.17} parent=1 // pred_check
      _
    $region15: #{barlow_twins_forward.17} parent=1 // pred_check_branch
      %51 = sbr.rel (0) target = $region17
    $region16: #{barlow_twins_forward.17} parent=1 // pred_region
      %s53 = ssub.s32 256, 256
      %54 = vsyncadd [#allocation10], %s53
      %s55 = sshll.u32 [#allocation9], 4
      %s56 = int_to_ptr.vmem [resolvable:$true] %s55
      %61 = dma.hbm_to_vmem [thread:$0]  %s3, 256, %s56, [#allocation10], 64, 64, 4
    $region17: #{barlow_twins_forward.17} parent=1 // pred_fallthru
      _
    // Predicated region
    $region18: #{barlow_twins_forward.17} parent=1 // pred_check
      _
    $region19: #{barlow_twins_forward.17} parent=1 // pred_check_branch
      %63 = sbr.rel (0) target = $region21
    $region20: #{barlow_twins_forward.17} parent=1 // pred_region
      %s65 = ssub.s32 16, 16
      %66 = vsyncadd [#allocation10], %s65
      %s68 = sshll.u32 [#allocation11], 4
      %s69 = int_to_ptr.vmem [resolvable:$true] %s68
      %71 = dma.hbm_to_vmem [thread:$0]  %s4, 16, %s69, [#allocation10]
    $region21: #{barlow_twins_forward.17} parent=1 // pred_fallthru
      _
    // Predicated region
    $region22: #{barlow_twins_forward.17} parent=1 // pred_check
      _
    $region23: #{barlow_twins_forward.17} parent=1 // pred_check_branch
      %73 = sbr.rel (0) target = $region25
    $region24: #{barlow_twins_forward.17} parent=1 // pred_region
      %s75 = ssub.s32 16, 16
      %76 = vsyncadd [#allocation13], %s75
      %s78 = sshll.u32 [#allocation12], 4
      %s79 = int_to_ptr.vmem [resolvable:$true] %s78
      %81 = dma.hbm_to_vmem [thread:$0]  %s5, 16, %s79, [#allocation13]
    $region25: #{barlow_twins_forward.17} parent=1 // pred_fallthru
      _
    // Predicated region
    $region26: #{barlow_twins_forward.17} parent=1 // pred_check
      _
    $region27: #{barlow_twins_forward.17} parent=1 // pred_check_branch
      %83 = sbr.rel (0) target = $region29
    $region28: #{barlow_twins_forward.17} parent=1 // pred_region
      %84 = dma.done [#allocation4], 512
    $region29: #{barlow_twins_forward.17} parent=1 // pred_fallthru
      _
    // Predicated region
    $region30: #{barlow_twins_forward.17} parent=1 // pred_check
      _
    $region31: #{barlow_twins_forward.17} parent=1 // pred_check_branch
      %86 = sbr.rel (0) target = $region33
    $region32: #{barlow_twins_forward.17} parent=1 // pred_region
      %87 = dma.done [#allocation7], 2048
    $region33: #{barlow_twins_forward.17} parent=1 // pred_fallthru
      _
    // Predicated region
    $region34: #{barlow_twins_forward.17} parent=1 // pred_check
      _
    $region35: #{barlow_twins_forward.17} parent=1 // pred_check_branch
      %89 = sbr.rel (0) target = $region37
    $region36: #{barlow_twins_forward.17} parent=1 // pred_region
      %90 = dma.done [#allocation7], 16
    $region37: #{barlow_twins_forward.17} parent=1 // pred_fallthru
      _
    // Predicated region
    $region38: #{barlow_twins_forward.17} parent=1 // pred_check
      _
    $region39: #{barlow_twins_forward.17} parent=1 // pred_check_branch
      %92 = sbr.rel (0) target = $region41
    $region40: #{barlow_twins_forward.17} parent=1 // pred_region
      %93 = dma.done [#allocation10], 256
    $region41: #{barlow_twins_forward.17} parent=1 // pred_fallthru
      _
    // Predicated region
    $region42: #{barlow_twins_forward.17} parent=1 // pred_check
      _
    $region43: #{barlow_twins_forward.17} parent=1 // pred_check_branch
      %95 = sbr.rel (0) target = $region45
    $region44: #{barlow_twins_forward.17} parent=1 // pred_region
      %96 = dma.done [#allocation10], 16
    $region45: #{barlow_twins_forward.17} parent=1 // pred_fallthru
      _
    // Predicated region
    $region46: #{barlow_twins_forward.17} parent=1 // pred_check
      _
    $region47: #{barlow_twins_forward.17} parent=1 // pred_check_branch
      %98 = sbr.rel (0) target = $region49
    $region48: #{barlow_twins_forward.17} parent=1 // pred_region
      %99 = dma.done [#allocation13], 16
    $region49: #{barlow_twins_forward.17} parent=1 // pred_fallthru
      _
    %p101 = scmp.eq.s32.totalorder 0, 0
    // Predicated region
    $region50: #{barlow_twins_forward.17} parent=1 // pred_check
      %p102 = pneg %p101
    $region51: #{barlow_twins_forward.17} parent=1 // pred_check_branch
      %104 = sbr.rel (%p102) target = $region53
    $region52: #{barlow_twins_forward.17} parent=1 // pred_region
      %105 = vst [vmem:[#allocation2] sm:$0xff] 0.0
      %106 = vst [vmem:[#allocation2 + $0x8] sm:$0xff] 0.0
      %107 = vst [vmem:[#allocation2 + $0x10] sm:$0xff] 0.0
      %108 = vst [vmem:[#allocation2 + $0x18] sm:$0xff] 0.0
    $region53: #{barlow_twins_forward.17} parent=1 // pred_fallthru
      _
    %v109 = vld [vmem:[#allocation2] sm:$0xff]
    %v110 = vld [vmem:[#allocation2 + $0x8] sm:$0xff]
    %v111 = vld [vmem:[#allocation2 + $0x10] sm:$0xff]
    %v112 = vld [vmem:[#allocation2 + $0x18] sm:$0xff]
    %v113 = vld [vmem:[#allocation3] sm:$0xff]
    %v114 = vld [vmem:[#allocation3 + $0x8] sm:$0xff]
    %v115 = vld [vmem:[#allocation3 + $0x10] sm:$0xff]
    %v116 = vld [vmem:[#allocation3 + $0x18] sm:$0xff]
    %v117 = vld [vmem:[#allocation6] sm:$0xf]
    %v118 = vld [vmem:[#allocation6 + $0x4] sm:$0xf]
    %v119 = vld [vmem:[#allocation6 + $0x8] sm:$0xf]
    %v120 = vld [vmem:[#allocation6 + $0xc] sm:$0xf]
    %v121 = vld [vmem:[#allocation6 + $0x10] sm:$0xf]
    %v122 = vld [vmem:[#allocation6 + $0x14] sm:$0xf]
    %v123 = vld [vmem:[#allocation6 + $0x18] sm:$0xf]
    %v124 = vld [vmem:[#allocation6 + $0x1c] sm:$0xf]
    %v125 = vld [vmem:[#allocation6 + $0x20] sm:$0xf]
    %v126 = vld [vmem:[#allocation6 + $0x24] sm:$0xf]
    %v127 = vld [vmem:[#allocation6 + $0x28] sm:$0xf]
    %v128 = vld [vmem:[#allocation6 + $0x2c] sm:$0xf]
    %v129 = vld [vmem:[#allocation6 + $0x30] sm:$0xf]
    %v130 = vld [vmem:[#allocation6 + $0x34] sm:$0xf]
    %v131 = vld [vmem:[#allocation6 + $0x38] sm:$0xf]
    %v132 = vld [vmem:[#allocation6 + $0x3c] sm:$0xf]
    %v133 = vld [vmem:[#allocation6 + $0x40] sm:$0xf]
    %v134 = vld [vmem:[#allocation6 + $0x44] sm:$0xf]
    %v135 = vld [vmem:[#allocation6 + $0x48] sm:$0xf]
    %v136 = vld [vmem:[#allocation6 + $0x4c] sm:$0xf]
    %v137 = vld [vmem:[#allocation6 + $0x50] sm:$0xf]
    %v138 = vld [vmem:[#allocation6 + $0x54] sm:$0xf]
    %v139 = vld [vmem:[#allocation6 + $0x58] sm:$0xf]
    %v140 = vld [vmem:[#allocation6 + $0x5c] sm:$0xf]
    %v141 = vld [vmem:[#allocation6 + $0x60] sm:$0xf]
    %v142 = vld [vmem:[#allocation6 + $0x64] sm:$0xf]
    %v143 = vld [vmem:[#allocation6 + $0x68] sm:$0xf]
    %v144 = vld [vmem:[#allocation6 + $0x6c] sm:$0xf]
    %v145 = vld [vmem:[#allocation6 + $0x70] sm:$0xf]
    %v146 = vld [vmem:[#allocation6 + $0x74] sm:$0xf]
    %v147 = vld [vmem:[#allocation6 + $0x78] sm:$0xf]
    %v148 = vld [vmem:[#allocation6 + $0x7c] sm:$0xf]
    %v153 = vunpack.c.l.b16 %v113
    %v154 = vunpack.c.h.b16 %v113
    %v155 = vunpack.c.l.b16 %v114
    %v156 = vunpack.c.h.b16 %v114
    %v157 = vunpack.c.l.b16 %v115
    %v158 = vunpack.c.h.b16 %v115
    %v159 = vunpack.c.l.b16 %v116
    %v160 = vunpack.c.h.b16 %v116
    %v161 = vpack.c.b16 %v155, %v153
    %v162 = vpack.c.b16 %v156, %v154
    %v163 = vpack.c.b16 %v159, %v157
    %v164 = vpack.c.b16 %v160, %v158
    %v201 = vunpack.c.l.b16 %v117
    %v202 = vunpack.c.l.b16 %v118
    %v203 = vunpack.c.l.b16 %v119
    %v204 = vunpack.c.l.b16 %v120
    %v205 = vunpack.c.l.b16 %v121
    %v206 = vunpack.c.l.b16 %v122
    %v207 = vunpack.c.l.b16 %v123
    %v208 = vunpack.c.l.b16 %v124
    %v209 = vunpack.c.l.b16 %v125
    %v210 = vunpack.c.l.b16 %v126
    %v211 = vunpack.c.l.b16 %v127
    %v212 = vunpack.c.l.b16 %v128
    %v213 = vunpack.c.l.b16 %v129
    %v214 = vunpack.c.l.b16 %v130
    %v215 = vunpack.c.l.b16 %v131
    %v216 = vunpack.c.l.b16 %v132
    %v217 = vunpack.c.l.b16 %v133
    %v218 = vunpack.c.l.b16 %v134
    %v219 = vunpack.c.l.b16 %v135
    %v220 = vunpack.c.l.b16 %v136
    %v221 = vunpack.c.l.b16 %v137
    %v222 = vunpack.c.l.b16 %v138
    %v223 = vunpack.c.l.b16 %v139
    %v224 = vunpack.c.l.b16 %v140
    %v225 = vunpack.c.l.b16 %v141
    %v226 = vunpack.c.l.b16 %v142
    %v227 = vunpack.c.l.b16 %v143
    %v228 = vunpack.c.l.b16 %v144
    %v229 = vunpack.c.l.b16 %v145
    %v230 = vunpack.c.l.b16 %v146
    %v231 = vunpack.c.l.b16 %v147
    %v232 = vunpack.c.l.b16 %v148
    %v233 = vpack.c.b16 %v202, %v201
    %v234 = vpack.c.b16 %v204, %v203
    %v235 = vpack.c.b16 %v206, %v205
    %v236 = vpack.c.b16 %v208, %v207
    %v237 = vpack.c.b16 %v210, %v209
    %v238 = vpack.c.b16 %v212, %v211
    %v239 = vpack.c.b16 %v214, %v213
    %v240 = vpack.c.b16 %v216, %v215
    %v241 = vpack.c.b16 %v218, %v217
    %v242 = vpack.c.b16 %v220, %v219
    %v243 = vpack.c.b16 %v222, %v221
    %v244 = vpack.c.b16 %v224, %v223
    %v245 = vpack.c.b16 %v226, %v225
    %v246 = vpack.c.b16 %v228, %v227
    %v247 = vpack.c.b16 %v230, %v229
    %v248 = vpack.c.b16 %v232, %v231
    %265 = vmatprep.subr.bf16.mxu0 0
    %266 = vmatpush1.bf16.msra.mxu0 %v233
    %267 = vmatprep.subr.bf16.mxu0 0
    %268 = vmatpush1.bf16.msra.mxu0 %v234
    %269 = vmatprep.subr.bf16.mxu0 0
    %270 = vmatpush1.bf16.msra.mxu0 %v235
    %271 = vmatprep.subr.bf16.mxu0 0
    %272 = vmatpush1.bf16.msra.mxu0 %v236
    %273 = vmatprep.subr.bf16.mxu0 0
    %274 = vmatpush1.bf16.msra.mxu0 %v237
    %275 = vmatprep.subr.bf16.mxu0 0
    %276 = vmatpush1.bf16.msra.mxu0 %v238
    %277 = vmatprep.subr.bf16.mxu0 0
    %278 = vmatpush1.bf16.msra.mxu0 %v239
    %279 = vmatprep.subr.bf16.mxu0 0
    %280 = vmatpush1.bf16.msra.mxu0 %v240
    %281 = vmatprep.subr.bf16.mxu0 0
    %282 = vmatpush1.bf16.msra.mxu0 %v241
    %283 = vmatprep.subr.bf16.mxu0 0
    %284 = vmatpush1.bf16.msra.mxu0 %v242
    %285 = vmatprep.subr.bf16.mxu0 0
    %286 = vmatpush1.bf16.msra.mxu0 %v243
    %287 = vmatprep.subr.bf16.mxu0 0
    %288 = vmatpush1.bf16.msra.mxu0 %v244
    %289 = vmatprep.subr.bf16.mxu0 0
    %290 = vmatpush1.bf16.msra.mxu0 %v245
    %291 = vmatprep.subr.bf16.mxu0 0
    %292 = vmatpush1.bf16.msra.mxu0 %v246
    %293 = vmatprep.subr.bf16.mxu0 0
    %294 = vmatpush1.bf16.msra.mxu0 %v247
    %295 = vmatprep.subr.bf16.mxu0 0
    %296 = vmatpush1.bf16.msra.mxu0 %v248
    %297 = vmatprep.mubr.bf16.mxu0 %v162
    %298 = vmatmul.mubr.bf16.gmra.mrb[0].mxu0 %v161
    %v299 = vpop.f32.mrb[0].mxu0
    %v300 = vadd.f32 0.0, %v299
    %v301 = vpop.f32.mrb[0].mxu0
    %v302 = vpop.f32.mrb[0].mxu0
    %v303 = vadd.f32 0.0, %v302
    %v304 = vpop.f32.mrb[0].mxu0
    %305 = vmatprep.mubr.bf16.mxu0 %v164
    %306 = vmatmul.mubr.bf16.gmra.mrb[0].mxu0 %v163
    %v307 = vpop.f32.mrb[0].mxu0
    %v308 = vadd.f32 0.0, %v307
    %v309 = vpop.f32.mrb[0].mxu0
    %v310 = vpop.f32.mrb[0].mxu0
    %v311 = vadd.f32 0.0, %v310
    %v312 = vpop.f32.mrb[0].mxu0
    %313 = vdwg.mxu0
    %v314 = vadd.f32 %v109, %v300
    %v315 = vadd.f32 %v110, %v303
    %v316 = vadd.f32 %v111, %v308
    %v317 = vadd.f32 %v112, %v311
    %318 = vst [vmem:[#allocation2] sm:$0xff] %v314
    %319 = vst [vmem:[#allocation2 + $0x8] sm:$0xff] %v315
    %320 = vst [vmem:[#allocation2 + $0x10] sm:$0xff] %v316
    %321 = vst [vmem:[#allocation2 + $0x18] sm:$0xff] %v317
    // Predicated region
    $region54: #{barlow_twins_forward.17} parent=1 // pred_check
      %p322 = pneg %p101
    $region55: #{barlow_twins_forward.17} parent=1 // pred_check_branch
      %324 = sbr.rel (%p322) target = $region57
    $region56: #{barlow_twins_forward.17} parent=1 // pred_region
      %v325 = vld [vmem:[#allocation2] sm:$0xff]
      %v326 = vld [vmem:[#allocation2 + $0x8] sm:$0xff]
      %v327 = vld [vmem:[#allocation2 + $0x10] sm:$0xff]
      %v328 = vld [vmem:[#allocation2 + $0x18] sm:$0xff]
      %v329 = vld [vmem:[#allocation8] sm:$0x1]
      %v331 = vlaneseq
      %v332 = vshrl.u32 %v331, 7
      %v333 = vsub.s32 0, %v332
      %v334 = vrot.slane %v329, %v333
      %v336 = vadd.f32 %v325, %v334
      %v337 = vadd.f32 %v326, %v334
      %v338 = vadd.f32 %v327, %v334
      %v339 = vadd.f32 %v328, %v334
      %v340 = vld [vmem:[#allocation9] sm:$0xf]
      %v341 = vld [vmem:[#allocation9 + $0x4] sm:$0xf]
      %v342 = vld [vmem:[#allocation9 + $0x8] sm:$0xf]
      %v343 = vld [vmem:[#allocation9 + $0xc] sm:$0xf]
      %v344 = vunpack.c.l.bf16 %v340
      %v345 = vunpack.c.l.bf16 %v341
      %v346 = vunpack.c.l.bf16 %v342
      %v347 = vunpack.c.l.bf16 %v343
      %v348 = vadd.f32 %v336, %v344
      %v349 = vadd.f32 %v337, %v345
      %v350 = vadd.f32 %v338, %v346
      %v351 = vadd.f32 %v339, %v347
      %352 = vadd.xlane.f32.xlu0 %v348
      %v353 = vpop.xlane.xlu0 %352
      %354 = vadd.xlane.f32.xlu0 %v349
      %v355 = vpop.xlane.xlu0 %354
      %356 = vadd.xlane.f32.xlu0 %v350
      %v357 = vpop.xlane.xlu0 %356
      %358 = vadd.xlane.f32.xlu0 %v351
      %v359 = vpop.xlane.xlu0 %358
      %v360 = vrcp.pop 128.0
      %v361 = vmul.f32 %v353, %v360
      %v362 = vmul.f32 %v355, %v360
      %v363 = vmul.f32 %v357, %v360
      %v364 = vmul.f32 %v359, %v360
      %v365 = vsub.f32 %v348, %v361
      %v366 = vsub.f32 %v349, %v362
      %v367 = vsub.f32 %v350, %v363
      %v368 = vsub.f32 %v351, %v364
      %v369 = vmul.f32 %v365, %v365
      %v370 = vmul.f32 %v366, %v366
      %v371 = vmul.f32 %v367, %v367
      %v372 = vmul.f32 %v368, %v368
      %373 = vadd.xlane.f32.xlu0 %v369
      %v374 = vpop.xlane.xlu0 %373
      %375 = vadd.xlane.f32.xlu0 %v370
      %v376 = vpop.xlane.xlu0 %375
      %377 = vadd.xlane.f32.xlu0 %v371
      %v378 = vpop.xlane.xlu0 %377
      %379 = vadd.xlane.f32.xlu0 %v372
      %v380 = vpop.xlane.xlu0 %379
      %v381 = vmul.f32 %v374, %v360
      %v382 = vmul.f32 %v376, %v360
      %v383 = vmul.f32 %v378, %v360
      %v384 = vmul.f32 %v380, %v360
      %v385 = vadd.f32 %v381, 1e-05
      %v386 = vadd.f32 %v382, 1e-05
      %v387 = vadd.f32 %v383, 1e-05
      %v388 = vadd.f32 %v384, 1e-05
      %v389 = vrsqrt.pop %v385
      %v390 = vrsqrt.pop %v386
      %v391 = vrsqrt.pop %v387
      %v392 = vrsqrt.pop %v388
      %v393 = vmul.f32 %v365, %v389
      %v394 = vmul.f32 %v366, %v390
      %v395 = vmul.f32 %v367, %v391
      %v396 = vmul.f32 %v368, %v392
      %v397 = vld [vmem:[#allocation11] sm:$0x1]
      %v399 = vlaneseq
      %v400 = vshrl.u32 %v399, 7
      %v401 = vsub.s32 0, %v400
      %v402 = vrot.slane %v397, %v401
      %v404 = vmul.f32 %v393, %v402
      %v405 = vmul.f32 %v394, %v402
      %v406 = vmul.f32 %v395, %v402
      %v407 = vmul.f32 %v396, %v402
      %v408 = vld [vmem:[#allocation12] sm:$0x1]
      %v410 = vlaneseq
      %v411 = vshrl.u32 %v410, 7
      %v412 = vsub.s32 0, %v411
      %v413 = vrot.slane %v408, %v412
      %v415 = vadd.f32 %v404, %v413
      %v416 = vadd.f32 %v405, %v413
      %v417 = vadd.f32 %v406, %v413
      %v418 = vadd.f32 %v407, %v413
      %v419 = vpack.c.bf16 %v416, %v415
      %v420 = vpack.c.bf16 %v418, %v417
      %v423 = vunpack.c.l.b16 %v419
      %v424 = vunpack.c.h.b16 %v419
      %v425 = vunpack.c.l.b16 %v420
      %v426 = vunpack.c.h.b16 %v420
      %v427 = vpack.c.b16 %v423, %v423
      %v428 = vpack.c.b16 %v424, %v424
      %v429 = vpack.c.b16 %v425, %v425
      %v430 = vpack.c.b16 %v426, %v426
      %435 = vst [vmem:[#allocation14] sm:$0xf] %v427
      %436 = vst [vmem:[#allocation14 + $0x4] sm:$0xf] %v428
      %437 = vst [vmem:[#allocation14 + $0x8] sm:$0xf] %v429
      %438 = vst [vmem:[#allocation14 + $0xc] sm:$0xf] %v430
    $region57: #{barlow_twins_forward.17} parent=1 // pred_fallthru
      _
    // Predicated region
    $region58: #{barlow_twins_forward.17} parent=1 // pred_check
      _
    $region59: #{barlow_twins_forward.17} parent=1 // pred_check_branch
      %440 = sbr.rel (0) target = $region61
    $region60: #{barlow_twins_forward.17} parent=1 // pred_region
      %s442 = ssub.s32 256, 256
      %443 = vsyncadd [#allocation5], %s442
      %s444 = sshll.u32 [#allocation14], 4
      %s445 = int_to_ptr.vmem [resolvable:$true] %s444
      %450 = dma.vmem_to_hbm [thread:$0]  %s445, 256, %s6, [#allocation5], 64, 64, 4
    $region61: #{barlow_twins_forward.17} parent=1 // pred_fallthru
      _
    // Predicated region
    $region62: #{barlow_twins_forward.17} parent=1 // pred_check
      _
    $region63: #{barlow_twins_forward.17} parent=1 // pred_check_branch
      %452 = sbr.rel (0) target = $region65
    $region64: #{barlow_twins_forward.17} parent=1 // pred_region
      %453 = dma.done [#allocation5], 256
    $region65: #{barlow_twins_forward.17} parent=1 // pred_fallthru
      _
    %454 = vsyncpa [#allocation4], 1
    %455 = vsyncpa [#allocation7], 1
    %456 = vsyncpa [#allocation10], 1
    %457 = vsyncpa [#allocation13], 1
    %458 = vsyncpa [#allocation5], 1

// kernel: barlow_twins_forward.16
$region0: #{barlow_twins_forward.16}
  #allocation0 [shape = 'u32[]', space=smem, size = 0x4, offset = 0x4, fixed_abs, tag = 'smem constant byte address 0x4 - core index']
  #allocation1 [shape = 'u32[144,128]{1,0:T(1,128)}', space=vmem, size = 0x12000, scoped, tag = 'internal scratch']
  #allocation2 [shape = 'f32[32,256]{1,0:T(8,128)}', space=vmem, size = 0x8000, scoped, tag = 'scratch operand']
  %s0 = inlined_call_operand.hbm [shape: bf16[32,128], index: 0, kind: input, shape index: {}]
  %s1 = inlined_call_operand.hbm [shape: bf16[128,256], index: 1, kind: input, shape index: {}]
  %s2 = inlined_call_operand.hbm [shape: f32[1,256], index: 2, kind: input, shape index: {}]
  %s3 = inlined_call_operand.hbm [shape: bf16[32,256], index: 3, kind: output, shape index: {}]
  %s4 = sld [smem:[#allocation0]]
  $region42: #{barlow_twins_forward.16} parent=0
    _
  %s6 = ssub.s32 1, %s4
  %s7 = scalar_select 0, %s6, %s4
  $region1: #{barlow_twins_forward.16} parent=0
    #allocation3 [shape = 'u8[8192]{0}', space=vmem, size = 0x2000, scoped, tag = 'input window, operand 0, single buffered']
    #allocation4 [shape = 's32[1]{0}', space=sflag, size = 0x4, scoped, tag = 'scoped memory for barlow_twins_forward.16']
    #allocation5 [shape = 's32[1]{0}', space=sflag, size = 0x4, scoped, tag = 'scoped memory for barlow_twins_forward.16']
    #allocation6 [shape = 'u8[65536]{0}', space=vmem, size = 0x10000, scoped, tag = 'input window, operand 1, single buffered']
    #allocation7 [shape = 's32[1]{0}', space=sflag, size = 0x4, scoped, tag = 'scoped memory for barlow_twins_forward.16']
    #allocation8 [shape = 'u8[1024]{0}', space=vmem, size = 0x400, scoped, tag = 'input window, operand 2, single buffered']
    #allocation9 [shape = 'u8[16384]{0}', space=vmem, size = 0x4000, scoped, tag = 'output window, operand 0, single buffered']
    %8 = vsyncpa [#allocation4], 0
    %9 = vsyncpa [#allocation7], 0
    %10 = vsyncpa [#allocation5], 0
    // Predicated region
    $region2: #{barlow_twins_forward.16} parent=1 // pred_check
      _
    $region3: #{barlow_twins_forward.16} parent=1 // pred_check_branch
      %12 = sbr.rel (0) target = $region5
    $region4: #{barlow_twins_forward.16} parent=1 // pred_region
      %s14 = ssub.s32 256, 256
      %15 = vsyncadd [#allocation4], %s14
      %s16 = sshll.u32 [#allocation3], 4
      %s17 = int_to_ptr.vmem [resolvable:$true] %s16
      %22 = dma.hbm_to_vmem [thread:$0]  %s0, 256, %s17, [#allocation4], 64, 64, 4
    $region5: #{barlow_twins_forward.16} parent=1 // pred_fallthru
      _
    // Predicated region
    $region6: #{barlow_twins_forward.16} parent=1 // pred_check
      _
    $region7: #{barlow_twins_forward.16} parent=1 // pred_check_branch
      %24 = sbr.rel (0) target = $region9
    $region8: #{barlow_twins_forward.16} parent=1 // pred_region
      %s26 = ssub.s32 2048, 2048
      %27 = vsyncadd [#allocation7], %s26
      %s28 = sshll.u32 [#allocation6], 4
      %s29 = int_to_ptr.vmem [resolvable:$true] %s28
      %34 = dma.hbm_to_vmem [thread:$0]  %s1, 2048, %s29, [#allocation7], 128, 128, 8
    $region9: #{barlow_twins_forward.16} parent=1 // pred_fallthru
      _
    // Predicated region
    $region10: #{barlow_twins_forward.16} parent=1 // pred_check
      _
    $region11: #{barlow_twins_forward.16} parent=1 // pred_check_branch
      %36 = sbr.rel (0) target = $region13
    $region12: #{barlow_twins_forward.16} parent=1 // pred_region
      %s38 = ssub.s32 32, 32
      %39 = vsyncadd [#allocation7], %s38
      %s41 = sshll.u32 [#allocation8], 4
      %s42 = int_to_ptr.vmem [resolvable:$true] %s41
      %44 = dma.hbm_to_vmem [thread:$0]  %s2, 32, %s42, [#allocation7]
    $region13: #{barlow_twins_forward.16} parent=1 // pred_fallthru
      _
    // Predicated region
    $region14: #{barlow_twins_forward.16} parent=1 // pred_check
      _
    $region15: #{barlow_twins_forward.16} parent=1 // pred_check_branch
      %46 = sbr.rel (0) target = $region17
    $region16: #{barlow_twins_forward.16} parent=1 // pred_region
      %47 = dma.done [#allocation4], 256
    $region17: #{barlow_twins_forward.16} parent=1 // pred_fallthru
      _
    // Predicated region
    $region18: #{barlow_twins_forward.16} parent=1 // pred_check
      _
    $region19: #{barlow_twins_forward.16} parent=1 // pred_check_branch
      %49 = sbr.rel (0) target = $region21
    $region20: #{barlow_twins_forward.16} parent=1 // pred_region
      %50 = dma.done [#allocation7], 2048
    $region21: #{barlow_twins_forward.16} parent=1 // pred_fallthru
      _
    // Predicated region
    $region22: #{barlow_twins_forward.16} parent=1 // pred_check
      _
    $region23: #{barlow_twins_forward.16} parent=1 // pred_check_branch
      %52 = sbr.rel (0) target = $region25
    $region24: #{barlow_twins_forward.16} parent=1 // pred_region
      %53 = dma.done [#allocation7], 32
    $region25: #{barlow_twins_forward.16} parent=1 // pred_fallthru
      _
    %p55 = scmp.eq.s32.totalorder 0, 0
    // Predicated region
    $region26: #{barlow_twins_forward.16} parent=1 // pred_check
      %p56 = pneg %p55
    $region27: #{barlow_twins_forward.16} parent=1 // pred_check_branch
      %58 = sbr.rel (%p56) target = $region29
    $region28: #{barlow_twins_forward.16} parent=1 // pred_region
      %59 = vst [vmem:[#allocation2] sm:$0xff] 0.0
      %60 = vst [vmem:[#allocation2 + $0x8] sm:$0xff] 0.0
      %61 = vst [vmem:[#allocation2 + $0x10] sm:$0xff] 0.0
      %62 = vst [vmem:[#allocation2 + $0x18] sm:$0xff] 0.0
      %63 = vst [vmem:[#allocation2 + $0x20] sm:$0xff] 0.0
      %64 = vst [vmem:[#allocation2 + $0x28] sm:$0xff] 0.0
      %65 = vst [vmem:[#allocation2 + $0x30] sm:$0xff] 0.0
      %66 = vst [vmem:[#allocation2 + $0x38] sm:$0xff] 0.0
    $region29: #{barlow_twins_forward.16} parent=1 // pred_fallthru
      _
    %v67 = vld [vmem:[#allocation2] sm:$0xff]
    %v68 = vld [vmem:[#allocation2 + $0x8] sm:$0xff]
    %v69 = vld [vmem:[#allocation2 + $0x10] sm:$0xff]
    %v70 = vld [vmem:[#allocation2 + $0x18] sm:$0xff]
    %v71 = vld [vmem:[#allocation2 + $0x20] sm:$0xff]
    %v72 = vld [vmem:[#allocation2 + $0x28] sm:$0xff]
    %v73 = vld [vmem:[#allocation2 + $0x30] sm:$0xff]
    %v74 = vld [vmem:[#allocation2 + $0x38] sm:$0xff]
    %v75 = vld [vmem:[#allocation3] sm:$0xf]
    %v76 = vld [vmem:[#allocation3 + $0x4] sm:$0xf]
    %v77 = vld [vmem:[#allocation3 + $0x8] sm:$0xf]
    %v78 = vld [vmem:[#allocation3 + $0xc] sm:$0xf]
    %v79 = vld [vmem:[#allocation6] sm:$0xff]
    %v80 = vld [vmem:[#allocation6 + $0x8] sm:$0xff]
    %v81 = vld [vmem:[#allocation6 + $0x10] sm:$0xff]
    %v82 = vld [vmem:[#allocation6 + $0x18] sm:$0xff]
    %v83 = vld [vmem:[#allocation6 + $0x20] sm:$0xff]
    %v84 = vld [vmem:[#allocation6 + $0x28] sm:$0xff]
    %v85 = vld [vmem:[#allocation6 + $0x30] sm:$0xff]
    %v86 = vld [vmem:[#allocation6 + $0x38] sm:$0xff]
    %v87 = vld [vmem:[#allocation6 + $0x40] sm:$0xff]
    %v88 = vld [vmem:[#allocation6 + $0x48] sm:$0xff]
    %v89 = vld [vmem:[#allocation6 + $0x50] sm:$0xff]
    %v90 = vld [vmem:[#allocation6 + $0x58] sm:$0xff]
    %v91 = vld [vmem:[#allocation6 + $0x60] sm:$0xff]
    %v92 = vld [vmem:[#allocation6 + $0x68] sm:$0xff]
    %v93 = vld [vmem:[#allocation6 + $0x70] sm:$0xff]
    %v94 = vld [vmem:[#allocation6 + $0x78] sm:$0xff]
    %v99 = vunpack.c.l.b16 %v75
    %v100 = vunpack.c.l.b16 %v76
    %v101 = vunpack.c.l.b16 %v77
    %v102 = vunpack.c.l.b16 %v78
    %v103 = vpack.c.b16 %v100, %v99
    %v104 = vpack.c.b16 %v102, %v101
    %v123 = vunpack.c.l.b16 %v79
    %v124 = vunpack.c.h.b16 %v79
    %v125 = vunpack.c.l.b16 %v80
    %v126 = vunpack.c.h.b16 %v80
    %v127 = vunpack.c.l.b16 %v81
    %v128 = vunpack.c.h.b16 %v81
    %v129 = vunpack.c.l.b16 %v82
    %v130 = vunpack.c.h.b16 %v82
    %v131 = vunpack.c.l.b16 %v83
    %v132 = vunpack.c.h.b16 %v83
    %v133 = vunpack.c.l.b16 %v84
    %v134 = vunpack.c.h.b16 %v84
    %v135 = vunpack.c.l.b16 %v85
    %v136 = vunpack.c.h.b16 %v85
    %v137 = vunpack.c.l.b16 %v86
    %v138 = vunpack.c.h.b16 %v86
    %v139 = vunpack.c.l.b16 %v87
    %v140 = vunpack.c.h.b16 %v87
    %v141 = vunpack.c.l.b16 %v88
    %v142 = vunpack.c.h.b16 %v88
    %v143 = vunpack.c.l.b16 %v89
    %v144 = vunpack.c.h.b16 %v89
    %v145 = vunpack.c.l.b16 %v90
    %v146 = vunpack.c.h.b16 %v90
    %v147 = vunpack.c.l.b16 %v91
    %v148 = vunpack.c.h.b16 %v91
    %v149 = vunpack.c.l.b16 %v92
    %v150 = vunpack.c.h.b16 %v92
    %v151 = vunpack.c.l.b16 %v93
    %v152 = vunpack.c.h.b16 %v93
    %v153 = vunpack.c.l.b16 %v94
    %v154 = vunpack.c.h.b16 %v94
    %v155 = vpack.c.b16 %v125, %v123
    %v156 = vpack.c.b16 %v126, %v124
    %v157 = vpack.c.b16 %v129, %v127
    %v158 = vpack.c.b16 %v130, %v128
    %v159 = vpack.c.b16 %v133, %v131
    %v160 = vpack.c.b16 %v134, %v132
    %v161 = vpack.c.b16 %v137, %v135
    %v162 = vpack.c.b16 %v138, %v136
    %v163 = vpack.c.b16 %v141, %v139
    %v164 = vpack.c.b16 %v142, %v140
    %v165 = vpack.c.b16 %v145, %v143
    %v166 = vpack.c.b16 %v146, %v144
    %v167 = vpack.c.b16 %v149, %v147
    %v168 = vpack.c.b16 %v150, %v148
    %v169 = vpack.c.b16 %v153, %v151
    %v170 = vpack.c.b16 %v154, %v152
    %187 = vmatprep.subr.bf16.mxu0 %v156
    %188 = vmatpush1.bf16.msra.mxu0 %v155
    %189 = vmatprep.subr.bf16.mxu0 %v158
    %190 = vmatpush1.bf16.msra.mxu0 %v157
    %191 = vmatprep.subr.bf16.mxu0 %v160
    %192 = vmatpush1.bf16.msra.mxu0 %v159
    %193 = vmatprep.subr.bf16.mxu0 %v162
    %194 = vmatpush1.bf16.msra.mxu0 %v161
    %195 = vmatprep.subr.bf16.mxu0 %v164
    %196 = vmatpush1.bf16.msra.mxu0 %v163
    %197 = vmatprep.subr.bf16.mxu0 %v166
    %198 = vmatpush1.bf16.msra.mxu0 %v165
    %199 = vmatprep.subr.bf16.mxu0 %v168
    %200 = vmatpush1.bf16.msra.mxu0 %v167
    %201 = vmatprep.subr.bf16.mxu0 %v170
    %202 = vmatpush1.bf16.msra.mxu0 %v169
    %203 = vmatprep.subr.bf16.mxu0 0
    %204 = vmatpush1.bf16.msra.mxu0 0
    %205 = vmatprep.subr.bf16.mxu0 0
    %206 = vmatpush1.bf16.msra.mxu0 0
    %207 = vmatprep.subr.bf16.mxu0 0
    %208 = vmatpush1.bf16.msra.mxu0 0
    %209 = vmatprep.subr.bf16.mxu0 0
    %210 = vmatpush1.bf16.msra.mxu0 0
    %211 = vmatprep.subr.bf16.mxu0 0
    %212 = vmatpush1.bf16.msra.mxu0 0
    %213 = vmatprep.subr.bf16.mxu0 0
    %214 = vmatpush1.bf16.msra.mxu0 0
    %215 = vmatprep.subr.bf16.mxu0 0
    %216 = vmatpush1.bf16.msra.mxu0 0
    %217 = vmatprep.subr.bf16.mxu0 0
    %218 = vmatpush1.bf16.msra.mxu0 0
    %219 = vmatprep.mubr.bf16.mxu0 0
    %220 = vmatmul.mubr.bf16.gmra.mrb[0].mxu0 %v103
    %v221 = vpop.f32.mrb[0].mxu0
    %v222 = vadd.f32 0.0, %v221
    %v223 = vpop.f32.mrb[0].mxu0
    %v224 = vadd.f32 0.0, %v223
    %v225 = vpop.f32.mrb[0].mxu0
    %v226 = vadd.f32 0.0, %v225
    %v227 = vpop.f32.mrb[0].mxu0
    %v228 = vadd.f32 0.0, %v227
    %229 = vmatprep.mubr.bf16.mxu0 0
    %230 = vmatmul.mubr.bf16.gmra.mrb[0].mxu0 %v104
    %v231 = vpop.f32.mrb[0].mxu0
    %v232 = vadd.f32 0.0, %v231
    %v233 = vpop.f32.mrb[0].mxu0
    %v234 = vadd.f32 0.0, %v233
    %v235 = vpop.f32.mrb[0].mxu0
    %v236 = vadd.f32 0.0, %v235
    %v237 = vpop.f32.mrb[0].mxu0
    %v238 = vadd.f32 0.0, %v237
    %239 = vdwg.mxu0
    %v240 = vadd.f32 %v67, %v222
    %v241 = vadd.f32 %v68, %v224
    %v242 = vadd.f32 %v69, %v226
    %v243 = vadd.f32 %v70, %v228
    %v244 = vadd.f32 %v71, %v232
    %v245 = vadd.f32 %v72, %v234
    %v246 = vadd.f32 %v73, %v236
    %v247 = vadd.f32 %v74, %v238
    %248 = vst [vmem:[#allocation2] sm:$0xff] %v240
    %249 = vst [vmem:[#allocation2 + $0x8] sm:$0xff] %v241
    %250 = vst [vmem:[#allocation2 + $0x10] sm:$0xff] %v242
    %251 = vst [vmem:[#allocation2 + $0x18] sm:$0xff] %v243
    %252 = vst [vmem:[#allocation2 + $0x20] sm:$0xff] %v244
    %253 = vst [vmem:[#allocation2 + $0x28] sm:$0xff] %v245
    %254 = vst [vmem:[#allocation2 + $0x30] sm:$0xff] %v246
    %255 = vst [vmem:[#allocation2 + $0x38] sm:$0xff] %v247
    // Predicated region
    $region30: #{barlow_twins_forward.16} parent=1 // pred_check
      %p256 = pneg %p55
    $region31: #{barlow_twins_forward.16} parent=1 // pred_check_branch
      %258 = sbr.rel (%p256) target = $region33
    $region32: #{barlow_twins_forward.16} parent=1 // pred_region
      %v259 = vld [vmem:[#allocation2] sm:$0xff]
      %v260 = vld [vmem:[#allocation2 + $0x8] sm:$0xff]
      %v261 = vld [vmem:[#allocation2 + $0x10] sm:$0xff]
      %v262 = vld [vmem:[#allocation2 + $0x18] sm:$0xff]
      %v263 = vld [vmem:[#allocation2 + $0x20] sm:$0xff]
      %v264 = vld [vmem:[#allocation2 + $0x28] sm:$0xff]
      %v265 = vld [vmem:[#allocation2 + $0x30] sm:$0xff]
      %v266 = vld [vmem:[#allocation2 + $0x38] sm:$0xff]
      %v267 = vld [vmem:[#allocation8] sm:$0x3]
      %v269 = vlaneseq
      %v270 = vshrl.u32 %v269, 7
      %v271 = vsub.s32 0, %v270
      %v272 = vrot.slane %v267, %v271
      %v273 = vlaneseq
      %v274 = vshrl.u32 %v273, 7
      %v275 = vsub.s32 1, %v274
      %v276 = vrot.slane %v267, %v275
      %v279 = vadd.f32 %v259, %v272
      %v280 = vadd.f32 %v260, %v276
      %v281 = vadd.f32 %v261, %v272
      %v282 = vadd.f32 %v262, %v276
      %v283 = vadd.f32 %v263, %v272
      %v284 = vadd.f32 %v264, %v276
      %v285 = vadd.f32 %v265, %v272
      %v286 = vadd.f32 %v266, %v276
      %v287 = vmul.f32 %v279, %v279
      %v288 = vmul.f32 %v280, %v280
      %v289 = vmul.f32 %v281, %v281
      %v290 = vmul.f32 %v282, %v282
      %v291 = vmul.f32 %v283, %v283
      %v292 = vmul.f32 %v284, %v284
      %v293 = vmul.f32 %v285, %v285
      %v294 = vmul.f32 %v286, %v286
      %v295 = vmul.f32 %v279, %v287
      %v296 = vmul.f32 %v280, %v288
      %v297 = vmul.f32 %v281, %v289
      %v298 = vmul.f32 %v282, %v290
      %v299 = vmul.f32 %v283, %v291
      %v300 = vmul.f32 %v284, %v292
      %v301 = vmul.f32 %v285, %v293
      %v302 = vmul.f32 %v286, %v294
      %v303 = vmul.f32 %v295, 0.044715
      %v304 = vmul.f32 %v296, 0.044715
      %v305 = vmul.f32 %v297, 0.044715
      %v306 = vmul.f32 %v298, 0.044715
      %v307 = vmul.f32 %v299, 0.044715
      %v308 = vmul.f32 %v300, 0.044715
      %v309 = vmul.f32 %v301, 0.044715
      %v310 = vmul.f32 %v302, 0.044715
      %v311 = vadd.f32 %v279, %v303
      %v312 = vadd.f32 %v280, %v304
      %v313 = vadd.f32 %v281, %v305
      %v314 = vadd.f32 %v282, %v306
      %v315 = vadd.f32 %v283, %v307
      %v316 = vadd.f32 %v284, %v308
      %v317 = vadd.f32 %v285, %v309
      %v318 = vadd.f32 %v286, %v310
      %v319 = vmul.f32 %v311, 0.7978846
      %v320 = vmul.f32 %v312, 0.7978846
      %v321 = vmul.f32 %v313, 0.7978846
      %v322 = vmul.f32 %v314, 0.7978846
      %v323 = vmul.f32 %v315, 0.7978846
      %v324 = vmul.f32 %v316, 0.7978846
      %v325 = vmul.f32 %v317, 0.7978846
      %v326 = vmul.f32 %v318, 0.7978846
      %v327 = vtanh.pop %v319
      %v328 = vtanh.pop %v320
      %v329 = vtanh.pop %v321
      %v330 = vtanh.pop %v322
      %v331 = vtanh.pop %v323
      %v332 = vtanh.pop %v324
      %v333 = vtanh.pop %v325
      %v334 = vtanh.pop %v326
      %v335 = vadd.f32 %v327, 1.0
      %v336 = vadd.f32 %v328, 1.0
      %v337 = vadd.f32 %v329, 1.0
      %v338 = vadd.f32 %v330, 1.0
      %v339 = vadd.f32 %v331, 1.0
      %v340 = vadd.f32 %v332, 1.0
      %v341 = vadd.f32 %v333, 1.0
      %v342 = vadd.f32 %v334, 1.0
      %v343 = vmul.f32 %v335, 0.5
      %v344 = vmul.f32 %v336, 0.5
      %v345 = vmul.f32 %v337, 0.5
      %v346 = vmul.f32 %v338, 0.5
      %v347 = vmul.f32 %v339, 0.5
      %v348 = vmul.f32 %v340, 0.5
      %v349 = vmul.f32 %v341, 0.5
      %v350 = vmul.f32 %v342, 0.5
      %v351 = vmul.f32 %v279, %v343
      %v352 = vmul.f32 %v280, %v344
      %v353 = vmul.f32 %v281, %v345
      %v354 = vmul.f32 %v282, %v346
      %v355 = vmul.f32 %v283, %v347
      %v356 = vmul.f32 %v284, %v348
      %v357 = vmul.f32 %v285, %v349
      %v358 = vmul.f32 %v286, %v350
      %v359 = vpack.c.bf16 %v353, %v351
      %v360 = vpack.c.bf16 %v354, %v352
      %v361 = vpack.c.bf16 %v357, %v355
      %v362 = vpack.c.bf16 %v358, %v356
      %v367 = vunpack.c.l.b16 %v359
      %v368 = vunpack.c.l.b16 %v360
      %v369 = vunpack.c.h.b16 %v359
      %v370 = vunpack.c.h.b16 %v360
      %v371 = vunpack.c.l.b16 %v361
      %v372 = vunpack.c.l.b16 %v362
      %v373 = vunpack.c.h.b16 %v361
      %v374 = vunpack.c.h.b16 %v362
      %v375 = vpack.c.b16 %v368, %v367
      %v376 = vpack.c.b16 %v370, %v369
      %v377 = vpack.c.b16 %v372, %v371
      %v378 = vpack.c.b16 %v374, %v373
      %383 = vst [vmem:[#allocation9] sm:$0xff] %v375
      %384 = vst [vmem:[#allocation9 + $0x8] sm:$0xff] %v376
      %385 = vst [vmem:[#allocation9 + $0x10] sm:$0xff] %v377
      %386 = vst [vmem:[#allocation9 + $0x18] sm:$0xff] %v378
    $region33: #{barlow_twins_forward.16} parent=1 // pred_fallthru
      _
    // Predicated region
    $region34: #{barlow_twins_forward.16} parent=1 // pred_check
      _
    $region35: #{barlow_twins_forward.16} parent=1 // pred_check_branch
      %388 = sbr.rel (0) target = $region37
    $region36: #{barlow_twins_forward.16} parent=1 // pred_region
      %s390 = ssub.s32 512, 512
      %391 = vsyncadd [#allocation5], %s390
      %s392 = sshll.u32 [#allocation9], 4
      %s393 = int_to_ptr.vmem [resolvable:$true] %s392
      %398 = dma.vmem_to_hbm [thread:$0]  %s393, 512, %s3, [#allocation5], 128, 128, 8
    $region37: #{barlow_twins_forward.16} parent=1 // pred_fallthru
      _
    // Predicated region
    $region38: #{barlow_twins_forward.16} parent=1 // pred_check
      _
    $region39: #{barlow_twins_forward.16} parent=1 // pred_check_branch
      %400 = sbr.rel (0) target = $region41
    $region40: #{barlow_twins_forward.16} parent=1 // pred_region
      %401 = dma.done [#allocation5], 512
    $region41: #{barlow_twins_forward.16} parent=1 // pred_fallthru
      _
    %402 = vsyncpa [#allocation4], 1
    %403 = vsyncpa [#allocation7], 1
    %404 = vsyncpa [#allocation5], 1

</llo_original>
